<compile_context>
chip_gen: v5e
topology: v5e:2x2
jax: 0.10.0
libtpu: 0.0.40
codegen_flags: <defaults>
</compile_context>

<pallas_src>
import functools

import jax
import jax.numpy as jnp
from jax import lax
from jax.experimental import pallas as pl
from jax.experimental.pallas import tpu as pltpu

LEAKY_OUT = 0.01   # nn.LeakyReLU default (applied after convs / fc layers)
GAT_SLOPE = 0.2    # GATConv attention negative_slope default
NEG_BIG = -1e30    # f32 mask constant (finite; safe after row-max subtraction)


def _leaky(v, slope):
    return jnp.where(v > 0, v, slope * v)


# ----------------------------------------------------------------------------
# Kernel 1: fully fused drug branch.
#   GAT projection -> 10-head attention -> GCN -> global max/mean pool
#   -> fc_g1 (+LeakyReLU) -> fc_g2
# Grid axis of size 2 iterates the two drug branches (d1 / d2, weights stacked);
# marked "parallel" so a 2-TensorCore chip (v7x) can run one branch per core.
# ----------------------------------------------------------------------------
def _drug_branch_kernel(x_ref, adj_ref, ahat_ref, mask_ref, maskt_ref, cntinv_ref,
                        gat_w_ref, asrc_ref, adst_ref, gat_b_ref,
                        gcn_w_ref, gcn_b_ref,
                        fcg1_w_ref, fcg1_b_ref, fcg2_w_ref, fcg2_b_ref,
                        o_ref,
                        h_scr, g_scr, pooled_scr,
                        *, heads, feat, n_graphs):
    hf = heads * feat
    x = x_ref[0]          # (N, F)
    adj = adj_ref[0]      # (N, N)   adj[i, j] = 1 iff edge j -> i (incl. self loop)

    # ---- GAT linear projection: all heads in one MXU matmul, kept resident in VMEM ----
    h_scr[...] = jnp.dot(x, gat_w_ref[0], preferred_element_type=jnp.float32)  # (N, H*F)

    dn = (((1,), (1,)), ((), ()))
    # ---- per-head attention: unrolled static loop, static column slices of VMEM ----
    for h in range(heads):
        lo = h * feat
        hi = lo + feat
        hh = h_scr[:, lo:hi]                    # (N, F)   head-h projected features
        asrc_h = asrc_ref[0, :, lo:hi]          # (1, F)
        adst_h = adst_ref[0, :, lo:hi]          # (1, F)
        src_row = lax.dot_general(asrc_h, hh, dn, preferred_element_type=jnp.float32)  # (1, N)
        dst_col = lax.dot_general(hh, adst_h, dn, preferred_element_type=jnp.float32)  # (N, 1)
        e = dst_col + src_row                   # (N_tgt, N_src)
        e = _leaky(e, GAT_SLOPE)                # LeakyReLU(0.2)
        e = jnp.where(adj > 0, e, NEG_BIG)      # mask non-edges
        e = e - jnp.max(e, axis=-1, keepdims=True)
        p = jnp.exp(e) * adj
        denom = jnp.maximum(jnp.sum(p, axis=-1, keepdims=True), 1e-20)  # guard empty rows
        p = p * pl.reciprocal(denom, approx=True)
        g_scr[:, lo:hi] = jnp.dot(p, hh, preferred_element_type=jnp.float32)

    # concat(heads) + bias + post-conv LeakyReLU(0.01)
    gat_out = _leaky(g_scr[...] + gat_b_ref[0], LEAKY_OUT)          # (N, H*F)

    # ---- GCNConv: D^-1/2 (A+I) D^-1/2 (X W) + b, fused LeakyReLU(0.01) ----
    xw = jnp.dot(gat_out, gcn_w_ref[0], preferred_element_type=jnp.float32)
    y = jnp.dot(ahat_ref[0], xw, preferred_element_type=jnp.float32) + gcn_b_ref[0]
    y = _leaky(y, LEAKY_OUT)                                        # (N, H*F)

    # ---- cat([global_max_pool, global_mean_pool], dim=1) built in VMEM scratch ----
    mean = jnp.dot(mask_ref[0], y, preferred_element_type=jnp.float32) * cntinv_ref[0]  # (B, H*F)
    pooled_scr[:, hf:] = mean
    for g in range(n_graphs):                                       # B unrolled (small)
        col = maskt_ref[0, :, g:g + 1]                              # (N, 1) membership column
        xm = jnp.where(col > 0, y, NEG_BIG)
        pooled_scr[g:g + 1, 0:hf] = jnp.max(xm, axis=0, keepdims=True)

    # ---- fc_g1 (+LeakyReLU) -> (dropout = id) -> fc_g2 ----
    z = jnp.dot(pooled_scr[...], fcg1_w_ref[0], preferred_element_type=jnp.float32) + fcg1_b_ref[0]
    z = _leaky(z, LEAKY_OUT)
    out = jnp.dot(z, fcg2_w_ref[0], preferred_element_type=jnp.float32) + fcg2_b_ref[0]
    o_ref[0] = out.astype(o_ref.dtype)


def fused_drug_branches(x, adj, ahat, mask, mask_t, cnt_inv,
                        gat_w, asrc, adst, gat_b, gcn_w, gcn_b,
                        fcg1_w, fcg1_b, fcg2_w, fcg2_b, *, heads, feat):
    """Both drug branches in one pallas_call (leading axis of every arg = branch)."""
    nb = x.shape[0]
    n_graphs = mask.shape[1]
    n = x.shape[1]
    hf = heads * feat
    out_dim = fcg2_w.shape[2]

    arrays = [x, adj, ahat, mask, mask_t, cnt_inv, gat_w, asrc, adst, gat_b,
              gcn_w, gcn_b, fcg1_w, fcg1_b, fcg2_w, fcg2_b]
    in_specs = [pl.BlockSpec((1,) + a.shape[1:], lambda b: (b, 0, 0)) for a in arrays]

    kernel = functools.partial(_drug_branch_kernel,
                               heads=heads, feat=feat, n_graphs=n_graphs)
    return pl.pallas_call(
        kernel,
        out_shape=jax.ShapeDtypeStruct((nb, n_graphs, out_dim), jnp.float32),
        grid=(nb,),
        in_specs=in_specs,
        out_specs=pl.BlockSpec((1, n_graphs, out_dim), lambda b: (b, 0, 0)),
        scratch_shapes=[
            pltpu.VMEM((n, hf), jnp.float32),              # projected features (all heads)
            pltpu.VMEM((n, hf), jnp.float32),              # attention outputs (all heads)
            pltpu.VMEM((n_graphs, 2 * hf), jnp.float32),   # [max | mean] pooled
        ],
        compiler_params=pltpu.CompilerParams(dimension_semantics=("parallel",)),
    )(*arrays)


# ----------------------------------------------------------------------------
# Kernel 2: fused tail MLP.
#   xt = fc1_xt(target); xc = cat([g_d1, g_d2, xt]); fc1+LReLU; fc2+LReLU; out
# The concats are realized by splitting fc1's weight rows (no concat copies).
# ----------------------------------------------------------------------------
def _tail_kernel(g_ref, t_ref, wxt_ref, bxt_ref, w1_ref, b1_ref,
                 w2_ref, b2_ref, wo_ref, bo_ref, o_ref, *, gdim):
    g0 = g_ref[0]                                   # (B, gdim)  drug-1 branch output
    g1 = g_ref[1]                                   # (B, gdim)  drug-2 branch output
    xt = jnp.dot(t_ref[...], wxt_ref[...], preferred_element_type=jnp.float32) + bxt_ref[...]

    h = (jnp.dot(g0, w1_ref[0:gdim, :], preferred_element_type=jnp.float32)
         + jnp.dot(g1, w1_ref[gdim:2 * gdim, :], preferred_element_type=jnp.float32)
         + jnp.dot(xt, w1_ref[2 * gdim:, :], preferred_element_type=jnp.float32)
         + b1_ref[...])
    h = _leaky(h, LEAKY_OUT)                        # fc1 + LeakyReLU (+ dropout = id)
    h = _leaky(jnp.dot(h, w2_ref[...], preferred_element_type=jnp.float32) + b2_ref[...],
               LEAKY_OUT)                           # fc2 + LeakyReLU (+ dropout = id)
    out = jnp.dot(h, wo_ref[...], preferred_element_type=jnp.float32) + bo_ref[...]
    o_ref[...] = out.astype(o_ref.dtype)


def _zero_map(ndim):
    return lambda i: (0,) * ndim


def tail_mlp(g, target, wxt, bxt, w1, b1, w2, b2, wo, bo):
    bsz = target.shape[0]
    gdim = g.shape[2]
    n_out = wo.shape[1]
    arrays = [g, target, wxt, bxt.reshape(1, -1), w1, b1.reshape(1, -1),
              w2, b2.reshape(1, -1), wo, bo.reshape(1, -1)]
    in_specs = [pl.BlockSpec(a.shape, _zero_map(a.ndim)) for a in arrays]
    return pl.pallas_call(
        functools.partial(_tail_kernel, gdim=gdim),
        out_shape=jax.ShapeDtypeStruct((bsz, n_out), jnp.float32),
        grid=(1,),
        in_specs=in_specs,
        out_specs=pl.BlockSpec((bsz, n_out), lambda i: (0, 0)),
        compiler_params=pltpu.CompilerParams(dimension_semantics=("arbitrary",)),
    )(*arrays)


# ----------------------------------------------------------------------------
# Plain-JAX glue: graph preprocessing and parameter init
# ----------------------------------------------------------------------------
def build_adj(edge_index, num_nodes):
    src, dst = edge_index[0], edge_index[1]
    a = jnp.zeros((num_nodes, num_nodes), jnp.float32)
    a = a.at[dst, src].set(1.0)                       # A[target, source]
    return jnp.maximum(a, jnp.eye(num_nodes, dtype=jnp.float32))   # add self loops


def gcn_norm(adj):
    deg = adj.sum(axis=1)
    dinv = jnp.where(deg > 0, 1.0 / jnp.sqrt(deg), 0.0)
    return adj * dinv[:, None] * dinv[None, :]


def init_params(key, feat, heads, out_dim):
    keys = iter(jax.random.split(key, 32))
    def w(shape, scale=0.1):
        return scale * jax.random.normal(next(keys), shape, jnp.float32)
    hf = heads * feat
    p = {}
    for d in ("d1", "d2"):
        p[f"{d}_gat_w"] = w((feat, hf))
        p[f"{d}_gat_asrc"] = w((hf,))
        p[f"{d}_gat_adst"] = w((hf,))
        p[f"{d}_gat_b"] = w((hf,))
        p[f"{d}_gcn_w"] = w((hf, hf), 0.05)
        p[f"{d}_gcn_b"] = w((hf,))
        p[f"{d}_fc_g1_w"] = w((2 * hf, 1000), 0.05)
        p[f"{d}_fc_g1_b"] = w((1000,))
        p[f"{d}_fc_g2_w"] = w((1000, out_dim), 0.05)
        p[f"{d}_fc_g2_b"] = w((out_dim,))
    p["fc1_xt_w"] = w((1000, 128), 0.05)
    p["fc1_xt_b"] = w((128,))
    p["fc1_w"] = w((256, 128), 0.05)
    p["fc1_b"] = w((128,))
    p["fc2_w"] = w((128, 32))
    p["fc2_b"] = w((32,))
    p["out_w"] = w((32, 1))
    p["out_b"] = w((1,))
    return p


def gat_gcn_forward(p, x1, adj1, ahat1, mask1, cnt1,
                    x2, adj2, ahat2, mask2, cnt2, target, *, heads, feat):
    hf = heads * feat
    nb = 2

    def stack(name, reshape=None):
        a = jnp.stack([p[f"d1_{name}"], p[f"d2_{name}"]], axis=0)
        return a if reshape is None else a.reshape((nb,) + reshape)

    # Stack the two drug branches along a leading "branch" axis (cheap host-side packs;
    # no per-head reshape/transpose of activations between kernels anymore).
    x = jnp.stack([x1, x2])
    adj = jnp.stack([adj1, adj2])
    ahat = jnp.stack([ahat1, ahat2])
    mask = jnp.stack([mask1, mask2])                       # (2, B, N)
    mask_t = jnp.stack([mask1.T, mask2.T])                 # (2, N, B)
    cnt_inv = jnp.stack([jnp.where(cnt1 > 0, 1.0 / cnt1, 0.0),
                         jnp.where(cnt2 > 0, 1.0 / cnt2, 0.0)])     # (2, B, 1)

    g = fused_drug_branches(
        x, adj, ahat, mask, mask_t, cnt_inv,
        stack("gat_w"),
        stack("gat_asrc", (1, hf)),
        stack("gat_adst", (1, hf)),
        stack("gat_b", (1, hf)),
        stack("gcn_w"),
        stack("gcn_b", (1, hf)),
        stack("fc_g1_w"),
        stack("fc_g1_b", (1, p["d1_fc_g1_b"].shape[0])),
        stack("fc_g2_w"),
        stack("fc_g2_b", (1, p["d1_fc_g2_b"].shape[0])),
        heads=heads, feat=feat,
    )                                                       # (2, B, out_dim)

    xt = target.reshape(-1, 1000)
    out = tail_mlp(g, xt, p["fc1_xt_w"], p["fc1_xt_b"], p["fc1_w"], p["fc1_b"],
                   p["fc2_w"], p["fc2_b"], p["out_w"], p["out_b"])
    return out


# ----------------------------------------------------------------------------
# Example
# ----------------------------------------------------------------------------
if __name__ == "__main__":
    FEAT = 16           # num_features_xd == num_features (small synthetic)
    HEADS = 10
    OUT_DIM = 64
    B = 2               # graphs per batch
    NODES_PER_GRAPH = 8
    N = B * NODES_PER_GRAPH

    key = jax.random.PRNGKey(0)
    kp, kx1, kx2, kt = jax.random.split(key, 4)
    params = init_params(kp, FEAT, HEADS, OUT_DIM)

    x1 = jax.random.normal(kx1, (N, FEAT), jnp.float32)
    x2 = jax.random.normal(kx2, (N, FEAT), jnp.float32)
    target = jax.random.normal(kt, (B, 1000), jnp.float32)   # data1.target, viewed to (-1, 1000)

    # bidirectional ring graph inside each batch element
    src, dst = [], []
    for g in range(B):
        base = g * NODES_PER_GRAPH
        for i in range(NODES_PER_GRAPH):
            j = (i + 1) % NODES_PER_GRAPH
            src += [base + i, base + j]
            dst += [base + j, base + i]
    edge_index = jnp.array([src, dst], dtype=jnp.int32)
    batch = jnp.repeat(jnp.arange(B, dtype=jnp.int32), NODES_PER_GRAPH)

    adj = build_adj(edge_index, N)          # with self loops
    ahat = gcn_norm(adj)                    # D^-1/2 (A+I) D^-1/2
    mask = (batch[None, :] == jnp.arange(B)[:, None]).astype(jnp.float32)  # (B, N)
    cnt = mask.sum(axis=1, keepdims=True)                                  # (B, 1)

    fwd = jax.jit(functools.partial(gat_gcn_forward, heads=HEADS, feat=FEAT))
    out = fwd(params,
              x1, adj, ahat, mask, cnt,
              x2, adj, ahat, mask, cnt,
              target)
    out = jax.block_until_ready(out)
    assert out.shape == (B, 1)
    assert bool(jnp.all(jnp.isfinite(out)))
    print("KERNEL_OK")
</pallas_src>

<mosaic_0001>
module attributes {stable_mosaic.version = 11 : i64} {
  func.func @_drug_branch_kernel(%arg0: i32, %arg1: memref<1x16x16xf32, #tpu.memory_space<vmem>>, %arg2: memref<1x16x16xf32, #tpu.memory_space<vmem>>, %arg3: memref<1x16x16xf32, #tpu.memory_space<vmem>>, %arg4: memref<1x2x16xf32, #tpu.memory_space<vmem>>, %arg5: memref<1x16x2xf32, #tpu.memory_space<vmem>>, %arg6: memref<1x2x1xf32, #tpu.memory_space<vmem>>, %arg7: memref<1x16x160xf32, #tpu.memory_space<vmem>>, %arg8: memref<1x1x160xf32, #tpu.memory_space<vmem>>, %arg9: memref<1x1x160xf32, #tpu.memory_space<vmem>>, %arg10: memref<1x1x160xf32, #tpu.memory_space<vmem>>, %arg11: memref<1x160x160xf32, #tpu.memory_space<vmem>>, %arg12: memref<1x1x160xf32, #tpu.memory_space<vmem>>, %arg13: memref<1x320x1000xf32, #tpu.memory_space<vmem>>, %arg14: memref<1x1x1000xf32, #tpu.memory_space<vmem>>, %arg15: memref<1x1000x64xf32, #tpu.memory_space<vmem>>, %arg16: memref<1x1x64xf32, #tpu.memory_space<vmem>>, %arg17: memref<1x2x64xf32, #tpu.memory_space<vmem>>, %arg18: memref<16x160xf32, #tpu.memory_space<vmem>>, %arg19: memref<16x160xf32, #tpu.memory_space<vmem>>, %arg20: memref<2x320xf32, #tpu.memory_space<vmem>>) attributes {dimension_semantics = [#tpu.dimension_semantics<parallel>], iteration_bounds = array<i64: 2>, scalar_prefetch = 0 : i64, scratch_operands = 3 : i64, tpu.core_type = #tpu.core_type<tc>, window_params = [{transform_indices = @transform_0, window_bounds = array<i64: 1, 16, 16>}, {transform_indices = @transform_1, window_bounds = array<i64: 1, 16, 16>}, {transform_indices = @transform_2, window_bounds = array<i64: 1, 16, 16>}, {transform_indices = @transform_3, window_bounds = array<i64: 1, 2, 16>}, {transform_indices = @transform_4, window_bounds = array<i64: 1, 16, 2>}, {transform_indices = @transform_5, window_bounds = array<i64: 1, 2, 1>}, {transform_indices = @transform_6, window_bounds = array<i64: 1, 16, 160>}, {transform_indices = @transform_7, window_bounds = array<i64: 1, 1, 160>}, {transform_indices = @transform_8, window_bounds = array<i64: 1, 1, 160>}, {transform_indices = @transform_9, window_bounds = array<i64: 1, 1, 160>}, {transform_indices = @transform_10, window_bounds = array<i64: 1, 160, 160>}, {transform_indices = @transform_11, window_bounds = array<i64: 1, 1, 160>}, {transform_indices = @transform_12, window_bounds = array<i64: 1, 320, 1000>}, {transform_indices = @transform_13, window_bounds = array<i64: 1, 1, 1000>}, {transform_indices = @transform_14, window_bounds = array<i64: 1, 1000, 64>}, {transform_indices = @transform_15, window_bounds = array<i64: 1, 1, 64>}, {transform_indices = @transform_16, window_bounds = array<i64: 1, 2, 64>}]} {
    %c0 = arith.constant 0 : index
    %c0_0 = arith.constant 0 : index
    %c0_1 = arith.constant 0 : index
    %0 = vector.load %arg1[%c0, %c0_0, %c0_1] : memref<1x16x16xf32, #tpu.memory_space<vmem>>, vector<1x16x16xf32>
    %1 = vector.shape_cast %0 : vector<1x16x16xf32> to vector<16x16xf32>
    %c0_2 = arith.constant 0 : index
    %c0_3 = arith.constant 0 : index
    %c0_4 = arith.constant 0 : index
    %2 = vector.load %arg2[%c0_2, %c0_3, %c0_4] : memref<1x16x16xf32, #tpu.memory_space<vmem>>, vector<1x16x16xf32>
    %3 = vector.shape_cast %2 : vector<1x16x16xf32> to vector<16x16xf32>
    %c0_5 = arith.constant 0 : index
    %c0_6 = arith.constant 0 : index
    %c0_7 = arith.constant 0 : index
    %4 = vector.load %arg7[%c0_5, %c0_6, %c0_7] : memref<1x16x160xf32, #tpu.memory_space<vmem>>, vector<1x16x160xf32>
    %5 = vector.shape_cast %4 : vector<1x16x160xf32> to vector<16x160xf32>
    %cst = arith.constant dense<0.000000e+00> : vector<16x160xf32>
    %6 = tpu.matmul %1, %5, %cst {dimension_numbers = #tpu.dot_dimension_numbers<[1], [0], [0], [1], [0, 0, 1, 1], [], []>} : vector<16x16xf32>, vector<16x160xf32>, vector<16x160xf32> -> vector<16x160xf32>
    %c0_8 = arith.constant 0 : index
    %c0_9 = arith.constant 0 : index
    %7 = vector.load %arg18[%c0_8, %c0_9] : memref<16x160xf32, #tpu.memory_space<vmem>>, vector<16x160xf32>
    tpu.vector_store %arg18[%c0_8, %c0_9], %6 {strides = array<i32>} : memref<16x160xf32, #tpu.memory_space<vmem>>, vector<16x160xf32>,
    %c0_10 = arith.constant 0 : index
    %c0_11 = arith.constant 0 : index
    %8 = vector.load %arg18[%c0_10, %c0_11] : memref<16x160xf32, #tpu.memory_space<vmem>>, vector<16x16xf32>
    %c0_12 = arith.constant 0 : index
    %c0_13 = arith.constant 0 : index
    %c0_14 = arith.constant 0 : index
    %9 = vector.load %arg8[%c0_12, %c0_13, %c0_14] : memref<1x1x160xf32, #tpu.memory_space<vmem>>, vector<1x1x16xf32>
    %10 = vector.shape_cast %9 : vector<1x1x16xf32> to vector<1x16xf32>
    %c0_15 = arith.constant 0 : index
    %c0_16 = arith.constant 0 : index
    %c0_17 = arith.constant 0 : index
    %11 = vector.load %arg9[%c0_15, %c0_16, %c0_17] : memref<1x1x160xf32, #tpu.memory_space<vmem>>, vector<1x1x16xf32>
    %12 = vector.shape_cast %11 : vector<1x1x16xf32> to vector<1x16xf32>
    %cst_18 = arith.constant dense<0.000000e+00> : vector<1x16xf32>
    %13 = tpu.matmul %10, %8, %cst_18 {dimension_numbers = #tpu.dot_dimension_numbers<[1], [1], [0], [0], [0, 0, 1, 0], [], []>} : vector<1x16xf32>, vector<16x16xf32>, vector<1x16xf32> -> vector<1x16xf32>
    %cst_19 = arith.constant dense<0.000000e+00> : vector<16x1xf32>
    %14 = tpu.matmul %8, %12, %cst_19 {dimension_numbers = #tpu.dot_dimension_numbers<[1], [1], [0], [0], [0, 0, 1, 0], [], []>} : vector<16x16xf32>, vector<1x16xf32>, vector<16x1xf32> -> vector<16x1xf32>
    %15 = vector.broadcast %14 : vector<16x1xf32> to vector<16x16xf32>
    %16 = vector.broadcast %13 : vector<1x16xf32> to vector<16x16xf32>
    %17 = arith.addf %15, %16 : vector<16x16xf32>
    %cst_20 = arith.constant 0.000000e+00 : f32
    %18 = vector.broadcast %cst_20 : f32 to vector<16x16xf32>
    %19 = arith.cmpf ogt, %17, %18 : vector<16x16xf32>
    %cst_21 = arith.constant 2.000000e-01 : f32
    %20 = vector.broadcast %cst_21 : f32 to vector<16x16xf32>
    %21 = arith.mulf %20, %17 : vector<16x16xf32>
    %22 = arith.select %19, %17, %21 : vector<16x16xi1>, vector<16x16xf32>
    %cst_22 = arith.constant 0.000000e+00 : f32
    %23 = vector.broadcast %cst_22 : f32 to vector<16x16xf32>
    %24 = arith.cmpf ogt, %3, %23 : vector<16x16xf32>
    %cst_23 = arith.constant -1.000000e+30 : f32
    %25 = vector.broadcast %cst_23 : f32 to vector<16x16xf32>
    %26 = arith.select %24, %22, %25 : vector<16x16xi1>, vector<16x16xf32>
    %cst_24 = arith.constant dense<0xFF800000> : vector<16xf32>
    %27 = vector.multi_reduction <maximumf>, %26, %cst_24 [1] : vector<16x16xf32> to vector<16xf32>
    %28 = vector.shape_cast %27 : vector<16xf32> to vector<16x1xf32>
    %29 = vector.broadcast %28 : vector<16x1xf32> to vector<16x16xf32>
    %30 = arith.subf %26, %29 : vector<16x16xf32>
    %31 = math.exp %30 : vector<16x16xf32>
    %32 = arith.mulf %31, %3 : vector<16x16xf32>
    %cst_25 = arith.constant dense<0.000000e+00> : vector<16xf32>
    %33 = vector.multi_reduction <add>, %32, %cst_25 [1] : vector<16x16xf32> to vector<16xf32>
    %34 = vector.shape_cast %33 : vector<16xf32> to vector<16x1xf32>
    %cst_26 = arith.constant 9.99999968E-21 : f32
    %35 = vector.broadcast %cst_26 : f32 to vector<16x1xf32>
    %36 = arith.maximumf %34, %35 : vector<16x1xf32>
    %37 = tpu.reciprocal %36 {approx = true} : vector<16x1xf32> -> vector<16x1xf32>
    %38 = vector.broadcast %37 : vector<16x1xf32> to vector<16x16xf32>
    %39 = arith.mulf %32, %38 : vector<16x16xf32>
    %cst_27 = arith.constant dense<0.000000e+00> : vector<16x16xf32>
    %40 = tpu.matmul %39, %8, %cst_27 {dimension_numbers = #tpu.dot_dimension_numbers<[1], [0], [0], [1], [0, 0, 1, 1], [], []>} : vector<16x16xf32>, vector<16x16xf32>, vector<16x16xf32> -> vector<16x16xf32>
    %c0_28 = arith.constant 0 : index
    %c0_29 = arith.constant 0 : index
    %41 = vector.load %arg19[%c0_28, %c0_29] : memref<16x160xf32, #tpu.memory_space<vmem>>, vector<16x16xf32>
    tpu.vector_store %arg19[%c0_28, %c0_29], %40 {strides = array<i32>} : memref<16x160xf32, #tpu.memory_space<vmem>>, vector<16x16xf32>,
    %c0_30 = arith.constant 0 : index
    %c16 = arith.constant 16 : index
    %42 = vector.load %arg18[%c0_30, %c16] : memref<16x160xf32, #tpu.memory_space<vmem>>, vector<16x16xf32>
    %c0_31 = arith.constant 0 : index
    %c0_32 = arith.constant 0 : index
    %c16_33 = arith.constant 16 : index
    %43 = vector.load %arg8[%c0_31, %c0_32, %c16_33] : memref<1x1x160xf32, #tpu.memory_space<vmem>>, vector<1x1x16xf32>
    %44 = vector.shape_cast %43 : vector<1x1x16xf32> to vector<1x16xf32>
    %c0_34 = arith.constant 0 : index
    %c0_35 = arith.constant 0 : index
    %c16_36 = arith.constant 16 : index
    %45 = vector.load %arg9[%c0_34, %c0_35, %c16_36] : memref<1x1x160xf32, #tpu.memory_space<vmem>>, vector<1x1x16xf32>
    %46 = vector.shape_cast %45 : vector<1x1x16xf32> to vector<1x16xf32>
    %cst_37 = arith.constant dense<0.000000e+00> : vector<1x16xf32>
    %47 = tpu.matmul %44, %42, %cst_37 {dimension_numbers = #tpu.dot_dimension_numbers<[1], [1], [0], [0], [0, 0, 1, 0], [], []>} : vector<1x16xf32>, vector<16x16xf32>, vector<1x16xf32> -> vector<1x16xf32>
    %cst_38 = arith.constant dense<0.000000e+00> : vector<16x1xf32>
    %48 = tpu.matmul %42, %46, %cst_38 {dimension_numbers = #tpu.dot_dimension_numbers<[1], [1], [0], [0], [0, 0, 1, 0], [], []>} : vector<16x16xf32>, vector<1x16xf32>, vector<16x1xf32> -> vector<16x1xf32>
    %49 = vector.broadcast %48 : vector<16x1xf32> to vector<16x16xf32>
    %50 = vector.broadcast %47 : vector<1x16xf32> to vector<16x16xf32>
    %51 = arith.addf %49, %50 : vector<16x16xf32>
    %cst_39 = arith.constant 0.000000e+00 : f32
    %52 = vector.broadcast %cst_39 : f32 to vector<16x16xf32>
    %53 = arith.cmpf ogt, %51, %52 : vector<16x16xf32>
    %cst_40 = arith.constant 2.000000e-01 : f32
    %54 = vector.broadcast %cst_40 : f32 to vector<16x16xf32>
    %55 = arith.mulf %54, %51 : vector<16x16xf32>
    %56 = arith.select %53, %51, %55 : vector<16x16xi1>, vector<16x16xf32>
    %cst_41 = arith.constant 0.000000e+00 : f32
    %57 = vector.broadcast %cst_41 : f32 to vector<16x16xf32>
    %58 = arith.cmpf ogt, %3, %57 : vector<16x16xf32>
    %cst_42 = arith.constant -1.000000e+30 : f32
    %59 = vector.broadcast %cst_42 : f32 to vector<16x16xf32>
    %60 = arith.select %58, %56, %59 : vector<16x16xi1>, vector<16x16xf32>
    %cst_43 = arith.constant dense<0xFF800000> : vector<16xf32>
    %61 = vector.multi_reduction <maximumf>, %60, %cst_43 [1] : vector<16x16xf32> to vector<16xf32>
    %62 = vector.shape_cast %61 : vector<16xf32> to vector<16x1xf32>
    %63 = vector.broadcast %62 : vector<16x1xf32> to vector<16x16xf32>
    %64 = arith.subf %60, %63 : vector<16x16xf32>
    %65 = math.exp %64 : vector<16x16xf32>
    %66 = arith.mulf %65, %3 : vector<16x16xf32>
    %cst_44 = arith.constant dense<0.000000e+00> : vector<16xf32>
    %67 = vector.multi_reduction <add>, %66, %cst_44 [1] : vector<16x16xf32> to vector<16xf32>
    %68 = vector.shape_cast %67 : vector<16xf32> to vector<16x1xf32>
    %cst_45 = arith.constant 9.99999968E-21 : f32
    %69 = vector.broadcast %cst_45 : f32 to vector<16x1xf32>
    %70 = arith.maximumf %68, %69 : vector<16x1xf32>
    %71 = tpu.reciprocal %70 {approx = true} : vector<16x1xf32> -> vector<16x1xf32>
    %72 = vector.broadcast %71 : vector<16x1xf32> to vector<16x16xf32>
    %73 = arith.mulf %66, %72 : vector<16x16xf32>
    %cst_46 = arith.constant dense<0.000000e+00> : vector<16x16xf32>
    %74 = tpu.matmul %73, %42, %cst_46 {dimension_numbers = #tpu.dot_dimension_numbers<[1], [0], [0], [1], [0, 0, 1, 1], [], []>} : vector<16x16xf32>, vector<16x16xf32>, vector<16x16xf32> -> vector<16x16xf32>
    %c0_47 = arith.constant 0 : index
    %c16_48 = arith.constant 16 : index
    %75 = vector.load %arg19[%c0_47, %c16_48] : memref<16x160xf32, #tpu.memory_space<vmem>>, vector<16x16xf32>
    tpu.vector_store %arg19[%c0_47, %c16_48], %74 {strides = array<i32>} : memref<16x160xf32, #tpu.memory_space<vmem>>, vector<16x16xf32>,
    %c0_49 = arith.constant 0 : index
    %c32 = arith.constant 32 : index
    %76 = vector.load %arg18[%c0_49, %c32] : memref<16x160xf32, #tpu.memory_space<vmem>>, vector<16x16xf32>
    %c0_50 = arith.constant 0 : index
    %c0_51 = arith.constant 0 : index
    %c32_52 = arith.constant 32 : index
    %77 = vector.load %arg8[%c0_50, %c0_51, %c32_52] : memref<1x1x160xf32, #tpu.memory_space<vmem>>, vector<1x1x16xf32>
    %78 = vector.shape_cast %77 : vector<1x1x16xf32> to vector<1x16xf32>
    %c0_53 = arith.constant 0 : index
    %c0_54 = arith.constant 0 : index
    %c32_55 = arith.constant 32 : index
    %79 = vector.load %arg9[%c0_53, %c0_54, %c32_55] : memref<1x1x160xf32, #tpu.memory_space<vmem>>, vector<1x1x16xf32>
    %80 = vector.shape_cast %79 : vector<1x1x16xf32> to vector<1x16xf32>
    %cst_56 = arith.constant dense<0.000000e+00> : vector<1x16xf32>
    %81 = tpu.matmul %78, %76, %cst_56 {dimension_numbers = #tpu.dot_dimension_numbers<[1], [1], [0], [0], [0, 0, 1, 0], [], []>} : vector<1x16xf32>, vector<16x16xf32>, vector<1x16xf32> -> vector<1x16xf32>
    %cst_57 = arith.constant dense<0.000000e+00> : vector<16x1xf32>
    %82 = tpu.matmul %76, %80, %cst_57 {dimension_numbers = #tpu.dot_dimension_numbers<[1], [1], [0], [0], [0, 0, 1, 0], [], []>} : vector<16x16xf32>, vector<1x16xf32>, vector<16x1xf32> -> vector<16x1xf32>
    %83 = vector.broadcast %82 : vector<16x1xf32> to vector<16x16xf32>
    %84 = vector.broadcast %81 : vector<1x16xf32> to vector<16x16xf32>
    %85 = arith.addf %83, %84 : vector<16x16xf32>
    %cst_58 = arith.constant 0.000000e+00 : f32
    %86 = vector.broadcast %cst_58 : f32 to vector<16x16xf32>
    %87 = arith.cmpf ogt, %85, %86 : vector<16x16xf32>
    %cst_59 = arith.constant 2.000000e-01 : f32
    %88 = vector.broadcast %cst_59 : f32 to vector<16x16xf32>
    %89 = arith.mulf %88, %85 : vector<16x16xf32>
    %90 = arith.select %87, %85, %89 : vector<16x16xi1>, vector<16x16xf32>
    %cst_60 = arith.constant 0.000000e+00 : f32
    %91 = vector.broadcast %cst_60 : f32 to vector<16x16xf32>
    %92 = arith.cmpf ogt, %3, %91 : vector<16x16xf32>
    %cst_61 = arith.constant -1.000000e+30 : f32
    %93 = vector.broadcast %cst_61 : f32 to vector<16x16xf32>
    %94 = arith.select %92, %90, %93 : vector<16x16xi1>, vector<16x16xf32>
    %cst_62 = arith.constant dense<0xFF800000> : vector<16xf32>
    %95 = vector.multi_reduction <maximumf>, %94, %cst_62 [1] : vector<16x16xf32> to vector<16xf32>
    %96 = vector.shape_cast %95 : vector<16xf32> to vector<16x1xf32>
    %97 = vector.broadcast %96 : vector<16x1xf32> to vector<16x16xf32>
    %98 = arith.subf %94, %97 : vector<16x16xf32>
    %99 = math.exp %98 : vector<16x16xf32>
    %100 = arith.mulf %99, %3 : vector<16x16xf32>
    %cst_63 = arith.constant dense<0.000000e+00> : vector<16xf32>
    %101 = vector.multi_reduction <add>, %100, %cst_63 [1] : vector<16x16xf32> to vector<16xf32>
    %102 = vector.shape_cast %101 : vector<16xf32> to vector<16x1xf32>
    %cst_64 = arith.constant 9.99999968E-21 : f32
    %103 = vector.broadcast %cst_64 : f32 to vector<16x1xf32>
    %104 = arith.maximumf %102, %103 : vector<16x1xf32>
    %105 = tpu.reciprocal %104 {approx = true} : vector<16x1xf32> -> vector<16x1xf32>
    %106 = vector.broadcast %105 : vector<16x1xf32> to vector<16x16xf32>
    %107 = arith.mulf %100, %106 : vector<16x16xf32>
    %cst_65 = arith.constant dense<0.000000e+00> : vector<16x16xf32>
    %108 = tpu.matmul %107, %76, %cst_65 {dimension_numbers = #tpu.dot_dimension_numbers<[1], [0], [0], [1], [0, 0, 1, 1], [], []>} : vector<16x16xf32>, vector<16x16xf32>, vector<16x16xf32> -> vector<16x16xf32>
    %c0_66 = arith.constant 0 : index
    %c32_67 = arith.constant 32 : index
    %109 = vector.load %arg19[%c0_66, %c32_67] : memref<16x160xf32, #tpu.memory_space<vmem>>, vector<16x16xf32>
    tpu.vector_store %arg19[%c0_66, %c32_67], %108 {strides = array<i32>} : memref<16x160xf32, #tpu.memory_space<vmem>>, vector<16x16xf32>,
    %c0_68 = arith.constant 0 : index
    %c48 = arith.constant 48 : index
    %110 = vector.load %arg18[%c0_68, %c48] : memref<16x160xf32, #tpu.memory_space<vmem>>, vector<16x16xf32>
    %c0_69 = arith.constant 0 : index
    %c0_70 = arith.constant 0 : index
    %c48_71 = arith.constant 48 : index
    %111 = vector.load %arg8[%c0_69, %c0_70, %c48_71] : memref<1x1x160xf32, #tpu.memory_space<vmem>>, vector<1x1x16xf32>
    %112 = vector.shape_cast %111 : vector<1x1x16xf32> to vector<1x16xf32>
    %c0_72 = arith.constant 0 : index
    %c0_73 = arith.constant 0 : index
    %c48_74 = arith.constant 48 : index
    %113 = vector.load %arg9[%c0_72, %c0_73, %c48_74] : memref<1x1x160xf32, #tpu.memory_space<vmem>>, vector<1x1x16xf32>
    %114 = vector.shape_cast %113 : vector<1x1x16xf32> to vector<1x16xf32>
    %cst_75 = arith.constant dense<0.000000e+00> : vector<1x16xf32>
    %115 = tpu.matmul %112, %110, %cst_75 {dimension_numbers = #tpu.dot_dimension_numbers<[1], [1], [0], [0], [0, 0, 1, 0], [], []>} : vector<1x16xf32>, vector<16x16xf32>, vector<1x16xf32> -> vector<1x16xf32>
    %cst_76 = arith.constant dense<0.000000e+00> : vector<16x1xf32>
    %116 = tpu.matmul %110, %114, %cst_76 {dimension_numbers = #tpu.dot_dimension_numbers<[1], [1], [0], [0], [0, 0, 1, 0], [], []>} : vector<16x16xf32>, vector<1x16xf32>, vector<16x1xf32> -> vector<16x1xf32>
    %117 = vector.broadcast %116 : vector<16x1xf32> to vector<16x16xf32>
    %118 = vector.broadcast %115 : vector<1x16xf32> to vector<16x16xf32>
    %119 = arith.addf %117, %118 : vector<16x16xf32>
    %cst_77 = arith.constant 0.000000e+00 : f32
    %120 = vector.broadcast %cst_77 : f32 to vector<16x16xf32>
    %121 = arith.cmpf ogt, %119, %120 : vector<16x16xf32>
    %cst_78 = arith.constant 2.000000e-01 : f32
    %122 = vector.broadcast %cst_78 : f32 to vector<16x16xf32>
    %123 = arith.mulf %122, %119 : vector<16x16xf32>
    %124 = arith.select %121, %119, %123 : vector<16x16xi1>, vector<16x16xf32>
    %cst_79 = arith.constant 0.000000e+00 : f32
    %125 = vector.broadcast %cst_79 : f32 to vector<16x16xf32>
    %126 = arith.cmpf ogt, %3, %125 : vector<16x16xf32>
    %cst_80 = arith.constant -1.000000e+30 : f32
    %127 = vector.broadcast %cst_80 : f32 to vector<16x16xf32>
    %128 = arith.select %126, %124, %127 : vector<16x16xi1>, vector<16x16xf32>
    %cst_81 = arith.constant dense<0xFF800000> : vector<16xf32>
    %129 = vector.multi_reduction <maximumf>, %128, %cst_81 [1] : vector<16x16xf32> to vector<16xf32>
    %130 = vector.shape_cast %129 : vector<16xf32> to vector<16x1xf32>
    %131 = vector.broadcast %130 : vector<16x1xf32> to vector<16x16xf32>
    %132 = arith.subf %128, %131 : vector<16x16xf32>
    %133 = math.exp %132 : vector<16x16xf32>
    %134 = arith.mulf %133, %3 : vector<16x16xf32>
    %cst_82 = arith.constant dense<0.000000e+00> : vector<16xf32>
    %135 = vector.multi_reduction <add>, %134, %cst_82 [1] : vector<16x16xf32> to vector<16xf32>
    %136 = vector.shape_cast %135 : vector<16xf32> to vector<16x1xf32>
    %cst_83 = arith.constant 9.99999968E-21 : f32
    %137 = vector.broadcast %cst_83 : f32 to vector<16x1xf32>
    %138 = arith.maximumf %136, %137 : vector<16x1xf32>
    %139 = tpu.reciprocal %138 {approx = true} : vector<16x1xf32> -> vector<16x1xf32>
    %140 = vector.broadcast %139 : vector<16x1xf32> to vector<16x16xf32>
    %141 = arith.mulf %134, %140 : vector<16x16xf32>
    %cst_84 = arith.constant dense<0.000000e+00> : vector<16x16xf32>
    %142 = tpu.matmul %141, %110, %cst_84 {dimension_numbers = #tpu.dot_dimension_numbers<[1], [0], [0], [1], [0, 0, 1, 1], [], []>} : vector<16x16xf32>, vector<16x16xf32>, vector<16x16xf32> -> vector<16x16xf32>
    %c0_85 = arith.constant 0 : index
    %c48_86 = arith.constant 48 : index
    %143 = vector.load %arg19[%c0_85, %c48_86] : memref<16x160xf32, #tpu.memory_space<vmem>>, vector<16x16xf32>
    tpu.vector_store %arg19[%c0_85, %c48_86], %142 {strides = array<i32>} : memref<16x160xf32, #tpu.memory_space<vmem>>, vector<16x16xf32>,
    %c0_87 = arith.constant 0 : index
    %c64 = arith.constant 64 : index
    %144 = vector.load %arg18[%c0_87, %c64] : memref<16x160xf32, #tpu.memory_space<vmem>>, vector<16x16xf32>
    %c0_88 = arith.constant 0 : index
    %c0_89 = arith.constant 0 : index
    %c64_90 = arith.constant 64 : index
    %145 = vector.load %arg8[%c0_88, %c0_89, %c64_90] : memref<1x1x160xf32, #tpu.memory_space<vmem>>, vector<1x1x16xf32>
    %146 = vector.shape_cast %145 : vector<1x1x16xf32> to vector<1x16xf32>
    %c0_91 = arith.constant 0 : index
    %c0_92 = arith.constant 0 : index
    %c64_93 = arith.constant 64 : index
    %147 = vector.load %arg9[%c0_91, %c0_92, %c64_93] : memref<1x1x160xf32, #tpu.memory_space<vmem>>, vector<1x1x16xf32>
    %148 = vector.shape_cast %147 : vector<1x1x16xf32> to vector<1x16xf32>
    %cst_94 = arith.constant dense<0.000000e+00> : vector<1x16xf32>
    %149 = tpu.matmul %146, %144, %cst_94 {dimension_numbers = #tpu.dot_dimension_numbers<[1], [1], [0], [0], [0, 0, 1, 0], [], []>} : vector<1x16xf32>, vector<16x16xf32>, vector<1x16xf32> -> vector<1x16xf32>
    %cst_95 = arith.constant dense<0.000000e+00> : vector<16x1xf32>
    %150 = tpu.matmul %144, %148, %cst_95 {dimension_numbers = #tpu.dot_dimension_numbers<[1], [1], [0], [0], [0, 0, 1, 0], [], []>} : vector<16x16xf32>, vector<1x16xf32>, vector<16x1xf32> -> vector<16x1xf32>
    %151 = vector.broadcast %150 : vector<16x1xf32> to vector<16x16xf32>
    %152 = vector.broadcast %149 : vector<1x16xf32> to vector<16x16xf32>
    %153 = arith.addf %151, %152 : vector<16x16xf32>
    %cst_96 = arith.constant 0.000000e+00 : f32
    %154 = vector.broadcast %cst_96 : f32 to vector<16x16xf32>
    %155 = arith.cmpf ogt, %153, %154 : vector<16x16xf32>
    %cst_97 = arith.constant 2.000000e-01 : f32
    %156 = vector.broadcast %cst_97 : f32 to vector<16x16xf32>
    %157 = arith.mulf %156, %153 : vector<16x16xf32>
    %158 = arith.select %155, %153, %157 : vector<16x16xi1>, vector<16x16xf32>
    %cst_98 = arith.constant 0.000000e+00 : f32
    %159 = vector.broadcast %cst_98 : f32 to vector<16x16xf32>
    %160 = arith.cmpf ogt, %3, %159 : vector<16x16xf32>
    %cst_99 = arith.constant -1.000000e+30 : f32
    %161 = vector.broadcast %cst_99 : f32 to vector<16x16xf32>
    %162 = arith.select %160, %158, %161 : vector<16x16xi1>, vector<16x16xf32>
    %cst_100 = arith.constant dense<0xFF800000> : vector<16xf32>
    %163 = vector.multi_reduction <maximumf>, %162, %cst_100 [1] : vector<16x16xf32> to vector<16xf32>
    %164 = vector.shape_cast %163 : vector<16xf32> to vector<16x1xf32>
    %165 = vector.broadcast %164 : vector<16x1xf32> to vector<16x16xf32>
    %166 = arith.subf %162, %165 : vector<16x16xf32>
    %167 = math.exp %166 : vector<16x16xf32>
    %168 = arith.mulf %167, %3 : vector<16x16xf32>
    %cst_101 = arith.constant dense<0.000000e+00> : vector<16xf32>
    %169 = vector.multi_reduction <add>, %168, %cst_101 [1] : vector<16x16xf32> to vector<16xf32>
    %170 = vector.shape_cast %169 : vector<16xf32> to vector<16x1xf32>
    %cst_102 = arith.constant 9.99999968E-21 : f32
    %171 = vector.broadcast %cst_102 : f32 to vector<16x1xf32>
    %172 = arith.maximumf %170, %171 : vector<16x1xf32>
    %173 = tpu.reciprocal %172 {approx = true} : vector<16x1xf32> -> vector<16x1xf32>
    %174 = vector.broadcast %173 : vector<16x1xf32> to vector<16x16xf32>
    %175 = arith.mulf %168, %174 : vector<16x16xf32>
    %cst_103 = arith.constant dense<0.000000e+00> : vector<16x16xf32>
    %176 = tpu.matmul %175, %144, %cst_103 {dimension_numbers = #tpu.dot_dimension_numbers<[1], [0], [0], [1], [0, 0, 1, 1], [], []>} : vector<16x16xf32>, vector<16x16xf32>, vector<16x16xf32> -> vector<16x16xf32>
    %c0_104 = arith.constant 0 : index
    %c64_105 = arith.constant 64 : index
    %177 = vector.load %arg19[%c0_104, %c64_105] : memref<16x160xf32, #tpu.memory_space<vmem>>, vector<16x16xf32>
    tpu.vector_store %arg19[%c0_104, %c64_105], %176 {strides = array<i32>} : memref<16x160xf32, #tpu.memory_space<vmem>>, vector<16x16xf32>,
    %c0_106 = arith.constant 0 : index
    %c80 = arith.constant 80 : index
    %178 = vector.load %arg18[%c0_106, %c80] : memref<16x160xf32, #tpu.memory_space<vmem>>, vector<16x16xf32>
    %c0_107 = arith.constant 0 : index
    %c0_108 = arith.constant 0 : index
    %c80_109 = arith.constant 80 : index
    %179 = vector.load %arg8[%c0_107, %c0_108, %c80_109] : memref<1x1x160xf32, #tpu.memory_space<vmem>>, vector<1x1x16xf32>
    %180 = vector.shape_cast %179 : vector<1x1x16xf32> to vector<1x16xf32>
    %c0_110 = arith.constant 0 : index
    %c0_111 = arith.constant 0 : index
    %c80_112 = arith.constant 80 : index
    %181 = vector.load %arg9[%c0_110, %c0_111, %c80_112] : memref<1x1x160xf32, #tpu.memory_space<vmem>>, vector<1x1x16xf32>
    %182 = vector.shape_cast %181 : vector<1x1x16xf32> to vector<1x16xf32>
    %cst_113 = arith.constant dense<0.000000e+00> : vector<1x16xf32>
    %183 = tpu.matmul %180, %178, %cst_113 {dimension_numbers = #tpu.dot_dimension_numbers<[1], [1], [0], [0], [0, 0, 1, 0], [], []>} : vector<1x16xf32>, vector<16x16xf32>, vector<1x16xf32> -> vector<1x16xf32>
    %cst_114 = arith.constant dense<0.000000e+00> : vector<16x1xf32>
    %184 = tpu.matmul %178, %182, %cst_114 {dimension_numbers = #tpu.dot_dimension_numbers<[1], [1], [0], [0], [0, 0, 1, 0], [], []>} : vector<16x16xf32>, vector<1x16xf32>, vector<16x1xf32> -> vector<16x1xf32>
    %185 = vector.broadcast %184 : vector<16x1xf32> to vector<16x16xf32>
    %186 = vector.broadcast %183 : vector<1x16xf32> to vector<16x16xf32>
    %187 = arith.addf %185, %186 : vector<16x16xf32>
    %cst_115 = arith.constant 0.000000e+00 : f32
    %188 = vector.broadcast %cst_115 : f32 to vector<16x16xf32>
    %189 = arith.cmpf ogt, %187, %188 : vector<16x16xf32>
    %cst_116 = arith.constant 2.000000e-01 : f32
    %190 = vector.broadcast %cst_116 : f32 to vector<16x16xf32>
    %191 = arith.mulf %190, %187 : vector<16x16xf32>
    %192 = arith.select %189, %187, %191 : vector<16x16xi1>, vector<16x16xf32>
    %cst_117 = arith.constant 0.000000e+00 : f32
    %193 = vector.broadcast %cst_117 : f32 to vector<16x16xf32>
    %194 = arith.cmpf ogt, %3, %193 : vector<16x16xf32>
    %cst_118 = arith.constant -1.000000e+30 : f32
    %195 = vector.broadcast %cst_118 : f32 to vector<16x16xf32>
    %196 = arith.select %194, %192, %195 : vector<16x16xi1>, vector<16x16xf32>
    %cst_119 = arith.constant dense<0xFF800000> : vector<16xf32>
    %197 = vector.multi_reduction <maximumf>, %196, %cst_119 [1] : vector<16x16xf32> to vector<16xf32>
    %198 = vector.shape_cast %197 : vector<16xf32> to vector<16x1xf32>
    %199 = vector.broadcast %198 : vector<16x1xf32> to vector<16x16xf32>
    %200 = arith.subf %196, %199 : vector<16x16xf32>
    %201 = math.exp %200 : vector<16x16xf32>
    %202 = arith.mulf %201, %3 : vector<16x16xf32>
    %cst_120 = arith.constant dense<0.000000e+00> : vector<16xf32>
    %203 = vector.multi_reduction <add>, %202, %cst_120 [1] : vector<16x16xf32> to vector<16xf32>
    %204 = vector.shape_cast %203 : vector<16xf32> to vector<16x1xf32>
    %cst_121 = arith.constant 9.99999968E-21 : f32
    %205 = vector.broadcast %cst_121 : f32 to vector<16x1xf32>
    %206 = arith.maximumf %204, %205 : vector<16x1xf32>
    %207 = tpu.reciprocal %206 {approx = true} : vector<16x1xf32> -> vector<16x1xf32>
    %208 = vector.broadcast %207 : vector<16x1xf32> to vector<16x16xf32>
    %209 = arith.mulf %202, %208 : vector<16x16xf32>
    %cst_122 = arith.constant dense<0.000000e+00> : vector<16x16xf32>
    %210 = tpu.matmul %209, %178, %cst_122 {dimension_numbers = #tpu.dot_dimension_numbers<[1], [0], [0], [1], [0, 0, 1, 1], [], []>} : vector<16x16xf32>, vector<16x16xf32>, vector<16x16xf32> -> vector<16x16xf32>
    %c0_123 = arith.constant 0 : index
    %c80_124 = arith.constant 80 : index
    %211 = vector.load %arg19[%c0_123, %c80_124] : memref<16x160xf32, #tpu.memory_space<vmem>>, vector<16x16xf32>
    tpu.vector_store %arg19[%c0_123, %c80_124], %210 {strides = array<i32>} : memref<16x160xf32, #tpu.memory_space<vmem>>, vector<16x16xf32>,
    %c0_125 = arith.constant 0 : index
    %c96 = arith.constant 96 : index
    %212 = vector.load %arg18[%c0_125, %c96] : memref<16x160xf32, #tpu.memory_space<vmem>>, vector<16x16xf32>
    %c0_126 = arith.constant 0 : index
    %c0_127 = arith.constant 0 : index
    %c96_128 = arith.constant 96 : index
    %213 = vector.load %arg8[%c0_126, %c0_127, %c96_128] : memref<1x1x160xf32, #tpu.memory_space<vmem>>, vector<1x1x16xf32>
    %214 = vector.shape_cast %213 : vector<1x1x16xf32> to vector<1x16xf32>
    %c0_129 = arith.constant 0 : index
    %c0_130 = arith.constant 0 : index
    %c96_131 = arith.constant 96 : index
    %215 = vector.load %arg9[%c0_129, %c0_130, %c96_131] : memref<1x1x160xf32, #tpu.memory_space<vmem>>, vector<1x1x16xf32>
    %216 = vector.shape_cast %215 : vector<1x1x16xf32> to vector<1x16xf32>
    %cst_132 = arith.constant dense<0.000000e+00> : vector<1x16xf32>
    %217 = tpu.matmul %214, %212, %cst_132 {dimension_numbers = #tpu.dot_dimension_numbers<[1], [1], [0], [0], [0, 0, 1, 0], [], []>} : vector<1x16xf32>, vector<16x16xf32>, vector<1x16xf32> -> vector<1x16xf32>
    %cst_133 = arith.constant dense<0.000000e+00> : vector<16x1xf32>
    %218 = tpu.matmul %212, %216, %cst_133 {dimension_numbers = #tpu.dot_dimension_numbers<[1], [1], [0], [0], [0, 0, 1, 0], [], []>} : vector<16x16xf32>, vector<1x16xf32>, vector<16x1xf32> -> vector<16x1xf32>
    %219 = vector.broadcast %218 : vector<16x1xf32> to vector<16x16xf32>
    %220 = vector.broadcast %217 : vector<1x16xf32> to vector<16x16xf32>
    %221 = arith.addf %219, %220 : vector<16x16xf32>
    %cst_134 = arith.constant 0.000000e+00 : f32
    %222 = vector.broadcast %cst_134 : f32 to vector<16x16xf32>
    %223 = arith.cmpf ogt, %221, %222 : vector<16x16xf32>
    %cst_135 = arith.constant 2.000000e-01 : f32
    %224 = vector.broadcast %cst_135 : f32 to vector<16x16xf32>
    %225 = arith.mulf %224, %221 : vector<16x16xf32>
    %226 = arith.select %223, %221, %225 : vector<16x16xi1>, vector<16x16xf32>
    %cst_136 = arith.constant 0.000000e+00 : f32
    %227 = vector.broadcast %cst_136 : f32 to vector<16x16xf32>
    %228 = arith.cmpf ogt, %3, %227 : vector<16x16xf32>
    %cst_137 = arith.constant -1.000000e+30 : f32
    %229 = vector.broadcast %cst_137 : f32 to vector<16x16xf32>
    %230 = arith.select %228, %226, %229 : vector<16x16xi1>, vector<16x16xf32>
    %cst_138 = arith.constant dense<0xFF800000> : vector<16xf32>
    %231 = vector.multi_reduction <maximumf>, %230, %cst_138 [1] : vector<16x16xf32> to vector<16xf32>
    %232 = vector.shape_cast %231 : vector<16xf32> to vector<16x1xf32>
    %233 = vector.broadcast %232 : vector<16x1xf32> to vector<16x16xf32>
    %234 = arith.subf %230, %233 : vector<16x16xf32>
    %235 = math.exp %234 : vector<16x16xf32>
    %236 = arith.mulf %235, %3 : vector<16x16xf32>
    %cst_139 = arith.constant dense<0.000000e+00> : vector<16xf32>
    %237 = vector.multi_reduction <add>, %236, %cst_139 [1] : vector<16x16xf32> to vector<16xf32>
    %238 = vector.shape_cast %237 : vector<16xf32> to vector<16x1xf32>
    %cst_140 = arith.constant 9.99999968E-21 : f32
    %239 = vector.broadcast %cst_140 : f32 to vector<16x1xf32>
    %240 = arith.maximumf %238, %239 : vector<16x1xf32>
    %241 = tpu.reciprocal %240 {approx = true} : vector<16x1xf32> -> vector<16x1xf32>
    %242 = vector.broadcast %241 : vector<16x1xf32> to vector<16x16xf32>
    %243 = arith.mulf %236, %242 : vector<16x16xf32>
    %cst_141 = arith.constant dense<0.000000e+00> : vector<16x16xf32>
    %244 = tpu.matmul %243, %212, %cst_141 {dimension_numbers = #tpu.dot_dimension_numbers<[1], [0], [0], [1], [0, 0, 1, 1], [], []>} : vector<16x16xf32>, vector<16x16xf32>, vector<16x16xf32> -> vector<16x16xf32>
    %c0_142 = arith.constant 0 : index
    %c96_143 = arith.constant 96 : index
    %245 = vector.load %arg19[%c0_142, %c96_143] : memref<16x160xf32, #tpu.memory_space<vmem>>, vector<16x16xf32>
    tpu.vector_store %arg19[%c0_142, %c96_143], %244 {strides = array<i32>} : memref<16x160xf32, #tpu.memory_space<vmem>>, vector<16x16xf32>,
    %c0_144 = arith.constant 0 : index
    %c112 = arith.constant 112 : index
    %246 = vector.load %arg18[%c0_144, %c112] : memref<16x160xf32, #tpu.memory_space<vmem>>, vector<16x16xf32>
    %c0_145 = arith.constant 0 : index
    %c0_146 = arith.constant 0 : index
    %c112_147 = arith.constant 112 : index
    %247 = vector.load %arg8[%c0_145, %c0_146, %c112_147] : memref<1x1x160xf32, #tpu.memory_space<vmem>>, vector<1x1x16xf32>
    %248 = vector.shape_cast %247 : vector<1x1x16xf32> to vector<1x16xf32>
    %c0_148 = arith.constant 0 : index
    %c0_149 = arith.constant 0 : index
    %c112_150 = arith.constant 112 : index
    %249 = vector.load %arg9[%c0_148, %c0_149, %c112_150] : memref<1x1x160xf32, #tpu.memory_space<vmem>>, vector<1x1x16xf32>
    %250 = vector.shape_cast %249 : vector<1x1x16xf32> to vector<1x16xf32>
    %cst_151 = arith.constant dense<0.000000e+00> : vector<1x16xf32>
    %251 = tpu.matmul %248, %246, %cst_151 {dimension_numbers = #tpu.dot_dimension_numbers<[1], [1], [0], [0], [0, 0, 1, 0], [], []>} : vector<1x16xf32>, vector<16x16xf32>, vector<1x16xf32> -> vector<1x16xf32>
    %cst_152 = arith.constant dense<0.000000e+00> : vector<16x1xf32>
    %252 = tpu.matmul %246, %250, %cst_152 {dimension_numbers = #tpu.dot_dimension_numbers<[1], [1], [0], [0], [0, 0, 1, 0], [], []>} : vector<16x16xf32>, vector<1x16xf32>, vector<16x1xf32> -> vector<16x1xf32>
    %253 = vector.broadcast %252 : vector<16x1xf32> to vector<16x16xf32>
    %254 = vector.broadcast %251 : vector<1x16xf32> to vector<16x16xf32>
    %255 = arith.addf %253, %254 : vector<16x16xf32>
    %cst_153 = arith.constant 0.000000e+00 : f32
    %256 = vector.broadcast %cst_153 : f32 to vector<16x16xf32>
    %257 = arith.cmpf ogt, %255, %256 : vector<16x16xf32>
    %cst_154 = arith.constant 2.000000e-01 : f32
    %258 = vector.broadcast %cst_154 : f32 to vector<16x16xf32>
    %259 = arith.mulf %258, %255 : vector<16x16xf32>
    %260 = arith.select %257, %255, %259 : vector<16x16xi1>, vector<16x16xf32>
    %cst_155 = arith.constant 0.000000e+00 : f32
    %261 = vector.broadcast %cst_155 : f32 to vector<16x16xf32>
    %262 = arith.cmpf ogt, %3, %261 : vector<16x16xf32>
    %cst_156 = arith.constant -1.000000e+30 : f32
    %263 = vector.broadcast %cst_156 : f32 to vector<16x16xf32>
    %264 = arith.select %262, %260, %263 : vector<16x16xi1>, vector<16x16xf32>
    %cst_157 = arith.constant dense<0xFF800000> : vector<16xf32>
    %265 = vector.multi_reduction <maximumf>, %264, %cst_157 [1] : vector<16x16xf32> to vector<16xf32>
    %266 = vector.shape_cast %265 : vector<16xf32> to vector<16x1xf32>
    %267 = vector.broadcast %266 : vector<16x1xf32> to vector<16x16xf32>
    %268 = arith.subf %264, %267 : vector<16x16xf32>
    %269 = math.exp %268 : vector<16x16xf32>
    %270 = arith.mulf %269, %3 : vector<16x16xf32>
    %cst_158 = arith.constant dense<0.000000e+00> : vector<16xf32>
    %271 = vector.multi_reduction <add>, %270, %cst_158 [1] : vector<16x16xf32> to vector<16xf32>
    %272 = vector.shape_cast %271 : vector<16xf32> to vector<16x1xf32>
    %cst_159 = arith.constant 9.99999968E-21 : f32
    %273 = vector.broadcast %cst_159 : f32 to vector<16x1xf32>
    %274 = arith.maximumf %272, %273 : vector<16x1xf32>
    %275 = tpu.reciprocal %274 {approx = true} : vector<16x1xf32> -> vector<16x1xf32>
    %276 = vector.broadcast %275 : vector<16x1xf32> to vector<16x16xf32>
    %277 = arith.mulf %270, %276 : vector<16x16xf32>
    %cst_160 = arith.constant dense<0.000000e+00> : vector<16x16xf32>
    %278 = tpu.matmul %277, %246, %cst_160 {dimension_numbers = #tpu.dot_dimension_numbers<[1], [0], [0], [1], [0, 0, 1, 1], [], []>} : vector<16x16xf32>, vector<16x16xf32>, vector<16x16xf32> -> vector<16x16xf32>
    %c0_161 = arith.constant 0 : index
    %c112_162 = arith.constant 112 : index
    %279 = vector.load %arg19[%c0_161, %c112_162] : memref<16x160xf32, #tpu.memory_space<vmem>>, vector<16x16xf32>
    tpu.vector_store %arg19[%c0_161, %c112_162], %278 {strides = array<i32>} : memref<16x160xf32, #tpu.memory_space<vmem>>, vector<16x16xf32>,
    %c0_163 = arith.constant 0 : index
    %c128 = arith.constant 128 : index
    %280 = vector.load %arg18[%c0_163, %c128] : memref<16x160xf32, #tpu.memory_space<vmem>>, vector<16x16xf32>
    %c0_164 = arith.constant 0 : index
    %c0_165 = arith.constant 0 : index
    %c128_166 = arith.constant 128 : index
    %281 = vector.load %arg8[%c0_164, %c0_165, %c128_166] : memref<1x1x160xf32, #tpu.memory_space<vmem>>, vector<1x1x16xf32>
    %282 = vector.shape_cast %281 : vector<1x1x16xf32> to vector<1x16xf32>
    %c0_167 = arith.constant 0 : index
    %c0_168 = arith.constant 0 : index
    %c128_169 = arith.constant 128 : index
    %283 = vector.load %arg9[%c0_167, %c0_168, %c128_169] : memref<1x1x160xf32, #tpu.memory_space<vmem>>, vector<1x1x16xf32>
    %284 = vector.shape_cast %283 : vector<1x1x16xf32> to vector<1x16xf32>
    %cst_170 = arith.constant dense<0.000000e+00> : vector<1x16xf32>
    %285 = tpu.matmul %282, %280, %cst_170 {dimension_numbers = #tpu.dot_dimension_numbers<[1], [1], [0], [0], [0, 0, 1, 0], [], []>} : vector<1x16xf32>, vector<16x16xf32>, vector<1x16xf32> -> vector<1x16xf32>
    %cst_171 = arith.constant dense<0.000000e+00> : vector<16x1xf32>
    %286 = tpu.matmul %280, %284, %cst_171 {dimension_numbers = #tpu.dot_dimension_numbers<[1], [1], [0], [0], [0, 0, 1, 0], [], []>} : vector<16x16xf32>, vector<1x16xf32>, vector<16x1xf32> -> vector<16x1xf32>
    %287 = vector.broadcast %286 : vector<16x1xf32> to vector<16x16xf32>
    %288 = vector.broadcast %285 : vector<1x16xf32> to vector<16x16xf32>
    %289 = arith.addf %287, %288 : vector<16x16xf32>
    %cst_172 = arith.constant 0.000000e+00 : f32
    %290 = vector.broadcast %cst_172 : f32 to vector<16x16xf32>
    %291 = arith.cmpf ogt, %289, %290 : vector<16x16xf32>
    %cst_173 = arith.constant 2.000000e-01 : f32
    %292 = vector.broadcast %cst_173 : f32 to vector<16x16xf32>
    %293 = arith.mulf %292, %289 : vector<16x16xf32>
    %294 = arith.select %291, %289, %293 : vector<16x16xi1>, vector<16x16xf32>
    %cst_174 = arith.constant 0.000000e+00 : f32
    %295 = vector.broadcast %cst_174 : f32 to vector<16x16xf32>
    %296 = arith.cmpf ogt, %3, %295 : vector<16x16xf32>
    %cst_175 = arith.constant -1.000000e+30 : f32
    %297 = vector.broadcast %cst_175 : f32 to vector<16x16xf32>
    %298 = arith.select %296, %294, %297 : vector<16x16xi1>, vector<16x16xf32>
    %cst_176 = arith.constant dense<0xFF800000> : vector<16xf32>
    %299 = vector.multi_reduction <maximumf>, %298, %cst_176 [1] : vector<16x16xf32> to vector<16xf32>
    %300 = vector.shape_cast %299 : vector<16xf32> to vector<16x1xf32>
    %301 = vector.broadcast %300 : vector<16x1xf32> to vector<16x16xf32>
    %302 = arith.subf %298, %301 : vector<16x16xf32>
    %303 = math.exp %302 : vector<16x16xf32>
    %304 = arith.mulf %303, %3 : vector<16x16xf32>
    %cst_177 = arith.constant dense<0.000000e+00> : vector<16xf32>
    %305 = vector.multi_reduction <add>, %304, %cst_177 [1] : vector<16x16xf32> to vector<16xf32>
    %306 = vector.shape_cast %305 : vector<16xf32> to vector<16x1xf32>
    %cst_178 = arith.constant 9.99999968E-21 : f32
    %307 = vector.broadcast %cst_178 : f32 to vector<16x1xf32>
    %308 = arith.maximumf %306, %307 : vector<16x1xf32>
    %309 = tpu.reciprocal %308 {approx = true} : vector<16x1xf32> -> vector<16x1xf32>
    %310 = vector.broadcast %309 : vector<16x1xf32> to vector<16x16xf32>
    %311 = arith.mulf %304, %310 : vector<16x16xf32>
    %cst_179 = arith.constant dense<0.000000e+00> : vector<16x16xf32>
    %312 = tpu.matmul %311, %280, %cst_179 {dimension_numbers = #tpu.dot_dimension_numbers<[1], [0], [0], [1], [0, 0, 1, 1], [], []>} : vector<16x16xf32>, vector<16x16xf32>, vector<16x16xf32> -> vector<16x16xf32>
    %c0_180 = arith.constant 0 : index
    %c128_181 = arith.constant 128 : index
    %313 = vector.load %arg19[%c0_180, %c128_181] : memref<16x160xf32, #tpu.memory_space<vmem>>, vector<16x16xf32>
    tpu.vector_store %arg19[%c0_180, %c128_181], %312 {strides = array<i32>} : memref<16x160xf32, #tpu.memory_space<vmem>>, vector<16x16xf32>,
    %c0_182 = arith.constant 0 : index
    %c144 = arith.constant 144 : index
    %314 = vector.load %arg18[%c0_182, %c144] : memref<16x160xf32, #tpu.memory_space<vmem>>, vector<16x16xf32>
    %c0_183 = arith.constant 0 : index
    %c0_184 = arith.constant 0 : index
    %c144_185 = arith.constant 144 : index
    %315 = vector.load %arg8[%c0_183, %c0_184, %c144_185] : memref<1x1x160xf32, #tpu.memory_space<vmem>>, vector<1x1x16xf32>
    %316 = vector.shape_cast %315 : vector<1x1x16xf32> to vector<1x16xf32>
    %c0_186 = arith.constant 0 : index
    %c0_187 = arith.constant 0 : index
    %c144_188 = arith.constant 144 : index
    %317 = vector.load %arg9[%c0_186, %c0_187, %c144_188] : memref<1x1x160xf32, #tpu.memory_space<vmem>>, vector<1x1x16xf32>
    %318 = vector.shape_cast %317 : vector<1x1x16xf32> to vector<1x16xf32>
    %cst_189 = arith.constant dense<0.000000e+00> : vector<1x16xf32>
    %319 = tpu.matmul %316, %314, %cst_189 {dimension_numbers = #tpu.dot_dimension_numbers<[1], [1], [0], [0], [0, 0, 1, 0], [], []>} : vector<1x16xf32>, vector<16x16xf32>, vector<1x16xf32> -> vector<1x16xf32>
    %cst_190 = arith.constant dense<0.000000e+00> : vector<16x1xf32>
    %320 = tpu.matmul %314, %318, %cst_190 {dimension_numbers = #tpu.dot_dimension_numbers<[1], [1], [0], [0], [0, 0, 1, 0], [], []>} : vector<16x16xf32>, vector<1x16xf32>, vector<16x1xf32> -> vector<16x1xf32>
    %321 = vector.broadcast %320 : vector<16x1xf32> to vector<16x16xf32>
    %322 = vector.broadcast %319 : vector<1x16xf32> to vector<16x16xf32>
    %323 = arith.addf %321, %322 : vector<16x16xf32>
    %cst_191 = arith.constant 0.000000e+00 : f32
    %324 = vector.broadcast %cst_191 : f32 to vector<16x16xf32>
    %325 = arith.cmpf ogt, %323, %324 : vector<16x16xf32>
    %cst_192 = arith.constant 2.000000e-01 : f32
    %326 = vector.broadcast %cst_192 : f32 to vector<16x16xf32>
    %327 = arith.mulf %326, %323 : vector<16x16xf32>
    %328 = arith.select %325, %323, %327 : vector<16x16xi1>, vector<16x16xf32>
    %cst_193 = arith.constant 0.000000e+00 : f32
    %329 = vector.broadcast %cst_193 : f32 to vector<16x16xf32>
    %330 = arith.cmpf ogt, %3, %329 : vector<16x16xf32>
    %cst_194 = arith.constant -1.000000e+30 : f32
    %331 = vector.broadcast %cst_194 : f32 to vector<16x16xf32>
    %332 = arith.select %330, %328, %331 : vector<16x16xi1>, vector<16x16xf32>
    %cst_195 = arith.constant dense<0xFF800000> : vector<16xf32>
    %333 = vector.multi_reduction <maximumf>, %332, %cst_195 [1] : vector<16x16xf32> to vector<16xf32>
    %334 = vector.shape_cast %333 : vector<16xf32> to vector<16x1xf32>
    %335 = vector.broadcast %334 : vector<16x1xf32> to vector<16x16xf32>
    %336 = arith.subf %332, %335 : vector<16x16xf32>
    %337 = math.exp %336 : vector<16x16xf32>
    %338 = arith.mulf %337, %3 : vector<16x16xf32>
    %cst_196 = arith.constant dense<0.000000e+00> : vector<16xf32>
    %339 = vector.multi_reduction <add>, %338, %cst_196 [1] : vector<16x16xf32> to vector<16xf32>
    %340 = vector.shape_cast %339 : vector<16xf32> to vector<16x1xf32>
    %cst_197 = arith.constant 9.99999968E-21 : f32
    %341 = vector.broadcast %cst_197 : f32 to vector<16x1xf32>
    %342 = arith.maximumf %340, %341 : vector<16x1xf32>
    %343 = tpu.reciprocal %342 {approx = true} : vector<16x1xf32> -> vector<16x1xf32>
    %344 = vector.broadcast %343 : vector<16x1xf32> to vector<16x16xf32>
    %345 = arith.mulf %338, %344 : vector<16x16xf32>
    %cst_198 = arith.constant dense<0.000000e+00> : vector<16x16xf32>
    %346 = tpu.matmul %345, %314, %cst_198 {dimension_numbers = #tpu.dot_dimension_numbers<[1], [0], [0], [1], [0, 0, 1, 1], [], []>} : vector<16x16xf32>, vector<16x16xf32>, vector<16x16xf32> -> vector<16x16xf32>
    %c0_199 = arith.constant 0 : index
    %c144_200 = arith.constant 144 : index
    %347 = vector.load %arg19[%c0_199, %c144_200] : memref<16x160xf32, #tpu.memory_space<vmem>>, vector<16x16xf32>
    tpu.vector_store %arg19[%c0_199, %c144_200], %346 {strides = array<i32>} : memref<16x160xf32, #tpu.memory_space<vmem>>, vector<16x16xf32>,
    %c0_201 = arith.constant 0 : index
    %c0_202 = arith.constant 0 : index
    %348 = vector.load %arg19[%c0_201, %c0_202] : memref<16x160xf32, #tpu.memory_space<vmem>>, vector<16x160xf32>
    %c0_203 = arith.constant 0 : index
    %c0_204 = arith.constant 0 : index
    %c0_205 = arith.constant 0 : index
    %349 = vector.load %arg10[%c0_203, %c0_204, %c0_205] : memref<1x1x160xf32, #tpu.memory_space<vmem>>, vector<1x1x160xf32>
    %350 = vector.shape_cast %349 : vector<1x1x160xf32> to vector<1x160xf32>
    %351 = vector.broadcast %350 : vector<1x160xf32> to vector<16x160xf32>
    %352 = arith.addf %348, %351 : vector<16x160xf32>
    %cst_206 = arith.constant 0.000000e+00 : f32
    %353 = vector.broadcast %cst_206 : f32 to vector<16x160xf32>
    %354 = arith.cmpf ogt, %352, %353 : vector<16x160xf32>
    %cst_207 = arith.constant 0.00999999977 : f32
    %355 = vector.broadcast %cst_207 : f32 to vector<16x160xf32>
    %356 = arith.mulf %355, %352 : vector<16x160xf32>
    %357 = arith.select %354, %352, %356 : vector<16x160xi1>, vector<16x160xf32>
    %c0_208 = arith.constant 0 : index
    %c0_209 = arith.constant 0 : index
    %c0_210 = arith.constant 0 : index
    %358 = vector.load %arg11[%c0_208, %c0_209, %c0_210] : memref<1x160x160xf32, #tpu.memory_space<vmem>>, vector<1x160x160xf32>
    %359 = vector.shape_cast %358 : vector<1x160x160xf32> to vector<160x160xf32>
    %cst_211 = arith.constant dense<0.000000e+00> : vector<16x160xf32>
    %360 = tpu.matmul %357, %359, %cst_211 {dimension_numbers = #tpu.dot_dimension_numbers<[1], [0], [0], [1], [0, 0, 1, 1], [], []>} : vector<16x160xf32>, vector<160x160xf32>, vector<16x160xf32> -> vector<16x160xf32>
    %c0_212 = arith.constant 0 : index
    %c0_213 = arith.constant 0 : index
    %c0_214 = arith.constant 0 : index
    %361 = vector.load %arg3[%c0_212, %c0_213, %c0_214] : memref<1x16x16xf32, #tpu.memory_space<vmem>>, vector<1x16x16xf32>
    %362 = vector.shape_cast %361 : vector<1x16x16xf32> to vector<16x16xf32>
    %cst_215 = arith.constant dense<0.000000e+00> : vector<16x160xf32>
    %363 = tpu.matmul %362, %360, %cst_215 {dimension_numbers = #tpu.dot_dimension_numbers<[1], [0], [0], [1], [0, 0, 1, 1], [], []>} : vector<16x16xf32>, vector<16x160xf32>, vector<16x160xf32> -> vector<16x160xf32>
    %c0_216 = arith.constant 0 : index
    %c0_217 = arith.constant 0 : index
    %c0_218 = arith.constant 0 : index
    %364 = vector.load %arg12[%c0_216, %c0_217, %c0_218] : memref<1x1x160xf32, #tpu.memory_space<vmem>>, vector<1x1x160xf32>
    %365 = vector.shape_cast %364 : vector<1x1x160xf32> to vector<1x160xf32>
    %366 = vector.broadcast %365 : vector<1x160xf32> to vector<16x160xf32>
    %367 = arith.addf %363, %366 : vector<16x160xf32>
    %cst_219 = arith.constant 0.000000e+00 : f32
    %368 = vector.broadcast %cst_219 : f32 to vector<16x160xf32>
    %369 = arith.cmpf ogt, %367, %368 : vector<16x160xf32>
    %cst_220 = arith.constant 0.00999999977 : f32
    %370 = vector.broadcast %cst_220 : f32 to vector<16x160xf32>
    %371 = arith.mulf %370, %367 : vector<16x160xf32>
    %372 = arith.select %369, %367, %371 : vector<16x160xi1>, vector<16x160xf32>
    %c0_221 = arith.constant 0 : index
    %c0_222 = arith.constant 0 : index
    %c0_223 = arith.constant 0 : index
    %373 = vector.load %arg4[%c0_221, %c0_222, %c0_223] : memref<1x2x16xf32, #tpu.memory_space<vmem>>, vector<1x2x16xf32>
    %374 = vector.shape_cast %373 : vector<1x2x16xf32> to vector<2x16xf32>
    %cst_224 = arith.constant dense<0.000000e+00> : vector<2x160xf32>
    %375 = tpu.matmul %374, %372, %cst_224 {dimension_numbers = #tpu.dot_dimension_numbers<[1], [0], [0], [1], [0, 0, 1, 1], [], []>} : vector<2x16xf32>, vector<16x160xf32>, vector<2x160xf32> -> vector<2x160xf32>
    %c0_225 = arith.constant 0 : index
    %c0_226 = arith.constant 0 : index
    %c0_227 = arith.constant 0 : index
    %376 = vector.load %arg6[%c0_225, %c0_226, %c0_227] : memref<1x2x1xf32, #tpu.memory_space<vmem>>, vector<1x2x1xf32>
    %377 = vector.shape_cast %376 : vector<1x2x1xf32> to vector<2x1xf32>
    %378 = vector.broadcast %377 : vector<2x1xf32> to vector<2x160xf32>
    %379 = arith.mulf %375, %378 : vector<2x160xf32>
    %c0_228 = arith.constant 0 : index
    %c160 = arith.constant 160 : index
    %380 = vector.load %arg20[%c0_228, %c160] : memref<2x320xf32, #tpu.memory_space<vmem>>, vector<2x160xf32>
    tpu.vector_store %arg20[%c0_228, %c160], %379 {strides = array<i32>} : memref<2x320xf32, #tpu.memory_space<vmem>>, vector<2x160xf32>,
    %c0_229 = arith.constant 0 : index
    %c0_230 = arith.constant 0 : index
    %c0_231 = arith.constant 0 : index
    %381 = vector.load %arg5[%c0_229, %c0_230, %c0_231] : memref<1x16x2xf32, #tpu.memory_space<vmem>>, vector<1x16x1xf32>
    %382 = vector.shape_cast %381 : vector<1x16x1xf32> to vector<16x1xf32>
    %cst_232 = arith.constant 0.000000e+00 : f32
    %383 = vector.broadcast %cst_232 : f32 to vector<16x1xf32>
    %384 = arith.cmpf ogt, %382, %383 : vector<16x1xf32>
    %cst_233 = arith.constant -1.000000e+30 : f32
    %385 = vector.shape_cast %384 : vector<16x1xi1> to vector<16x1xi1>
    %386 = vector.broadcast %385 : vector<16x1xi1> to vector<16x160xi1>
    %387 = vector.broadcast %cst_233 : f32 to vector<16x160xf32>
    %388 = arith.select %386, %372, %387 : vector<16x160xi1>, vector<16x160xf32>
    %cst_234 = arith.constant dense<0xFF800000> : vector<160xf32>
    %389 = vector.multi_reduction <maximumf>, %388, %cst_234 [0] : vector<16x160xf32> to vector<160xf32>
    %390 = vector.shape_cast %389 : vector<160xf32> to vector<1x160xf32>
    %c0_235 = arith.constant 0 : index
    %c0_236 = arith.constant 0 : index
    %391 = vector.load %arg20[%c0_235, %c0_236] : memref<2x320xf32, #tpu.memory_space<vmem>>, vector<1x160xf32>
    tpu.vector_store %arg20[%c0_235, %c0_236], %390 {strides = array<i32>} : memref<2x320xf32, #tpu.memory_space<vmem>>, vector<1x160xf32>,
    %c0_237 = arith.constant 0 : index
    %c0_238 = arith.constant 0 : index
    %c1 = arith.constant 1 : index
    %392 = vector.load %arg5[%c0_237, %c0_238, %c1] : memref<1x16x2xf32, #tpu.memory_space<vmem>>, vector<1x16x1xf32>
    %393 = vector.shape_cast %392 : vector<1x16x1xf32> to vector<16x1xf32>
    %cst_239 = arith.constant 0.000000e+00 : f32
    %394 = vector.broadcast %cst_239 : f32 to vector<16x1xf32>
    %395 = arith.cmpf ogt, %393, %394 : vector<16x1xf32>
    %cst_240 = arith.constant -1.000000e+30 : f32
    %396 = vector.shape_cast %395 : vector<16x1xi1> to vector<16x1xi1>
    %397 = vector.broadcast %396 : vector<16x1xi1> to vector<16x160xi1>
    %398 = vector.broadcast %cst_240 : f32 to vector<16x160xf32>
    %399 = arith.select %397, %372, %398 : vector<16x160xi1>, vector<16x160xf32>
    %cst_241 = arith.constant dense<0xFF800000> : vector<160xf32>
    %400 = vector.multi_reduction <maximumf>, %399, %cst_241 [0] : vector<16x160xf32> to vector<160xf32>
    %401 = vector.shape_cast %400 : vector<160xf32> to vector<1x160xf32>
    %c1_242 = arith.constant 1 : index
    %c0_243 = arith.constant 0 : index
    %402 = vector.load %arg20[%c1_242, %c0_243] : memref<2x320xf32, #tpu.memory_space<vmem>>, vector<1x160xf32>
    tpu.vector_store %arg20[%c1_242, %c0_243], %401 {strides = array<i32>} : memref<2x320xf32, #tpu.memory_space<vmem>>, vector<1x160xf32>,
    %c0_244 = arith.constant 0 : index
    %c0_245 = arith.constant 0 : index
    %403 = vector.load %arg20[%c0_244, %c0_245] : memref<2x320xf32, #tpu.memory_space<vmem>>, vector<2x320xf32>
    %c0_246 = arith.constant 0 : index
    %c0_247 = arith.constant 0 : index
    %c0_248 = arith.constant 0 : index
    %404 = vector.load %arg13[%c0_246, %c0_247, %c0_248] : memref<1x320x1000xf32, #tpu.memory_space<vmem>>, vector<1x320x1000xf32>
    %405 = vector.shape_cast %404 : vector<1x320x1000xf32> to vector<320x1000xf32>
    %cst_249 = arith.constant dense<0.000000e+00> : vector<2x1000xf32>
    %406 = tpu.matmul %403, %405, %cst_249 {dimension_numbers = #tpu.dot_dimension_numbers<[1], [0], [0], [1], [0, 0, 1, 1], [], []>} : vector<2x320xf32>, vector<320x1000xf32>, vector<2x1000xf32> -> vector<2x1000xf32>
    %c0_250 = arith.constant 0 : index
    %c0_251 = arith.constant 0 : index
    %c0_252 = arith.constant 0 : index
    %407 = vector.load %arg14[%c0_250, %c0_251, %c0_252] : memref<1x1x1000xf32, #tpu.memory_space<vmem>>, vector<1x1x1000xf32>
    %408 = vector.shape_cast %407 : vector<1x1x1000xf32> to vector<1x1000xf32>
    %409 = vector.broadcast %408 : vector<1x1000xf32> to vector<2x1000xf32>
    %410 = arith.addf %406, %409 : vector<2x1000xf32>
    %cst_253 = arith.constant 0.000000e+00 : f32
    %411 = vector.broadcast %cst_253 : f32 to vector<2x1000xf32>
    %412 = arith.cmpf ogt, %410, %411 : vector<2x1000xf32>
    %cst_254 = arith.constant 0.00999999977 : f32
    %413 = vector.broadcast %cst_254 : f32 to vector<2x1000xf32>
    %414 = arith.mulf %413, %410 : vector<2x1000xf32>
    %415 = arith.select %412, %410, %414 : vector<2x1000xi1>, vector<2x1000xf32>
    %c0_255 = arith.constant 0 : index
    %c0_256 = arith.constant 0 : index
    %c0_257 = arith.constant 0 : index
    %416 = vector.load %arg15[%c0_255, %c0_256, %c0_257] : memref<1x1000x64xf32, #tpu.memory_space<vmem>>, vector<1x1000x64xf32>
    %417 = vector.shape_cast %416 : vector<1x1000x64xf32> to vector<1000x64xf32>
    %cst_258 = arith.constant dense<0.000000e+00> : vector<2x64xf32>
    %418 = tpu.matmul %415, %417, %cst_258 {dimension_numbers = #tpu.dot_dimension_numbers<[1], [0], [0], [1], [0, 0, 1, 1], [], []>} : vector<2x1000xf32>, vector<1000x64xf32>, vector<2x64xf32> -> vector<2x64xf32>
    %c0_259 = arith.constant 0 : index
    %c0_260 = arith.constant 0 : index
    %c0_261 = arith.constant 0 : index
    %419 = vector.load %arg16[%c0_259, %c0_260, %c0_261] : memref<1x1x64xf32, #tpu.memory_space<vmem>>, vector<1x1x64xf32>
    %420 = vector.shape_cast %419 : vector<1x1x64xf32> to vector<1x64xf32>
    %421 = vector.broadcast %420 : vector<1x64xf32> to vector<2x64xf32>
    %422 = arith.addf %418, %421 : vector<2x64xf32>
    %c0_262 = arith.constant 0 : index
    %c0_263 = arith.constant 0 : index
    %c0_264 = arith.constant 0 : index
    %423 = vector.load %arg17[%c0_262, %c0_263, %c0_264] : memref<1x2x64xf32, #tpu.memory_space<vmem>>, vector<1x2x64xf32>
    %424 = vector.shape_cast %423 : vector<1x2x64xf32> to vector<2x64xf32>
    %425 = vector.shape_cast %422 : vector<2x64xf32> to vector<1x2x64xf32>
    tpu.vector_store %arg17[%c0_262, %c0_263, %c0_264], %425 {strides = array<i32>} : memref<1x2x64xf32, #tpu.memory_space<vmem>>, vector<1x2x64xf32>,
    return
  }
  func.func @transform_0(%arg0: i32) -> (i32, i32, i32) {
    %c0_i32 = arith.constant 0 : i32
    %c0_i32_0 = arith.constant 0 : i32
    %c0_i32_1 = arith.constant 0 : i32
    return %arg0, %c0_i32, %c0_i32_0 : i32, i32, i32
  }
  func.func @transform_1(%arg0: i32) -> (i32, i32, i32) {
    %c0_i32 = arith.constant 0 : i32
    %c0_i32_0 = arith.constant 0 : i32
    %c0_i32_1 = arith.constant 0 : i32
    return %arg0, %c0_i32, %c0_i32_0 : i32, i32, i32
  }
  func.func @transform_2(%arg0: i32) -> (i32, i32, i32) {
    %c0_i32 = arith.constant 0 : i32
    %c0_i32_0 = arith.constant 0 : i32
    %c0_i32_1 = arith.constant 0 : i32
    return %arg0, %c0_i32, %c0_i32_0 : i32, i32, i32
  }
  func.func @transform_3(%arg0: i32) -> (i32, i32, i32) {
    %c0_i32 = arith.constant 0 : i32
    %c0_i32_0 = arith.constant 0 : i32
    %c0_i32_1 = arith.constant 0 : i32
    return %arg0, %c0_i32, %c0_i32_0 : i32, i32, i32
  }
  func.func @transform_4(%arg0: i32) -> (i32, i32, i32) {
    %c0_i32 = arith.constant 0 : i32
    %c0_i32_0 = arith.constant 0 : i32
    %c0_i32_1 = arith.constant 0 : i32
    return %arg0, %c0_i32, %c0_i32_0 : i32, i32, i32
  }
  func.func @transform_5(%arg0: i32) -> (i32, i32, i32) {
    %c0_i32 = arith.constant 0 : i32
    %c0_i32_0 = arith.constant 0 : i32
    %c0_i32_1 = arith.constant 0 : i32
    return %arg0, %c0_i32, %c0_i32_0 : i32, i32, i32
  }
  func.func @transform_6(%arg0: i32) -> (i32, i32, i32) {
    %c0_i32 = arith.constant 0 : i32
    %c0_i32_0 = arith.constant 0 : i32
    %c0_i32_1 = arith.constant 0 : i32
    return %arg0, %c0_i32, %c0_i32_0 : i32, i32, i32
  }
  func.func @transform_7(%arg0: i32) -> (i32, i32, i32) {
    %c0_i32 = arith.constant 0 : i32
    %c0_i32_0 = arith.constant 0 : i32
    %c0_i32_1 = arith.constant 0 : i32
    return %arg0, %c0_i32, %c0_i32_0 : i32, i32, i32
  }
  func.func @transform_8(%arg0: i32) -> (i32, i32, i32) {
    %c0_i32 = arith.constant 0 : i32
    %c0_i32_0 = arith.constant 0 : i32
    %c0_i32_1 = arith.constant 0 : i32
    return %arg0, %c0_i32, %c0_i32_0 : i32, i32, i32
  }
  func.func @transform_9(%arg0: i32) -> (i32, i32, i32) {
    %c0_i32 = arith.constant 0 : i32
    %c0_i32_0 = arith.constant 0 : i32
    %c0_i32_1 = arith.constant 0 : i32
    return %arg0, %c0_i32, %c0_i32_0 : i32, i32, i32
  }
  func.func @transform_10(%arg0: i32) -> (i32, i32, i32) {
    %c0_i32 = arith.constant 0 : i32
    %c0_i32_0 = arith.constant 0 : i32
    %c0_i32_1 = arith.constant 0 : i32
    return %arg0, %c0_i32, %c0_i32_0 : i32, i32, i32
  }
  func.func @transform_11(%arg0: i32) -> (i32, i32, i32) {
    %c0_i32 = arith.constant 0 : i32
    %c0_i32_0 = arith.constant 0 : i32
    %c0_i32_1 = arith.constant 0 : i32
    return %arg0, %c0_i32, %c0_i32_0 : i32, i32, i32
  }
  func.func @transform_12(%arg0: i32) -> (i32, i32, i32) {
    %c0_i32 = arith.constant 0 : i32
    %c0_i32_0 = arith.constant 0 : i32
    %c0_i32_1 = arith.constant 0 : i32
    return %arg0, %c0_i32, %c0_i32_0 : i32, i32, i32
  }
  func.func @transform_13(%arg0: i32) -> (i32, i32, i32) {
    %c0_i32 = arith.constant 0 : i32
    %c0_i32_0 = arith.constant 0 : i32
    %c0_i32_1 = arith.constant 0 : i32
    return %arg0, %c0_i32, %c0_i32_0 : i32, i32, i32
  }
  func.func @transform_14(%arg0: i32) -> (i32, i32, i32) {
    %c0_i32 = arith.constant 0 : i32
    %c0_i32_0 = arith.constant 0 : i32
    %c0_i32_1 = arith.constant 0 : i32
    return %arg0, %c0_i32, %c0_i32_0 : i32, i32, i32
  }
  func.func @transform_15(%arg0: i32) -> (i32, i32, i32) {
    %c0_i32 = arith.constant 0 : i32
    %c0_i32_0 = arith.constant 0 : i32
    %c0_i32_1 = arith.constant 0 : i32
    return %arg0, %c0_i32, %c0_i32_0 : i32, i32, i32
  }
  func.func @transform_16(%arg0: i32) -> (i32, i32, i32) {
    %c0_i32 = arith.constant 0 : i32
    %c0_i32_0 = arith.constant 0 : i32
    %c0_i32_1 = arith.constant 0 : i32
    return %arg0, %c0_i32, %c0_i32_0 : i32, i32, i32
  }
}

module attributes {stable_mosaic.version = 11 : i64} {
  func.func @_tail_kernel(%arg0: i32, %arg1: memref<2x2x64xf32, #tpu.memory_space<vmem>>, %arg2: memref<2x1000xf32, #tpu.memory_space<vmem>>, %arg3: memref<1000x128xf32, #tpu.memory_space<vmem>>, %arg4: memref<1x128xf32, #tpu.memory_space<vmem>>, %arg5: memref<256x128xf32, #tpu.memory_space<vmem>>, %arg6: memref<1x128xf32, #tpu.memory_space<vmem>>, %arg7: memref<128x32xf32, #tpu.memory_space<vmem>>, %arg8: memref<1x32xf32, #tpu.memory_space<vmem>>, %arg9: memref<32x1xf32, #tpu.memory_space<vmem>>, %arg10: memref<1x1xf32, #tpu.memory_space<vmem>>, %arg11: memref<2x1xf32, #tpu.memory_space<vmem>>) attributes {dimension_semantics = [#tpu.dimension_semantics<arbitrary>], iteration_bounds = array<i64: 1>, scalar_prefetch = 0 : i64, scratch_operands = 0 : i64, tpu.core_type = #tpu.core_type<tc>, window_params = [{pipeline_mode = #tpu.pipeline_mode<synchronous>, transform_indices = @transform_0, window_bounds = array<i64: 2, 2, 64>}, {pipeline_mode = #tpu.pipeline_mode<synchronous>, transform_indices = @transform_1, window_bounds = array<i64: 2, 1000>}, {pipeline_mode = #tpu.pipeline_mode<synchronous>, transform_indices = @transform_2, window_bounds = array<i64: 1000, 128>}, {pipeline_mode = #tpu.pipeline_mode<synchronous>, transform_indices = @transform_3, window_bounds = array<i64: 1, 128>}, {pipeline_mode = #tpu.pipeline_mode<synchronous>, transform_indices = @transform_4, window_bounds = array<i64: 256, 128>}, {pipeline_mode = #tpu.pipeline_mode<synchronous>, transform_indices = @transform_5, window_bounds = array<i64: 1, 128>}, {pipeline_mode = #tpu.pipeline_mode<synchronous>, transform_indices = @transform_6, window_bounds = array<i64: 128, 32>}, {pipeline_mode = #tpu.pipeline_mode<synchronous>, transform_indices = @transform_7, window_bounds = array<i64: 1, 32>}, {pipeline_mode = #tpu.pipeline_mode<synchronous>, transform_indices = @transform_8, window_bounds = array<i64: 32, 1>}, {pipeline_mode = #tpu.pipeline_mode<synchronous>, transform_indices = @transform_9, window_bounds = array<i64: 1, 1>}, {pipeline_mode = #tpu.pipeline_mode<synchronous>, transform_indices = @transform_10, window_bounds = array<i64: 2, 1>}]} {
    %c0 = arith.constant 0 : index
    %c0_0 = arith.constant 0 : index
    %c0_1 = arith.constant 0 : index
    %0 = vector.load %arg1[%c0, %c0_0, %c0_1] : memref<2x2x64xf32, #tpu.memory_space<vmem>>, vector<1x2x64xf32>
    %1 = vector.shape_cast %0 : vector<1x2x64xf32> to vector<2x64xf32>
    %c1 = arith.constant 1 : index
    %c0_2 = arith.constant 0 : index
    %c0_3 = arith.constant 0 : index
    %2 = vector.load %arg1[%c1, %c0_2, %c0_3] : memref<2x2x64xf32, #tpu.memory_space<vmem>>, vector<1x2x64xf32>
    %3 = vector.shape_cast %2 : vector<1x2x64xf32> to vector<2x64xf32>
    %c0_4 = arith.constant 0 : index
    %c0_5 = arith.constant 0 : index
    %4 = vector.load %arg2[%c0_4, %c0_5] : memref<2x1000xf32, #tpu.memory_space<vmem>>, vector<2x1000xf32>
    %c0_6 = arith.constant 0 : index
    %c0_7 = arith.constant 0 : index
    %5 = vector.load %arg3[%c0_6, %c0_7] : memref<1000x128xf32, #tpu.memory_space<vmem>>, vector<1000x128xf32>
    %cst = arith.constant dense<0.000000e+00> : vector<2x128xf32>
    %6 = tpu.matmul %4, %5, %cst {dimension_numbers = #tpu.dot_dimension_numbers<[1], [0], [0], [1], [0, 0, 1, 1], [], []>} : vector<2x1000xf32>, vector<1000x128xf32>, vector<2x128xf32> -> vector<2x128xf32>
    %c0_8 = arith.constant 0 : index
    %c0_9 = arith.constant 0 : index
    %7 = vector.load %arg4[%c0_8, %c0_9] : memref<1x128xf32, #tpu.memory_space<vmem>>, vector<1x128xf32>
    %8 = vector.broadcast %7 : vector<1x128xf32> to vector<2x128xf32>
    %9 = arith.addf %6, %8 : vector<2x128xf32>
    %c0_10 = arith.constant 0 : index
    %c0_11 = arith.constant 0 : index
    %10 = vector.load %arg5[%c0_10, %c0_11] : memref<256x128xf32, #tpu.memory_space<vmem>>, vector<64x128xf32>
    %cst_12 = arith.constant dense<0.000000e+00> : vector<2x128xf32>
    %11 = tpu.matmul %1, %10, %cst_12 {dimension_numbers = #tpu.dot_dimension_numbers<[1], [0], [0], [1], [0, 0, 1, 1], [], []>} : vector<2x64xf32>, vector<64x128xf32>, vector<2x128xf32> -> vector<2x128xf32>
    %c64 = arith.constant 64 : index
    %c0_13 = arith.constant 0 : index
    %12 = vector.load %arg5[%c64, %c0_13] : memref<256x128xf32, #tpu.memory_space<vmem>>, vector<64x128xf32>
    %cst_14 = arith.constant dense<0.000000e+00> : vector<2x128xf32>
    %13 = tpu.matmul %3, %12, %cst_14 {dimension_numbers = #tpu.dot_dimension_numbers<[1], [0], [0], [1], [0, 0, 1, 1], [], []>} : vector<2x64xf32>, vector<64x128xf32>, vector<2x128xf32> -> vector<2x128xf32>
    %14 = arith.addf %11, %13 : vector<2x128xf32>
    %c128 = arith.constant 128 : index
    %c0_15 = arith.constant 0 : index
    %15 = vector.load %arg5[%c128, %c0_15] : memref<256x128xf32, #tpu.memory_space<vmem>>, vector<128x128xf32>
    %cst_16 = arith.constant dense<0.000000e+00> : vector<2x128xf32>
    %16 = tpu.matmul %9, %15, %cst_16 {dimension_numbers = #tpu.dot_dimension_numbers<[1], [0], [0], [1], [0, 0, 1, 1], [], []>} : vector<2x128xf32>, vector<128x128xf32>, vector<2x128xf32> -> vector<2x128xf32>
    %17 = arith.addf %14, %16 : vector<2x128xf32>
    %c0_17 = arith.constant 0 : index
    %c0_18 = arith.constant 0 : index
    %18 = vector.load %arg6[%c0_17, %c0_18] : memref<1x128xf32, #tpu.memory_space<vmem>>, vector<1x128xf32>
    %19 = vector.broadcast %18 : vector<1x128xf32> to vector<2x128xf32>
    %20 = arith.addf %17, %19 : vector<2x128xf32>
    %cst_19 = arith.constant 0.000000e+00 : f32
    %21 = vector.broadcast %cst_19 : f32 to vector<2x128xf32>
    %22 = arith.cmpf ogt, %20, %21 : vector<2x128xf32>
    %cst_20 = arith.constant 0.00999999977 : f32
    %23 = vector.broadcast %cst_20 : f32 to vector<2x128xf32>
    %24 = arith.mulf %23, %20 : vector<2x128xf32>
    %25 = arith.select %22, %20, %24 : vector<2x128xi1>, vector<2x128xf32>
    %c0_21 = arith.constant 0 : index
    %c0_22 = arith.constant 0 : index
    %26 = vector.load %arg7[%c0_21, %c0_22] : memref<128x32xf32, #tpu.memory_space<vmem>>, vector<128x32xf32>
    %cst_23 = arith.constant dense<0.000000e+00> : vector<2x32xf32>
    %27 = tpu.matmul %25, %26, %cst_23 {dimension_numbers = #tpu.dot_dimension_numbers<[1], [0], [0], [1], [0, 0, 1, 1], [], []>} : vector<2x128xf32>, vector<128x32xf32>, vector<2x32xf32> -> vector<2x32xf32>
    %c0_24 = arith.constant 0 : index
    %c0_25 = arith.constant 0 : index
    %28 = vector.load %arg8[%c0_24, %c0_25] : memref<1x32xf32, #tpu.memory_space<vmem>>, vector<1x32xf32>
    %29 = vector.broadcast %28 : vector<1x32xf32> to vector<2x32xf32>
    %30 = arith.addf %27, %29 : vector<2x32xf32>
    %cst_26 = arith.constant 0.000000e+00 : f32
    %31 = vector.broadcast %cst_26 : f32 to vector<2x32xf32>
    %32 = arith.cmpf ogt, %30, %31 : vector<2x32xf32>
    %cst_27 = arith.constant 0.00999999977 : f32
    %33 = vector.broadcast %cst_27 : f32 to vector<2x32xf32>
    %34 = arith.mulf %33, %30 : vector<2x32xf32>
    %35 = arith.select %32, %30, %34 : vector<2x32xi1>, vector<2x32xf32>
    %c0_28 = arith.constant 0 : index
    %c0_29 = arith.constant 0 : index
    %36 = vector.load %arg9[%c0_28, %c0_29] : memref<32x1xf32, #tpu.memory_space<vmem>>, vector<32x1xf32>
    %cst_30 = arith.constant dense<0.000000e+00> : vector<2x1xf32>
    %37 = tpu.matmul %35, %36, %cst_30 {dimension_numbers = #tpu.dot_dimension_numbers<[1], [0], [0], [1], [0, 0, 1, 1], [], []>} : vector<2x32xf32>, vector<32x1xf32>, vector<2x1xf32> -> vector<2x1xf32>
    %c0_31 = arith.constant 0 : index
    %c0_32 = arith.constant 0 : index
    %38 = vector.load %arg10[%c0_31, %c0_32] : memref<1x1xf32, #tpu.memory_space<vmem>>, vector<1x1xf32>
    %39 = vector.broadcast %38 : vector<1x1xf32> to vector<2x1xf32>
    %40 = arith.addf %37, %39 : vector<2x1xf32>
    %c0_33 = arith.constant 0 : index
    %c0_34 = arith.constant 0 : index
    %41 = vector.load %arg11[%c0_33, %c0_34] : memref<2x1xf32, #tpu.memory_space<vmem>>, vector<2x1xf32>
    tpu.vector_store %arg11[%c0_33, %c0_34], %40 {strides = array<i32>} : memref<2x1xf32, #tpu.memory_space<vmem>>, vector<2x1xf32>,
    return
  }
  func.func @transform_0(%arg0: i32) -> (i32, i32, i32) {
    %c0_i32 = arith.constant 0 : i32
    %c0_i32_0 = arith.constant 0 : i32
    %c0_i32_1 = arith.constant 0 : i32
    %c0_i32_2 = arith.constant 0 : i32
    return %c0_i32, %c0_i32_0, %c0_i32_1 : i32, i32, i32
  }
  func.func @transform_1(%arg0: i32) -> (i32, i32) {
    %c0_i32 = arith.constant 0 : i32
    %c0_i32_0 = arith.constant 0 : i32
    %c0_i32_1 = arith.constant 0 : i32
    return %c0_i32, %c0_i32_0 : i32, i32
  }
  func.func @transform_2(%arg0: i32) -> (i32, i32) {
    %c0_i32 = arith.constant 0 : i32
    %c0_i32_0 = arith.constant 0 : i32
    %c0_i32_1 = arith.constant 0 : i32
    return %c0_i32, %c0_i32_0 : i32, i32
  }
  func.func @transform_3(%arg0: i32) -> (i32, i32) {
    %c0_i32 = arith.constant 0 : i32
    %c0_i32_0 = arith.constant 0 : i32
    %c0_i32_1 = arith.constant 0 : i32
    return %c0_i32, %c0_i32_0 : i32, i32
  }
  func.func @transform_4(%arg0: i32) -> (i32, i32) {
    %c0_i32 = arith.constant 0 : i32
    %c0_i32_0 = arith.constant 0 : i32
    %c0_i32_1 = arith.constant 0 : i32
    return %c0_i32, %c0_i32_0 : i32, i32
  }
  func.func @transform_5(%arg0: i32) -> (i32, i32) {
    %c0_i32 = arith.constant 0 : i32
    %c0_i32_0 = arith.constant 0 : i32
    %c0_i32_1 = arith.constant 0 : i32
    return %c0_i32, %c0_i32_0 : i32, i32
  }
  func.func @transform_6(%arg0: i32) -> (i32, i32) {
    %c0_i32 = arith.constant 0 : i32
    %c0_i32_0 = arith.constant 0 : i32
    %c0_i32_1 = arith.constant 0 : i32
    return %c0_i32, %c0_i32_0 : i32, i32
  }
  func.func @transform_7(%arg0: i32) -> (i32, i32) {
    %c0_i32 = arith.constant 0 : i32
    %c0_i32_0 = arith.constant 0 : i32
    %c0_i32_1 = arith.constant 0 : i32
    return %c0_i32, %c0_i32_0 : i32, i32
  }
  func.func @transform_8(%arg0: i32) -> (i32, i32) {
    %c0_i32 = arith.constant 0 : i32
    %c0_i32_0 = arith.constant 0 : i32
    %c0_i32_1 = arith.constant 0 : i32
    return %c0_i32, %c0_i32_0 : i32, i32
  }
  func.func @transform_9(%arg0: i32) -> (i32, i32) {
    %c0_i32 = arith.constant 0 : i32
    %c0_i32_0 = arith.constant 0 : i32
    %c0_i32_1 = arith.constant 0 : i32
    return %c0_i32, %c0_i32_0 : i32, i32
  }
  func.func @transform_10(%arg0: i32) -> (i32, i32) {
    %c0_i32 = arith.constant 0 : i32
    %c0_i32_0 = arith.constant 0 : i32
    %c0_i32_1 = arith.constant 0 : i32
    return %c0_i32, %c0_i32_0 : i32, i32
  }
}

</mosaic_0001>

<llo_original>
// kernel: gat_gcn_forward.3
$region0: #{gat_gcn_forward.3}
  #allocation0 [shape = 'u32[]', space=smem, size = 0x4, offset = 0x4, fixed_abs, tag = 'smem constant byte address 0x4 - core index']
  #allocation1 [shape = 'u32[72,128]{1,0:T(1,128)}', space=vmem, size = 0x9000, scoped, tag = 'internal scratch']
  #allocation2 [shape = 'f32[1,1]{1,0:T(1,128)S(1)}', space=vmem, size = 0x200, scoped, tag = 'scoped memory for gat_gcn_forward.3']
  %s0 = inlined_call_operand.vmem [shape: f32[2,2,64], index: 0, kind: input, shape index: {}]
  %s1 = inlined_call_operand.vmem [shape: f32[2,1000], index: 1, kind: input, shape index: {}]
  %s2 = inlined_call_operand.vmem [shape: f32[1000,128], index: 2, kind: input, shape index: {}]
  %s3 = inlined_call_operand.vmem [shape: f32[1,128], index: 3, kind: input, shape index: {}]
  %s4 = inlined_call_operand.vmem [shape: f32[256,128], index: 4, kind: input, shape index: {}]
  %s5 = inlined_call_operand.vmem [shape: f32[1,128], index: 5, kind: input, shape index: {}]
  %s6 = inlined_call_operand.vmem [shape: f32[128,32], index: 6, kind: input, shape index: {}]
  %s7 = inlined_call_operand.vmem [shape: f32[1,32], index: 7, kind: input, shape index: {}]
  %s8 = inlined_call_operand.vmem [shape: f32[32,1], index: 8, kind: input, shape index: {}]
  %s9 = inlined_call_operand.<no memory space> [shape: f32[1,1], index: 9, kind: input, shape index: {}]
  %s10 = inlined_call_operand.vmem [shape: f32[2,1], index: 10, kind: output, shape index: {}]
  %s11 = sld [smem:[#allocation0]]
  $region50: #{gat_gcn_forward.3} parent=0
    _
  %s13 = ssub.s32 1, %s11
  %s14 = scalar_select 0, %s13, %s11
  %v15 = vstv %s9
  %16 = vst [vmem:[#allocation2] sm:$0x1] %v15
  // Predicated region
  $region2: #{gat_gcn_forward.3} parent=0 // pred_check
    _
  $region3: #{gat_gcn_forward.3} parent=0 // pred_check_branch
    %18 = sbr.rel (0) target = $region5
  $region4: #{gat_gcn_forward.3} parent=0 // pred_region
    _
  $region5: #{gat_gcn_forward.3} parent=0 // pred_fallthru
    _
  // Predicated region
  $region6: #{gat_gcn_forward.3} parent=0 // pred_check
    _
  $region7: #{gat_gcn_forward.3} parent=0 // pred_check_branch
    %20 = sbr.rel (0) target = $region9
  $region8: #{gat_gcn_forward.3} parent=0 // pred_region
    _
  $region9: #{gat_gcn_forward.3} parent=0 // pred_fallthru
    _
  // Predicated region
  $region10: #{gat_gcn_forward.3} parent=0 // pred_check
    _
  $region11: #{gat_gcn_forward.3} parent=0 // pred_check_branch
    %22 = sbr.rel (0) target = $region13
  $region12: #{gat_gcn_forward.3} parent=0 // pred_region
    _
  $region13: #{gat_gcn_forward.3} parent=0 // pred_fallthru
    _
  // Predicated region
  $region14: #{gat_gcn_forward.3} parent=0 // pred_check
    _
  $region15: #{gat_gcn_forward.3} parent=0 // pred_check_branch
    %24 = sbr.rel (0) target = $region17
  $region16: #{gat_gcn_forward.3} parent=0 // pred_region
    _
  $region17: #{gat_gcn_forward.3} parent=0 // pred_fallthru
    _
  // Predicated region
  $region18: #{gat_gcn_forward.3} parent=0 // pred_check
    _
  $region19: #{gat_gcn_forward.3} parent=0 // pred_check_branch
    %26 = sbr.rel (0) target = $region21
  $region20: #{gat_gcn_forward.3} parent=0 // pred_region
    _
  $region21: #{gat_gcn_forward.3} parent=0 // pred_fallthru
    _
  // Predicated region
  $region22: #{gat_gcn_forward.3} parent=0 // pred_check
    _
  $region23: #{gat_gcn_forward.3} parent=0 // pred_check_branch
    %28 = sbr.rel (0) target = $region25
  $region24: #{gat_gcn_forward.3} parent=0 // pred_region
    _
  $region25: #{gat_gcn_forward.3} parent=0 // pred_fallthru
    _
  // Predicated region
  $region26: #{gat_gcn_forward.3} parent=0 // pred_check
    _
  $region27: #{gat_gcn_forward.3} parent=0 // pred_check_branch
    %30 = sbr.rel (0) target = $region29
  $region28: #{gat_gcn_forward.3} parent=0 // pred_region
    _
  $region29: #{gat_gcn_forward.3} parent=0 // pred_fallthru
    _
  // Predicated region
  $region30: #{gat_gcn_forward.3} parent=0 // pred_check
    _
  $region31: #{gat_gcn_forward.3} parent=0 // pred_check_branch
    %32 = sbr.rel (0) target = $region33
  $region32: #{gat_gcn_forward.3} parent=0 // pred_region
    _
  $region33: #{gat_gcn_forward.3} parent=0 // pred_fallthru
    _
  // Predicated region
  $region34: #{gat_gcn_forward.3} parent=0 // pred_check
    _
  $region35: #{gat_gcn_forward.3} parent=0 // pred_check_branch
    %34 = sbr.rel (0) target = $region37
  $region36: #{gat_gcn_forward.3} parent=0 // pred_region
    _
  $region37: #{gat_gcn_forward.3} parent=0 // pred_fallthru
    _
  // Predicated region
  $region38: #{gat_gcn_forward.3} parent=0 // pred_check
    _
  $region39: #{gat_gcn_forward.3} parent=0 // pred_check_branch
    %36 = sbr.rel (0) target = $region41
  $region40: #{gat_gcn_forward.3} parent=0 // pred_region
    _
  $region41: #{gat_gcn_forward.3} parent=0 // pred_fallthru
    _
  %v37 = vld [vmem:[%s0] sm:$0x3]
  %s38 = scalar_lea.vmem %s0, 2
  %v39 = vld [vmem:[%s38] sm:$0x3]
  %v40 = vld [vmem:[%s1] sm:$0xff]
  %v41 = vld [vmem:[%s1 + $0x8] sm:$0xff]
  %v42 = vld [vmem:[%s2] sm:$0xff]
  %v43 = vld [vmem:[%s2 + $0x8] sm:$0xff]
  %v44 = vld [vmem:[%s2 + $0x10] sm:$0xff]
  %v45 = vld [vmem:[%s2 + $0x18] sm:$0xff]
  %v46 = vld [vmem:[%s2 + $0x20] sm:$0xff]
  %v47 = vld [vmem:[%s2 + $0x28] sm:$0xff]
  %v48 = vld [vmem:[%s2 + $0x30] sm:$0xff]
  %v49 = vld [vmem:[%s2 + $0x38] sm:$0xff]
  %v50 = vld [vmem:[%s2 + $0x40] sm:$0xff]
  %v51 = vld [vmem:[%s2 + $0x48] sm:$0xff]
  %v52 = vld [vmem:[%s2 + $0x50] sm:$0xff]
  %v53 = vld [vmem:[%s2 + $0x58] sm:$0xff]
  %v54 = vld [vmem:[%s2 + $0x60] sm:$0xff]
  %v55 = vld [vmem:[%s2 + $0x68] sm:$0xff]
  %v56 = vld [vmem:[%s2 + $0x70] sm:$0xff]
  %v57 = vld [vmem:[%s2 + $0x78] sm:$0xff]
  %v58 = vld [vmem:[%s2 + $0x80] sm:$0xff]
  %v59 = vld [vmem:[%s2 + $0x88] sm:$0xff]
  %v60 = vld [vmem:[%s2 + $0x90] sm:$0xff]
  %v61 = vld [vmem:[%s2 + $0x98] sm:$0xff]
  %v62 = vld [vmem:[%s2 + $0xa0] sm:$0xff]
  %v63 = vld [vmem:[%s2 + $0xa8] sm:$0xff]
  %v64 = vld [vmem:[%s2 + $0xb0] sm:$0xff]
  %v65 = vld [vmem:[%s2 + $0xb8] sm:$0xff]
  %v66 = vld [vmem:[%s2 + $0xc0] sm:$0xff]
  %v67 = vld [vmem:[%s2 + $0xc8] sm:$0xff]
  %v68 = vld [vmem:[%s2 + $0xd0] sm:$0xff]
  %v69 = vld [vmem:[%s2 + $0xd8] sm:$0xff]
  %v70 = vld [vmem:[%s2 + $0xe0] sm:$0xff]
  %v71 = vld [vmem:[%s2 + $0xe8] sm:$0xff]
  %v72 = vld [vmem:[%s2 + $0xf0] sm:$0xff]
  %v73 = vld [vmem:[%s2 + $0xf8] sm:$0xff]
  %v74 = vld [vmem:[%s2 + $0x100] sm:$0xff]
  %v75 = vld [vmem:[%s2 + $0x108] sm:$0xff]
  %v76 = vld [vmem:[%s2 + $0x110] sm:$0xff]
  %v77 = vld [vmem:[%s2 + $0x118] sm:$0xff]
  %v78 = vld [vmem:[%s2 + $0x120] sm:$0xff]
  %v79 = vld [vmem:[%s2 + $0x128] sm:$0xff]
  %v80 = vld [vmem:[%s2 + $0x130] sm:$0xff]
  %v81 = vld [vmem:[%s2 + $0x138] sm:$0xff]
  %v82 = vld [vmem:[%s2 + $0x140] sm:$0xff]
  %v83 = vld [vmem:[%s2 + $0x148] sm:$0xff]
  %v84 = vld [vmem:[%s2 + $0x150] sm:$0xff]
  %v85 = vld [vmem:[%s2 + $0x158] sm:$0xff]
  %v86 = vld [vmem:[%s2 + $0x160] sm:$0xff]
  %v87 = vld [vmem:[%s2 + $0x168] sm:$0xff]
  %v88 = vld [vmem:[%s2 + $0x170] sm:$0xff]
  %v89 = vld [vmem:[%s2 + $0x178] sm:$0xff]
  %v90 = vld [vmem:[%s2 + $0x180] sm:$0xff]
  %v91 = vld [vmem:[%s2 + $0x188] sm:$0xff]
  %v92 = vld [vmem:[%s2 + $0x190] sm:$0xff]
  %v93 = vld [vmem:[%s2 + $0x198] sm:$0xff]
  %v94 = vld [vmem:[%s2 + $0x1a0] sm:$0xff]
  %v95 = vld [vmem:[%s2 + $0x1a8] sm:$0xff]
  %v96 = vld [vmem:[%s2 + $0x1b0] sm:$0xff]
  %v97 = vld [vmem:[%s2 + $0x1b8] sm:$0xff]
  %v98 = vld [vmem:[%s2 + $0x1c0] sm:$0xff]
  %v99 = vld [vmem:[%s2 + $0x1c8] sm:$0xff]
  %v100 = vld [vmem:[%s2 + $0x1d0] sm:$0xff]
  %v101 = vld [vmem:[%s2 + $0x1d8] sm:$0xff]
  %v102 = vld [vmem:[%s2 + $0x1e0] sm:$0xff]
  %v103 = vld [vmem:[%s2 + $0x1e8] sm:$0xff]
  %v104 = vld [vmem:[%s2 + $0x1f0] sm:$0xff]
  %v105 = vld [vmem:[%s2 + $0x1f8] sm:$0xff]
  %v106 = vld [vmem:[%s2 + $0x200] sm:$0xff]
  %v107 = vld [vmem:[%s2 + $0x208] sm:$0xff]
  %v108 = vld [vmem:[%s2 + $0x210] sm:$0xff]
  %v109 = vld [vmem:[%s2 + $0x218] sm:$0xff]
  %v110 = vld [vmem:[%s2 + $0x220] sm:$0xff]
  %v111 = vld [vmem:[%s2 + $0x228] sm:$0xff]
  %v112 = vld [vmem:[%s2 + $0x230] sm:$0xff]
  %v113 = vld [vmem:[%s2 + $0x238] sm:$0xff]
  %v114 = vld [vmem:[%s2 + $0x240] sm:$0xff]
  %v115 = vld [vmem:[%s2 + $0x248] sm:$0xff]
  %v116 = vld [vmem:[%s2 + $0x250] sm:$0xff]
  %v117 = vld [vmem:[%s2 + $0x258] sm:$0xff]
  %v118 = vld [vmem:[%s2 + $0x260] sm:$0xff]
  %v119 = vld [vmem:[%s2 + $0x268] sm:$0xff]
  %v120 = vld [vmem:[%s2 + $0x270] sm:$0xff]
  %v121 = vld [vmem:[%s2 + $0x278] sm:$0xff]
  %v122 = vld [vmem:[%s2 + $0x280] sm:$0xff]
  %v123 = vld [vmem:[%s2 + $0x288] sm:$0xff]
  %v124 = vld [vmem:[%s2 + $0x290] sm:$0xff]
  %v125 = vld [vmem:[%s2 + $0x298] sm:$0xff]
  %v126 = vld [vmem:[%s2 + $0x2a0] sm:$0xff]
  %v127 = vld [vmem:[%s2 + $0x2a8] sm:$0xff]
  %v128 = vld [vmem:[%s2 + $0x2b0] sm:$0xff]
  %v129 = vld [vmem:[%s2 + $0x2b8] sm:$0xff]
  %v130 = vld [vmem:[%s2 + $0x2c0] sm:$0xff]
  %v131 = vld [vmem:[%s2 + $0x2c8] sm:$0xff]
  %v132 = vld [vmem:[%s2 + $0x2d0] sm:$0xff]
  %v133 = vld [vmem:[%s2 + $0x2d8] sm:$0xff]
  %v134 = vld [vmem:[%s2 + $0x2e0] sm:$0xff]
  %v135 = vld [vmem:[%s2 + $0x2e8] sm:$0xff]
  %v136 = vld [vmem:[%s2 + $0x2f0] sm:$0xff]
  %v137 = vld [vmem:[%s2 + $0x2f8] sm:$0xff]
  %v138 = vld [vmem:[%s2 + $0x300] sm:$0xff]
  %v139 = vld [vmem:[%s2 + $0x308] sm:$0xff]
  %v140 = vld [vmem:[%s2 + $0x310] sm:$0xff]
  %v141 = vld [vmem:[%s2 + $0x318] sm:$0xff]
  %v142 = vld [vmem:[%s2 + $0x320] sm:$0xff]
  %v143 = vld [vmem:[%s2 + $0x328] sm:$0xff]
  %v144 = vld [vmem:[%s2 + $0x330] sm:$0xff]
  %v145 = vld [vmem:[%s2 + $0x338] sm:$0xff]
  %v146 = vld [vmem:[%s2 + $0x340] sm:$0xff]
  %v147 = vld [vmem:[%s2 + $0x348] sm:$0xff]
  %v148 = vld [vmem:[%s2 + $0x350] sm:$0xff]
  %v149 = vld [vmem:[%s2 + $0x358] sm:$0xff]
  %v150 = vld [vmem:[%s2 + $0x360] sm:$0xff]
  %v151 = vld [vmem:[%s2 + $0x368] sm:$0xff]
  %v152 = vld [vmem:[%s2 + $0x370] sm:$0xff]
  %v153 = vld [vmem:[%s2 + $0x378] sm:$0xff]
  %v154 = vld [vmem:[%s2 + $0x380] sm:$0xff]
  %v155 = vld [vmem:[%s2 + $0x388] sm:$0xff]
  %v156 = vld [vmem:[%s2 + $0x390] sm:$0xff]
  %v157 = vld [vmem:[%s2 + $0x398] sm:$0xff]
  %v158 = vld [vmem:[%s2 + $0x3a0] sm:$0xff]
  %v159 = vld [vmem:[%s2 + $0x3a8] sm:$0xff]
  %v160 = vld [vmem:[%s2 + $0x3b0] sm:$0xff]
  %v161 = vld [vmem:[%s2 + $0x3b8] sm:$0xff]
  %v162 = vld [vmem:[%s2 + $0x3c0] sm:$0xff]
  %v163 = vld [vmem:[%s2 + $0x3c8] sm:$0xff]
  %v164 = vld [vmem:[%s2 + $0x3d0] sm:$0xff]
  %v165 = vld [vmem:[%s2 + $0x3d8] sm:$0xff]
  %v166 = vld [vmem:[%s2 + $0x3e0] sm:$0xff]
  %v167 = vld [vmem:[%s3] sm:$0x1]
  %v169 = vperm.slane %v167, 0
  %173 = vst [vmem:[#allocation1] ss:$4 sm:$0xff] %v40
  %s174 = scalar_lea.vmem [#allocation1], 32
  %175 = vst [vmem:[%s174] ss:$4 sm:$0xff] %v41
  %v176 = vld.sshfl [vmem:[#allocation1] sm:$0xff pattern:$0x73625140]
  %v177 = vld.sshfl [vmem:[#allocation1 + $0x8] sm:$0xff pattern:$0x73625140]
  %v178 = vld.sshfl [vmem:[#allocation1 + $0x10] sm:$0xff pattern:$0x73625140]
  %v179 = vld.sshfl [vmem:[#allocation1 + $0x18] sm:$0xff pattern:$0x73625140]
  %v180 = vld.sshfl [vmem:[#allocation1 + $0x20] sm:$0xff pattern:$0x73625140]
  %v181 = vld.sshfl [vmem:[#allocation1 + $0x28] sm:$0xff pattern:$0x73625140]
  %v182 = vld.sshfl [vmem:[#allocation1 + $0x30] sm:$0xff pattern:$0x73625140]
  %v183 = vld.sshfl [vmem:[#allocation1 + $0x38] sm:$0xff pattern:$0x73625140]
  %vm191 = vcmask 850944
  %v192 = vsel %vm191, %v183, 0
  %194 = vmatpush.msra.mxu0 %v57
  %195 = vmatpush.msra.mxu0 %v56
  %196 = vmatpush.msra.mxu0 %v55
  %197 = vmatpush.msra.mxu0 %v54
  %198 = vmatpush.msra.mxu0 %v53
  %199 = vmatpush.msra.mxu0 %v52
  %200 = vmatpush.msra.mxu0 %v51
  %201 = vmatpush.msra.mxu0 %v50
  %202 = vmatpush.msra.mxu0 %v49
  %203 = vmatpush.msra.mxu0 %v48
  %204 = vmatpush.msra.mxu0 %v47
  %205 = vmatpush.msra.mxu0 %v46
  %206 = vmatpush.msra.mxu0 %v45
  %207 = vmatpush.msra.mxu0 %v44
  %208 = vmatpush.msra.mxu0 %v43
  %209 = vmatpush.msra.mxu0 %v42
  %210 = vmatmul.f32.gmra.mxu0 %v176
  %v211 = vpop.f32.mrf.mxu0
  %v212 = vadd.f32 %v169, %v211
  %213 = vdwg.mxu0
  %214 = vmatpush.msra.mxu0 %v73
  %215 = vmatpush.msra.mxu0 %v72
  %216 = vmatpush.msra.mxu0 %v71
  %217 = vmatpush.msra.mxu0 %v70
  %218 = vmatpush.msra.mxu0 %v69
  %219 = vmatpush.msra.mxu0 %v68
  %220 = vmatpush.msra.mxu0 %v67
  %221 = vmatpush.msra.mxu0 %v66
  %222 = vmatpush.msra.mxu0 %v65
  %223 = vmatpush.msra.mxu0 %v64
  %224 = vmatpush.msra.mxu0 %v63
  %225 = vmatpush.msra.mxu0 %v62
  %226 = vmatpush.msra.mxu0 %v61
  %227 = vmatpush.msra.mxu0 %v60
  %228 = vmatpush.msra.mxu0 %v59
  %229 = vmatpush.msra.mxu0 %v58
  %230 = vmatmul.f32.gmra.mxu0 %v177
  %v231 = vpop.f32.mrf.mxu0
  %v232 = vadd.f32 %v212, %v231
  %233 = vdwg.mxu0
  %234 = vmatpush.msra.mxu0 %v89
  %235 = vmatpush.msra.mxu0 %v88
  %236 = vmatpush.msra.mxu0 %v87
  %237 = vmatpush.msra.mxu0 %v86
  %238 = vmatpush.msra.mxu0 %v85
  %239 = vmatpush.msra.mxu0 %v84
  %240 = vmatpush.msra.mxu0 %v83
  %241 = vmatpush.msra.mxu0 %v82
  %242 = vmatpush.msra.mxu0 %v81
  %243 = vmatpush.msra.mxu0 %v80
  %244 = vmatpush.msra.mxu0 %v79
  %245 = vmatpush.msra.mxu0 %v78
  %246 = vmatpush.msra.mxu0 %v77
  %247 = vmatpush.msra.mxu0 %v76
  %248 = vmatpush.msra.mxu0 %v75
  %249 = vmatpush.msra.mxu0 %v74
  %250 = vmatmul.f32.gmra.mxu0 %v178
  %v251 = vpop.f32.mrf.mxu0
  %v252 = vadd.f32 %v232, %v251
  %253 = vdwg.mxu0
  %254 = vmatpush.msra.mxu0 %v105
  %255 = vmatpush.msra.mxu0 %v104
  %256 = vmatpush.msra.mxu0 %v103
  %257 = vmatpush.msra.mxu0 %v102
  %258 = vmatpush.msra.mxu0 %v101
  %259 = vmatpush.msra.mxu0 %v100
  %260 = vmatpush.msra.mxu0 %v99
  %261 = vmatpush.msra.mxu0 %v98
  %262 = vmatpush.msra.mxu0 %v97
  %263 = vmatpush.msra.mxu0 %v96
  %264 = vmatpush.msra.mxu0 %v95
  %265 = vmatpush.msra.mxu0 %v94
  %266 = vmatpush.msra.mxu0 %v93
  %267 = vmatpush.msra.mxu0 %v92
  %268 = vmatpush.msra.mxu0 %v91
  %269 = vmatpush.msra.mxu0 %v90
  %270 = vmatmul.f32.gmra.mxu0 %v179
  %v271 = vpop.f32.mrf.mxu0
  %v272 = vadd.f32 %v252, %v271
  %273 = vdwg.mxu0
  %274 = vmatpush.msra.mxu0 %v121
  %275 = vmatpush.msra.mxu0 %v120
  %276 = vmatpush.msra.mxu0 %v119
  %277 = vmatpush.msra.mxu0 %v118
  %278 = vmatpush.msra.mxu0 %v117
  %279 = vmatpush.msra.mxu0 %v116
  %280 = vmatpush.msra.mxu0 %v115
  %281 = vmatpush.msra.mxu0 %v114
  %282 = vmatpush.msra.mxu0 %v113
  %283 = vmatpush.msra.mxu0 %v112
  %284 = vmatpush.msra.mxu0 %v111
  %285 = vmatpush.msra.mxu0 %v110
  %286 = vmatpush.msra.mxu0 %v109
  %287 = vmatpush.msra.mxu0 %v108
  %288 = vmatpush.msra.mxu0 %v107
  %289 = vmatpush.msra.mxu0 %v106
  %290 = vmatmul.f32.gmra.mxu0 %v180
  %v291 = vpop.f32.mrf.mxu0
  %v292 = vadd.f32 %v272, %v291
  %293 = vdwg.mxu0
  %294 = vmatpush.msra.mxu0 %v137
  %295 = vmatpush.msra.mxu0 %v136
  %296 = vmatpush.msra.mxu0 %v135
  %297 = vmatpush.msra.mxu0 %v134
  %298 = vmatpush.msra.mxu0 %v133
  %299 = vmatpush.msra.mxu0 %v132
  %300 = vmatpush.msra.mxu0 %v131
  %301 = vmatpush.msra.mxu0 %v130
  %302 = vmatpush.msra.mxu0 %v129
  %303 = vmatpush.msra.mxu0 %v128
  %304 = vmatpush.msra.mxu0 %v127
  %305 = vmatpush.msra.mxu0 %v126
  %306 = vmatpush.msra.mxu0 %v125
  %307 = vmatpush.msra.mxu0 %v124
  %308 = vmatpush.msra.mxu0 %v123
  %309 = vmatpush.msra.mxu0 %v122
  %310 = vmatmul.f32.gmra.mxu0 %v181
  %v311 = vpop.f32.mrf.mxu0
  %v312 = vadd.f32 %v292, %v311
  %313 = vdwg.mxu0
  %314 = vmatpush.msra.mxu0 %v153
  %315 = vmatpush.msra.mxu0 %v152
  %316 = vmatpush.msra.mxu0 %v151
  %317 = vmatpush.msra.mxu0 %v150
  %318 = vmatpush.msra.mxu0 %v149
  %319 = vmatpush.msra.mxu0 %v148
  %320 = vmatpush.msra.mxu0 %v147
  %321 = vmatpush.msra.mxu0 %v146
  %322 = vmatpush.msra.mxu0 %v145
  %323 = vmatpush.msra.mxu0 %v144
  %324 = vmatpush.msra.mxu0 %v143
  %325 = vmatpush.msra.mxu0 %v142
  %326 = vmatpush.msra.mxu0 %v141
  %327 = vmatpush.msra.mxu0 %v140
  %328 = vmatpush.msra.mxu0 %v139
  %329 = vmatpush.msra.mxu0 %v138
  %330 = vmatmul.f32.gmra.mxu0 %v182
  %v331 = vpop.f32.mrf.mxu0
  %v332 = vadd.f32 %v312, %v331
  %333 = vdwg.mxu0
  %334 = vmatpush.msra.mxu0 0.0
  %335 = vmatpush.msra.mxu0 0.0
  %336 = vmatpush.msra.mxu0 0.0
  %337 = vmatpush.msra.mxu0 %v166
  %338 = vmatpush.msra.mxu0 %v165
  %339 = vmatpush.msra.mxu0 %v164
  %340 = vmatpush.msra.mxu0 %v163
  %341 = vmatpush.msra.mxu0 %v162
  %342 = vmatpush.msra.mxu0 %v161
  %343 = vmatpush.msra.mxu0 %v160
  %344 = vmatpush.msra.mxu0 %v159
  %345 = vmatpush.msra.mxu0 %v158
  %346 = vmatpush.msra.mxu0 %v157
  %347 = vmatpush.msra.mxu0 %v156
  %348 = vmatpush.msra.mxu0 %v155
  %349 = vmatpush.msra.mxu0 %v154
  %350 = vmatmul.f32.gmra.mxu0 %v192
  %v351 = vpop.f32.mrf.mxu0
  %v352 = vadd.f32 %v332, %v351
  %353 = vdwg.mxu0
  %v354 = vld [vmem:[%s4] sm:$0xff]
  %v355 = vld [vmem:[%s4 + $0x8] sm:$0xff]
  %v356 = vld [vmem:[%s4 + $0x10] sm:$0xff]
  %v357 = vld [vmem:[%s4 + $0x18] sm:$0xff]
  %v358 = vld [vmem:[%s4 + $0x20] sm:$0xff]
  %v359 = vld [vmem:[%s4 + $0x28] sm:$0xff]
  %v360 = vld [vmem:[%s4 + $0x30] sm:$0xff]
  %v361 = vld [vmem:[%s4 + $0x38] sm:$0xff]
  %v362 = vld [vmem:[%s4 + $0x40] sm:$0xff]
  %v363 = vld [vmem:[%s4 + $0x48] sm:$0xff]
  %v364 = vld [vmem:[%s4 + $0x50] sm:$0xff]
  %v365 = vld [vmem:[%s4 + $0x58] sm:$0xff]
  %v366 = vld [vmem:[%s4 + $0x60] sm:$0xff]
  %v367 = vld [vmem:[%s4 + $0x68] sm:$0xff]
  %v368 = vld [vmem:[%s4 + $0x70] sm:$0xff]
  %v369 = vld [vmem:[%s4 + $0x78] sm:$0xff]
  %vm370 = vcmask 523264
  %v372 = vsel %vm370, %v39, 0
  %374 = vmatpush.msra.mxu0 0.0
  %375 = vmatpush.msra.mxu0 0.0
  %376 = vmatpush.msra.mxu0 0.0
  %377 = vmatpush.msra.mxu0 0.0
  %378 = vmatpush.msra.mxu0 0.0
  %379 = vmatpush.msra.mxu0 0.0
  %380 = vmatpush.msra.mxu0 0.0
  %381 = vmatpush.msra.mxu0 0.0
  %382 = vmatpush.msra.mxu0 %v369
  %383 = vmatpush.msra.mxu0 %v368
  %384 = vmatpush.msra.mxu0 %v367
  %385 = vmatpush.msra.mxu0 %v366
  %386 = vmatpush.msra.mxu0 %v365
  %387 = vmatpush.msra.mxu0 %v364
  %388 = vmatpush.msra.mxu0 %v363
  %389 = vmatpush.msra.mxu0 %v362
  %390 = vmatmul.f32.gmra.mxu0 %v372
  %v391 = vpop.f32.mrf.mxu0
  %v392 = vadd.f32 0.0, %v391
  %393 = vdwg.mxu0
  %v395 = vsel %vm370, %v37, 0
  %397 = vmatpush.msra.mxu0 0.0
  %398 = vmatpush.msra.mxu0 0.0
  %399 = vmatpush.msra.mxu0 0.0
  %400 = vmatpush.msra.mxu0 0.0
  %401 = vmatpush.msra.mxu0 0.0
  %402 = vmatpush.msra.mxu0 0.0
  %403 = vmatpush.msra.mxu0 0.0
  %404 = vmatpush.msra.mxu0 0.0
  %405 = vmatpush.msra.mxu0 %v361
  %406 = vmatpush.msra.mxu0 %v360
  %407 = vmatpush.msra.mxu0 %v359
  %408 = vmatpush.msra.mxu0 %v358
  %409 = vmatpush.msra.mxu0 %v357
  %410 = vmatpush.msra.mxu0 %v356
  %411 = vmatpush.msra.mxu0 %v355
  %412 = vmatpush.msra.mxu0 %v354
  %413 = vmatmul.f32.gmra.mxu0 %v395
  %v414 = vpop.f32.mrf.mxu0
  %v415 = vadd.f32 %v392, %v414
  %416 = vdwg.mxu0
  %v417 = vld [vmem:[%s4 + $0x80] sm:$0xff]
  %v418 = vld [vmem:[%s4 + $0x88] sm:$0xff]
  %v419 = vld [vmem:[%s4 + $0x90] sm:$0xff]
  %v420 = vld [vmem:[%s4 + $0x98] sm:$0xff]
  %v421 = vld [vmem:[%s4 + $0xa0] sm:$0xff]
  %v422 = vld [vmem:[%s4 + $0xa8] sm:$0xff]
  %v423 = vld [vmem:[%s4 + $0xb0] sm:$0xff]
  %v424 = vld [vmem:[%s4 + $0xb8] sm:$0xff]
  %v425 = vld [vmem:[%s4 + $0xc0] sm:$0xff]
  %v426 = vld [vmem:[%s4 + $0xc8] sm:$0xff]
  %v427 = vld [vmem:[%s4 + $0xd0] sm:$0xff]
  %v428 = vld [vmem:[%s4 + $0xd8] sm:$0xff]
  %v429 = vld [vmem:[%s4 + $0xe0] sm:$0xff]
  %v430 = vld [vmem:[%s4 + $0xe8] sm:$0xff]
  %v431 = vld [vmem:[%s4 + $0xf0] sm:$0xff]
  %v432 = vld [vmem:[%s4 + $0xf8] sm:$0xff]
  %433 = vmatpush.msra.mxu0 %v432
  %434 = vmatpush.msra.mxu0 %v431
  %435 = vmatpush.msra.mxu0 %v430
  %436 = vmatpush.msra.mxu0 %v429
  %437 = vmatpush.msra.mxu0 %v428
  %438 = vmatpush.msra.mxu0 %v427
  %439 = vmatpush.msra.mxu0 %v426
  %440 = vmatpush.msra.mxu0 %v425
  %441 = vmatpush.msra.mxu0 %v424
  %442 = vmatpush.msra.mxu0 %v423
  %443 = vmatpush.msra.mxu0 %v422
  %444 = vmatpush.msra.mxu0 %v421
  %445 = vmatpush.msra.mxu0 %v420
  %446 = vmatpush.msra.mxu0 %v419
  %447 = vmatpush.msra.mxu0 %v418
  %448 = vmatpush.msra.mxu0 %v417
  %449 = vmatmul.f32.gmra.mxu0 %v352
  %v450 = vpop.f32.mrf.mxu0
  %v451 = vadd.f32 0.0, %v450
  %452 = vdwg.mxu0
  %v453 = vadd.f32 %v415, %v451
  %v454 = vld [vmem:[%s5] sm:$0x1]
  %v456 = vperm.slane %v454, 0
  %v458 = vadd.f32 %v453, %v456
  %vm459 = vcmp.gt.f32.partialorder %v458, 0.0
  %v460 = vmul.f32 %v458, 0.01
  %v461 = vsel %vm459, %v458, %v460
  %v462 = vld [vmem:[%s6] sm:$0xff]
  %v463 = vld [vmem:[%s6 + $0x8] sm:$0xff]
  %v464 = vld [vmem:[%s6 + $0x10] sm:$0xff]
  %v465 = vld [vmem:[%s6 + $0x18] sm:$0xff]
  %v466 = vld [vmem:[%s6 + $0x20] sm:$0xff]
  %v467 = vld [vmem:[%s6 + $0x28] sm:$0xff]
  %v468 = vld [vmem:[%s6 + $0x30] sm:$0xff]
  %v469 = vld [vmem:[%s6 + $0x38] sm:$0xff]
  %v470 = vld [vmem:[%s6 + $0x40] sm:$0xff]
  %v471 = vld [vmem:[%s6 + $0x48] sm:$0xff]
  %v472 = vld [vmem:[%s6 + $0x50] sm:$0xff]
  %v473 = vld [vmem:[%s6 + $0x58] sm:$0xff]
  %v474 = vld [vmem:[%s6 + $0x60] sm:$0xff]
  %v475 = vld [vmem:[%s6 + $0x68] sm:$0xff]
  %v476 = vld [vmem:[%s6 + $0x70] sm:$0xff]
  %v477 = vld [vmem:[%s6 + $0x78] sm:$0xff]
  %v478 = vld [vmem:[%s7] sm:$0x1]
  %v480 = vperm.slane %v478, 0
  %482 = vmatpush.msra.mxu0 %v477
  %483 = vmatpush.msra.mxu0 %v476
  %484 = vmatpush.msra.mxu0 %v475
  %485 = vmatpush.msra.mxu0 %v474
  %486 = vmatpush.msra.mxu0 %v473
  %487 = vmatpush.msra.mxu0 %v472
  %488 = vmatpush.msra.mxu0 %v471
  %489 = vmatpush.msra.mxu0 %v470
  %490 = vmatpush.msra.mxu0 %v469
  %491 = vmatpush.msra.mxu0 %v468
  %492 = vmatpush.msra.mxu0 %v467
  %493 = vmatpush.msra.mxu0 %v466
  %494 = vmatpush.msra.mxu0 %v465
  %495 = vmatpush.msra.mxu0 %v464
  %496 = vmatpush.msra.mxu0 %v463
  %497 = vmatpush.msra.mxu0 %v462
  %498 = vmatmul.f32.gmra.mxu0 %v461
  %v499 = vpop.f32.mrf.mxu0
  %v500 = vadd.f32 %v480, %v499
  %501 = vdwg.mxu0
  %vm502 = vcmp.gt.f32.partialorder %v500, 0.0
  %v503 = vmul.f32 %v500, 0.01
  %v504 = vsel %vm502, %v500, %v503
  %v505 = vld [vmem:[%s8] sm:$0xff]
  %v506 = vld [vmem:[%s8 + $0x8] sm:$0xff]
  %v507 = vld [vmem:[%s8 + $0x10] sm:$0xff]
  %v508 = vld [vmem:[%s8 + $0x18] sm:$0xff]
  %v509 = vld [vmem:[#allocation2] sm:$0x1]
  %v511 = vperm.slane %v509, 0
  %vm513 = vcmask 261120
  %v515 = vsel %vm513, %v504, 0
  %517 = vmatpush.msra.mxu0 0.0
  %518 = vmatpush.msra.mxu0 0.0
  %519 = vmatpush.msra.mxu0 0.0
  %520 = vmatpush.msra.mxu0 0.0
  %521 = vmatpush.msra.mxu0 0.0
  %522 = vmatpush.msra.mxu0 0.0
  %523 = vmatpush.msra.mxu0 0.0
  %524 = vmatpush.msra.mxu0 0.0
  %525 = vmatpush.msra.mxu0 0.0
  %526 = vmatpush.msra.mxu0 0.0
  %527 = vmatpush.msra.mxu0 0.0
  %528 = vmatpush.msra.mxu0 0.0
  %529 = vmatpush.msra.mxu0 %v508
  %530 = vmatpush.msra.mxu0 %v507
  %531 = vmatpush.msra.mxu0 %v506
  %532 = vmatpush.msra.mxu0 %v505
  %533 = vmatmul.f32.gmra.mxu0 %v515
  %v534 = vpop.f32.mrf.mxu0
  %v535 = vadd.f32 %v511, %v534
  %536 = vdwg.mxu0
  %vm537 = vcmask 1024
  %538 = vst.msk [vmem:[%s10] sm:$0x3] %vm537, %v535
  // Predicated region
  $region42: #{gat_gcn_forward.3} parent=0 // pred_check
    _
  $region43: #{gat_gcn_forward.3} parent=0 // pred_check_branch
    %540 = sbr.rel (0) target = $region45
  $region44: #{gat_gcn_forward.3} parent=0 // pred_region
    _
  $region45: #{gat_gcn_forward.3} parent=0 // pred_fallthru
    _
  // Predicated region
  $region46: #{gat_gcn_forward.3} parent=0 // pred_check
    _
  $region47: #{gat_gcn_forward.3} parent=0 // pred_check_branch
    %542 = sbr.rel (0) target = $region49
  $region48: #{gat_gcn_forward.3} parent=0 // pred_region
    _
  $region49: #{gat_gcn_forward.3} parent=0 // pred_fallthru
    _

// kernel: gat_gcn_forward.2
$region0: #{gat_gcn_forward.2}
  #allocation0 [shape = 'u32[]', space=smem, size = 0x4, offset = 0x4, fixed_abs, tag = 'smem constant byte address 0x4 - core index']
  #allocation1 [shape = 'u32[72,128]{1,0:T(1,128)}', space=vmem, size = 0x9000, scoped, tag = 'internal scratch']
  #allocation2 [shape = 'f32[16,160]{1,0:T(8,128)}', space=vmem, size = 0x4000, scoped, tag = 'scratch operand']
  #allocation3 [shape = 'f32[16,160]{1,0:T(8,128)}', space=vmem, size = 0x4000, scoped, tag = 'scratch operand']
  #allocation4 [shape = 'f32[2,320]{1,0:T(2,128)}', space=vmem, size = 0xc00, scoped, tag = 'scratch operand']
  %s0 = inlined_call_operand.vmem [shape: f32[2,16,16], index: 0, kind: input, shape index: {}]
  %s1 = inlined_call_operand.vmem [shape: f32[2,16,16], index: 1, kind: input, shape index: {}]
  %s2 = inlined_call_operand.vmem [shape: f32[2,16,16], index: 2, kind: input, shape index: {}]
  %s3 = inlined_call_operand.vmem [shape: f32[2,2,16], index: 3, kind: input, shape index: {}]
  %s4 = inlined_call_operand.vmem [shape: f32[2,16,2], index: 4, kind: input, shape index: {}]
  %s5 = inlined_call_operand.vmem [shape: f32[2,2,1], index: 5, kind: input, shape index: {}]
  %s6 = inlined_call_operand.vmem [shape: f32[2,16,160], index: 6, kind: input, shape index: {}]
  %s7 = inlined_call_operand.vmem [shape: f32[2,1,160], index: 7, kind: input, shape index: {}]
  %s8 = inlined_call_operand.vmem [shape: f32[2,1,160], index: 8, kind: input, shape index: {}]
  %s9 = inlined_call_operand.vmem [shape: f32[2,1,160], index: 9, kind: input, shape index: {}]
  %s10 = inlined_call_operand.vmem [shape: f32[2,160,160], index: 10, kind: input, shape index: {}]
  %s11 = inlined_call_operand.vmem [shape: f32[2,1,160], index: 11, kind: input, shape index: {}]
  %s12 = inlined_call_operand.vmem [shape: f32[2,320,1000], index: 12, kind: input, shape index: {}]
  %s13 = inlined_call_operand.vmem [shape: f32[2,1,1000], index: 13, kind: input, shape index: {}]
  %s14 = inlined_call_operand.vmem [shape: f32[2,1000,64], index: 14, kind: input, shape index: {}]
  %s15 = inlined_call_operand.vmem [shape: f32[2,1,64], index: 15, kind: input, shape index: {}]
  %s16 = inlined_call_operand.vmem [shape: f32[2,2,64], index: 16, kind: output, shape index: {}]
  %s17 = sld [smem:[#allocation0]]
  $region97: #{gat_gcn_forward.2} parent=0
    _
  %s19 = ssub.s32 1, %s17
  %s20 = scalar_select 0, %s19, %s17
  loop: start=0, step=1, limit=4
  $region2: #{gat_gcn_forward.2} parent=0 // loop_pre_header
    _
  $region3: #{gat_gcn_forward.2} parent=0 // loop_header
    %s22 = sphi 0, %s26
    %p23 = scmp.ge.s32.totalorder %s22, 4
    %s32 = sphi 0, %s34
    %s35 = sphi 0, %s32
    %s36 = sphi 0, %s35
    %s52 = sphi 0, %s36
    %s58 = sphi 0, %s60
    %s61 = sphi 0, %s58
    %s62 = sphi 0, %s61
    %s78 = sphi 0, %s62
    %s84 = sphi 0, %s86
    %s87 = sphi 0, %s84
    %s88 = sphi 0, %s87
    %s104 = sphi 0, %s88
    %s110 = sphi 0, %s112
    %s113 = sphi 0, %s110
    %s114 = sphi 0, %s113
    %s130 = sphi 0, %s114
    %s136 = sphi 0, %s138
    %s139 = sphi 0, %s136
    %s140 = sphi 0, %s139
    %s156 = sphi 0, %s140
    %s162 = sphi 0, %s164
    %s165 = sphi 0, %s162
    %s166 = sphi 0, %s165
    %s182 = sphi 0, %s166
    %s188 = sphi 0, %s190
    %s191 = sphi 0, %s188
    %s192 = sphi 0, %s191
    %s208 = sphi 0, %s192
    %s214 = sphi 0, %s216
    %s217 = sphi 0, %s214
    %s218 = sphi 0, %s217
    %s234 = sphi 0, %s218
    %s240 = sphi 0, %s242
    %s243 = sphi 0, %s240
    %s244 = sphi 0, %s243
    %s260 = sphi 0, %s244
    %s266 = sphi 0, %s268
    %s269 = sphi 0, %s266
    %s270 = sphi 0, %s269
    %s286 = sphi 0, %s270
    %s292 = sphi 0, %s294
    %s295 = sphi 0, %s292
    %s296 = sphi 0, %s295
    %s312 = sphi 0, %s296
    %s318 = sphi 0, %s320
    %s321 = sphi 0, %s318
    %s322 = sphi 0, %s321
    %s338 = sphi 0, %s322
    %s344 = sphi 0, %s346
    %s347 = sphi 0, %s344
    %s348 = sphi 0, %s347
    %s364 = sphi 0, %s348
    %s370 = sphi 0, %s372
    %s373 = sphi 0, %s370
    %s374 = sphi 0, %s373
    %s390 = sphi 0, %s374
    %s396 = sphi 0, %s398
    %s399 = sphi 0, %s396
    %s400 = sphi 0, %s399
    %s416 = sphi 0, %s400
    %s422 = sphi 0, %s424
    %s425 = sphi 0, %s422
    %s426 = sphi 0, %s425
    %s442 = sphi 0, %s426
    %s448 = sphi 0, %s450
    %s451 = sphi 0, %s448
    %s452 = sphi 0, %s451
    %s468 = sphi 0, %s452
  $region4: #{gat_gcn_forward.2} parent=0 // loop_header_branch
    %25 = sbr.rel (%p23) target = $region8
  $region5: #{gat_gcn_forward.2} parent=0 // loop_body
    %s27 = ssub.s32 %s22, 1
    %s28 = ssub.s32 %s22, 2
    %s29 = sadd.s32 %s22, 1
    %s30 = ssub.s32 %s22, %s29
    %p31 = scmp.eq.s32.totalorder %s30, 0
    %s33 = sadd.s32 %s32, 1
    %s34 = scalar_select %p31, %s32, %s33
    %p37 = pneg %p31
    %p38 = scmp.eq.s32.totalorder %s22, 1
    %p39 = por %p37, %p38
    %p40 = scmp.ne.s32.totalorder %s32, %s35
    %p41 = scmp.eq.s32.totalorder %s22, 0
    %p42 = por %p40, %p41
    %p43 = scmp.ne.s32.totalorder %s32, %s35
    %p44 = scmp.eq.s32.totalorder %s27, 1
    %p45 = por %p43, %p44
    %p46 = scmp.ne.s32.totalorder %s35, %s36
    %p47 = scmp.eq.s32.totalorder %s27, 0
    %p48 = por %p46, %p47
    %p49 = scmp.ne.s32.totalorder %s35, %s36
    %p50 = scmp.eq.s32.totalorder %s28, 1
    %p51 = por %p49, %p50
    %p53 = scmp.ne.s32.totalorder %s36, %s52
    %p54 = scmp.eq.s32.totalorder %s28, 0
    %p55 = por %p53, %p54
    %s56 = ssub.s32 %s22, %s29
    %p57 = scmp.eq.s32.totalorder %s56, 0
    %s59 = sadd.s32 %s58, 1
    %s60 = scalar_select %p57, %s58, %s59
    %p63 = pneg %p57
    %p64 = scmp.eq.s32.totalorder %s22, 1
    %p65 = por %p63, %p64
    %p66 = scmp.ne.s32.totalorder %s58, %s61
    %p67 = scmp.eq.s32.totalorder %s22, 0
    %p68 = por %p66, %p67
    %p69 = scmp.ne.s32.totalorder %s58, %s61
    %p70 = scmp.eq.s32.totalorder %s27, 1
    %p71 = por %p69, %p70
    %p72 = scmp.ne.s32.totalorder %s61, %s62
    %p73 = scmp.eq.s32.totalorder %s27, 0
    %p74 = por %p72, %p73
    %p75 = scmp.ne.s32.totalorder %s61, %s62
    %p76 = scmp.eq.s32.totalorder %s28, 1
    %p77 = por %p75, %p76
    %p79 = scmp.ne.s32.totalorder %s62, %s78
    %p80 = scmp.eq.s32.totalorder %s28, 0
    %p81 = por %p79, %p80
    %s82 = ssub.s32 %s22, %s29
    %p83 = scmp.eq.s32.totalorder %s82, 0
    %s85 = sadd.s32 %s84, 1
    %s86 = scalar_select %p83, %s84, %s85
    %p89 = pneg %p83
    %p90 = scmp.eq.s32.totalorder %s22, 1
    %p91 = por %p89, %p90
    %p92 = scmp.ne.s32.totalorder %s84, %s87
    %p93 = scmp.eq.s32.totalorder %s22, 0
    %p94 = por %p92, %p93
    %p95 = scmp.ne.s32.totalorder %s84, %s87
    %p96 = scmp.eq.s32.totalorder %s27, 1
    %p97 = por %p95, %p96
    %p98 = scmp.ne.s32.totalorder %s87, %s88
    %p99 = scmp.eq.s32.totalorder %s27, 0
    %p100 = por %p98, %p99
    %p101 = scmp.ne.s32.totalorder %s87, %s88
    %p102 = scmp.eq.s32.totalorder %s28, 1
    %p103 = por %p101, %p102
    %p105 = scmp.ne.s32.totalorder %s88, %s104
    %p106 = scmp.eq.s32.totalorder %s28, 0
    %p107 = por %p105, %p106
    %s108 = ssub.s32 %s22, %s29
    %p109 = scmp.eq.s32.totalorder %s108, 0
    %s111 = sadd.s32 %s110, 1
    %s112 = scalar_select %p109, %s110, %s111
    %p115 = pneg %p109
    %p116 = scmp.eq.s32.totalorder %s22, 1
    %p117 = por %p115, %p116
    %p118 = scmp.ne.s32.totalorder %s110, %s113
    %p119 = scmp.eq.s32.totalorder %s22, 0
    %p120 = por %p118, %p119
    %p121 = scmp.ne.s32.totalorder %s110, %s113
    %p122 = scmp.eq.s32.totalorder %s27, 1
    %p123 = por %p121, %p122
    %p124 = scmp.ne.s32.totalorder %s113, %s114
    %p125 = scmp.eq.s32.totalorder %s27, 0
    %p126 = por %p124, %p125
    %p127 = scmp.ne.s32.totalorder %s113, %s114
    %p128 = scmp.eq.s32.totalorder %s28, 1
    %p129 = por %p127, %p128
    %p131 = scmp.ne.s32.totalorder %s114, %s130
    %p132 = scmp.eq.s32.totalorder %s28, 0
    %p133 = por %p131, %p132
    %s134 = ssub.s32 %s22, %s29
    %p135 = scmp.eq.s32.totalorder %s134, 0
    %s137 = sadd.s32 %s136, 1
    %s138 = scalar_select %p135, %s136, %s137
    %p141 = pneg %p135
    %p142 = scmp.eq.s32.totalorder %s22, 1
    %p143 = por %p141, %p142
    %p144 = scmp.ne.s32.totalorder %s136, %s139
    %p145 = scmp.eq.s32.totalorder %s22, 0
    %p146 = por %p144, %p145
    %p147 = scmp.ne.s32.totalorder %s136, %s139
    %p148 = scmp.eq.s32.totalorder %s27, 1
    %p149 = por %p147, %p148
    %p150 = scmp.ne.s32.totalorder %s139, %s140
    %p151 = scmp.eq.s32.totalorder %s27, 0
    %p152 = por %p150, %p151
    %p153 = scmp.ne.s32.totalorder %s139, %s140
    %p154 = scmp.eq.s32.totalorder %s28, 1
    %p155 = por %p153, %p154
    %p157 = scmp.ne.s32.totalorder %s140, %s156
    %p158 = scmp.eq.s32.totalorder %s28, 0
    %p159 = por %p157, %p158
    %s160 = ssub.s32 %s22, %s29
    %p161 = scmp.eq.s32.totalorder %s160, 0
    %s163 = sadd.s32 %s162, 1
    %s164 = scalar_select %p161, %s162, %s163
    %p167 = pneg %p161
    %p168 = scmp.eq.s32.totalorder %s22, 1
    %p169 = por %p167, %p168
    %p170 = scmp.ne.s32.totalorder %s162, %s165
    %p171 = scmp.eq.s32.totalorder %s22, 0
    %p172 = por %p170, %p171
    %p173 = scmp.ne.s32.totalorder %s162, %s165
    %p174 = scmp.eq.s32.totalorder %s27, 1
    %p175 = por %p173, %p174
    %p176 = scmp.ne.s32.totalorder %s165, %s166
    %p177 = scmp.eq.s32.totalorder %s27, 0
    %p178 = por %p176, %p177
    %p179 = scmp.ne.s32.totalorder %s165, %s166
    %p180 = scmp.eq.s32.totalorder %s28, 1
    %p181 = por %p179, %p180
    %p183 = scmp.ne.s32.totalorder %s166, %s182
    %p184 = scmp.eq.s32.totalorder %s28, 0
    %p185 = por %p183, %p184
    %s186 = ssub.s32 %s22, %s29
    %p187 = scmp.eq.s32.totalorder %s186, 0
    %s189 = sadd.s32 %s188, 1
    %s190 = scalar_select %p187, %s188, %s189
    %p193 = pneg %p187
    %p194 = scmp.eq.s32.totalorder %s22, 1
    %p195 = por %p193, %p194
    %p196 = scmp.ne.s32.totalorder %s188, %s191
    %p197 = scmp.eq.s32.totalorder %s22, 0
    %p198 = por %p196, %p197
    %p199 = scmp.ne.s32.totalorder %s188, %s191
    %p200 = scmp.eq.s32.totalorder %s27, 1
    %p201 = por %p199, %p200
    %p202 = scmp.ne.s32.totalorder %s191, %s192
    %p203 = scmp.eq.s32.totalorder %s27, 0
    %p204 = por %p202, %p203
    %p205 = scmp.ne.s32.totalorder %s191, %s192
    %p206 = scmp.eq.s32.totalorder %s28, 1
    %p207 = por %p205, %p206
    %p209 = scmp.ne.s32.totalorder %s192, %s208
    %p210 = scmp.eq.s32.totalorder %s28, 0
    %p211 = por %p209, %p210
    %s212 = ssub.s32 %s22, %s29
    %p213 = scmp.eq.s32.totalorder %s212, 0
    %s215 = sadd.s32 %s214, 1
    %s216 = scalar_select %p213, %s214, %s215
    %p219 = pneg %p213
    %p220 = scmp.eq.s32.totalorder %s22, 1
    %p221 = por %p219, %p220
    %p222 = scmp.ne.s32.totalorder %s214, %s217
    %p223 = scmp.eq.s32.totalorder %s22, 0
    %p224 = por %p222, %p223
    %p225 = scmp.ne.s32.totalorder %s214, %s217
    %p226 = scmp.eq.s32.totalorder %s27, 1
    %p227 = por %p225, %p226
    %p228 = scmp.ne.s32.totalorder %s217, %s218
    %p229 = scmp.eq.s32.totalorder %s27, 0
    %p230 = por %p228, %p229
    %p231 = scmp.ne.s32.totalorder %s217, %s218
    %p232 = scmp.eq.s32.totalorder %s28, 1
    %p233 = por %p231, %p232
    %p235 = scmp.ne.s32.totalorder %s218, %s234
    %p236 = scmp.eq.s32.totalorder %s28, 0
    %p237 = por %p235, %p236
    %s238 = ssub.s32 %s22, %s29
    %p239 = scmp.eq.s32.totalorder %s238, 0
    %s241 = sadd.s32 %s240, 1
    %s242 = scalar_select %p239, %s240, %s241
    %p245 = pneg %p239
    %p246 = scmp.eq.s32.totalorder %s22, 1
    %p247 = por %p245, %p246
    %p248 = scmp.ne.s32.totalorder %s240, %s243
    %p249 = scmp.eq.s32.totalorder %s22, 0
    %p250 = por %p248, %p249
    %p251 = scmp.ne.s32.totalorder %s240, %s243
    %p252 = scmp.eq.s32.totalorder %s27, 1
    %p253 = por %p251, %p252
    %p254 = scmp.ne.s32.totalorder %s243, %s244
    %p255 = scmp.eq.s32.totalorder %s27, 0
    %p256 = por %p254, %p255
    %p257 = scmp.ne.s32.totalorder %s243, %s244
    %p258 = scmp.eq.s32.totalorder %s28, 1
    %p259 = por %p257, %p258
    %p261 = scmp.ne.s32.totalorder %s244, %s260
    %p262 = scmp.eq.s32.totalorder %s28, 0
    %p263 = por %p261, %p262
    %s264 = ssub.s32 %s22, %s29
    %p265 = scmp.eq.s32.totalorder %s264, 0
    %s267 = sadd.s32 %s266, 1
    %s268 = scalar_select %p265, %s266, %s267
    %p271 = pneg %p265
    %p272 = scmp.eq.s32.totalorder %s22, 1
    %p273 = por %p271, %p272
    %p274 = scmp.ne.s32.totalorder %s266, %s269
    %p275 = scmp.eq.s32.totalorder %s22, 0
    %p276 = por %p274, %p275
    %p277 = scmp.ne.s32.totalorder %s266, %s269
    %p278 = scmp.eq.s32.totalorder %s27, 1
    %p279 = por %p277, %p278
    %p280 = scmp.ne.s32.totalorder %s269, %s270
    %p281 = scmp.eq.s32.totalorder %s27, 0
    %p282 = por %p280, %p281
    %p283 = scmp.ne.s32.totalorder %s269, %s270
    %p284 = scmp.eq.s32.totalorder %s28, 1
    %p285 = por %p283, %p284
    %p287 = scmp.ne.s32.totalorder %s270, %s286
    %p288 = scmp.eq.s32.totalorder %s28, 0
    %p289 = por %p287, %p288
    %s290 = ssub.s32 %s22, %s29
    %p291 = scmp.eq.s32.totalorder %s290, 0
    %s293 = sadd.s32 %s292, 1
    %s294 = scalar_select %p291, %s292, %s293
    %p297 = pneg %p291
    %p298 = scmp.eq.s32.totalorder %s22, 1
    %p299 = por %p297, %p298
    %p300 = scmp.ne.s32.totalorder %s292, %s295
    %p301 = scmp.eq.s32.totalorder %s22, 0
    %p302 = por %p300, %p301
    %p303 = scmp.ne.s32.totalorder %s292, %s295
    %p304 = scmp.eq.s32.totalorder %s27, 1
    %p305 = por %p303, %p304
    %p306 = scmp.ne.s32.totalorder %s295, %s296
    %p307 = scmp.eq.s32.totalorder %s27, 0
    %p308 = por %p306, %p307
    %p309 = scmp.ne.s32.totalorder %s295, %s296
    %p310 = scmp.eq.s32.totalorder %s28, 1
    %p311 = por %p309, %p310
    %p313 = scmp.ne.s32.totalorder %s296, %s312
    %p314 = scmp.eq.s32.totalorder %s28, 0
    %p315 = por %p313, %p314
    %s316 = ssub.s32 %s22, %s29
    %p317 = scmp.eq.s32.totalorder %s316, 0
    %s319 = sadd.s32 %s318, 1
    %s320 = scalar_select %p317, %s318, %s319
    %p323 = pneg %p317
    %p324 = scmp.eq.s32.totalorder %s22, 1
    %p325 = por %p323, %p324
    %p326 = scmp.ne.s32.totalorder %s318, %s321
    %p327 = scmp.eq.s32.totalorder %s22, 0
    %p328 = por %p326, %p327
    %p329 = scmp.ne.s32.totalorder %s318, %s321
    %p330 = scmp.eq.s32.totalorder %s27, 1
    %p331 = por %p329, %p330
    %p332 = scmp.ne.s32.totalorder %s321, %s322
    %p333 = scmp.eq.s32.totalorder %s27, 0
    %p334 = por %p332, %p333
    %p335 = scmp.ne.s32.totalorder %s321, %s322
    %p336 = scmp.eq.s32.totalorder %s28, 1
    %p337 = por %p335, %p336
    %p339 = scmp.ne.s32.totalorder %s322, %s338
    %p340 = scmp.eq.s32.totalorder %s28, 0
    %p341 = por %p339, %p340
    %s342 = ssub.s32 %s22, %s29
    %p343 = scmp.eq.s32.totalorder %s342, 0
    %s345 = sadd.s32 %s344, 1
    %s346 = scalar_select %p343, %s344, %s345
    %p349 = pneg %p343
    %p350 = scmp.eq.s32.totalorder %s22, 1
    %p351 = por %p349, %p350
    %p352 = scmp.ne.s32.totalorder %s344, %s347
    %p353 = scmp.eq.s32.totalorder %s22, 0
    %p354 = por %p352, %p353
    %p355 = scmp.ne.s32.totalorder %s344, %s347
    %p356 = scmp.eq.s32.totalorder %s27, 1
    %p357 = por %p355, %p356
    %p358 = scmp.ne.s32.totalorder %s347, %s348
    %p359 = scmp.eq.s32.totalorder %s27, 0
    %p360 = por %p358, %p359
    %p361 = scmp.ne.s32.totalorder %s347, %s348
    %p362 = scmp.eq.s32.totalorder %s28, 1
    %p363 = por %p361, %p362
    %p365 = scmp.ne.s32.totalorder %s348, %s364
    %p366 = scmp.eq.s32.totalorder %s28, 0
    %p367 = por %p365, %p366
    %s368 = ssub.s32 %s22, %s29
    %p369 = scmp.eq.s32.totalorder %s368, 0
    %s371 = sadd.s32 %s370, 1
    %s372 = scalar_select %p369, %s370, %s371
    %p375 = pneg %p369
    %p376 = scmp.eq.s32.totalorder %s22, 1
    %p377 = por %p375, %p376
    %p378 = scmp.ne.s32.totalorder %s370, %s373
    %p379 = scmp.eq.s32.totalorder %s22, 0
    %p380 = por %p378, %p379
    %p381 = scmp.ne.s32.totalorder %s370, %s373
    %p382 = scmp.eq.s32.totalorder %s27, 1
    %p383 = por %p381, %p382
    %p384 = scmp.ne.s32.totalorder %s373, %s374
    %p385 = scmp.eq.s32.totalorder %s27, 0
    %p386 = por %p384, %p385
    %p387 = scmp.ne.s32.totalorder %s373, %s374
    %p388 = scmp.eq.s32.totalorder %s28, 1
    %p389 = por %p387, %p388
    %p391 = scmp.ne.s32.totalorder %s374, %s390
    %p392 = scmp.eq.s32.totalorder %s28, 0
    %p393 = por %p391, %p392
    %s394 = ssub.s32 %s22, %s29
    %p395 = scmp.eq.s32.totalorder %s394, 0
    %s397 = sadd.s32 %s396, 1
    %s398 = scalar_select %p395, %s396, %s397
    %p401 = pneg %p395
    %p402 = scmp.eq.s32.totalorder %s22, 1
    %p403 = por %p401, %p402
    %p404 = scmp.ne.s32.totalorder %s396, %s399
    %p405 = scmp.eq.s32.totalorder %s22, 0
    %p406 = por %p404, %p405
    %p407 = scmp.ne.s32.totalorder %s396, %s399
    %p408 = scmp.eq.s32.totalorder %s27, 1
    %p409 = por %p407, %p408
    %p410 = scmp.ne.s32.totalorder %s399, %s400
    %p411 = scmp.eq.s32.totalorder %s27, 0
    %p412 = por %p410, %p411
    %p413 = scmp.ne.s32.totalorder %s399, %s400
    %p414 = scmp.eq.s32.totalorder %s28, 1
    %p415 = por %p413, %p414
    %p417 = scmp.ne.s32.totalorder %s400, %s416
    %p418 = scmp.eq.s32.totalorder %s28, 0
    %p419 = por %p417, %p418
    %s420 = ssub.s32 %s22, %s29
    %p421 = scmp.eq.s32.totalorder %s420, 0
    %s423 = sadd.s32 %s422, 1
    %s424 = scalar_select %p421, %s422, %s423
    %p427 = pneg %p421
    %p428 = scmp.eq.s32.totalorder %s22, 1
    %p429 = por %p427, %p428
    %p430 = scmp.ne.s32.totalorder %s422, %s425
    %p431 = scmp.eq.s32.totalorder %s22, 0
    %p432 = por %p430, %p431
    %p433 = scmp.ne.s32.totalorder %s422, %s425
    %p434 = scmp.eq.s32.totalorder %s27, 1
    %p435 = por %p433, %p434
    %p436 = scmp.ne.s32.totalorder %s425, %s426
    %p437 = scmp.eq.s32.totalorder %s27, 0
    %p438 = por %p436, %p437
    %p439 = scmp.ne.s32.totalorder %s425, %s426
    %p440 = scmp.eq.s32.totalorder %s28, 1
    %p441 = por %p439, %p440
    %p443 = scmp.ne.s32.totalorder %s426, %s442
    %p444 = scmp.eq.s32.totalorder %s28, 0
    %p445 = por %p443, %p444
    %s446 = ssub.s32 %s22, %s29
    %p447 = scmp.eq.s32.totalorder %s446, 0
    %s449 = sadd.s32 %s448, 1
    %s450 = scalar_select %p447, %s448, %s449
    %p453 = pneg %p447
    %p454 = scmp.eq.s32.totalorder %s22, 1
    %p455 = por %p453, %p454
    %p456 = scmp.ne.s32.totalorder %s448, %s451
    %p457 = scmp.eq.s32.totalorder %s22, 0
    %p458 = por %p456, %p457
    %p459 = scmp.ne.s32.totalorder %s448, %s451
    %p460 = scmp.eq.s32.totalorder %s27, 1
    %p461 = por %p459, %p460
    %p462 = scmp.ne.s32.totalorder %s451, %s452
    %p463 = scmp.eq.s32.totalorder %s27, 0
    %p464 = por %p462, %p463
    %p465 = scmp.ne.s32.totalorder %s451, %s452
    %p466 = scmp.eq.s32.totalorder %s28, 1
    %p467 = por %p465, %p466
    %p469 = scmp.ne.s32.totalorder %s452, %s468
    %p470 = scmp.eq.s32.totalorder %s28, 0
    %p471 = por %p469, %p470
    %p472 = scmp.le.s32.totalorder 1, %s22
    %p473 = scmp.lt.s32.totalorder %s22, 3
    %p474 = pnand %p472, %p473
    %p475 = pneg %p474
    // Predicated region
    $region9: #{gat_gcn_forward.2} parent=5 // pred_check
      _
    $region10: #{gat_gcn_forward.2} parent=5 // pred_check_branch
      %477 = sbr.rel (%p474) target = $region12
    $region11: #{gat_gcn_forward.2} parent=5 // pred_region
      %s478 = ssub.s32 %s22, 1
    $region12: #{gat_gcn_forward.2} parent=5 // pred_fallthru
      _
    %p479 = scmp.lt.s32.totalorder %s22, 2
    // Predicated region
    $region13: #{gat_gcn_forward.2} parent=5 // pred_check
      %p480 = pneg %p479
    $region14: #{gat_gcn_forward.2} parent=5 // pred_check_branch
      %482 = sbr.rel (%p480) target = $region16
    $region15: #{gat_gcn_forward.2} parent=5 // pred_region
      // Predicated region
      $region17: #{gat_gcn_forward.2} parent=15 // pred_check
        %p483 = pneg %p42
      $region18: #{gat_gcn_forward.2} parent=15 // pred_check_branch
        %485 = sbr.rel (%p483) target = $region20
      $region19: #{gat_gcn_forward.2} parent=15 // pred_region
        %p486 = scmp.lt.s32.totalorder %s22, 1
        %s487 = scalar_select %p486, %s22, 1
        %s488 = smul.addr %s487, 2
        %s489 = smul.addr %s488, 8
        %s490 = scalar_lea.vmem %s0, %s489
      $region20: #{gat_gcn_forward.2} parent=15 // pred_fallthru
        _
      // Predicated region
      $region21: #{gat_gcn_forward.2} parent=15 // pred_check
        %p491 = pneg %p68
      $region22: #{gat_gcn_forward.2} parent=15 // pred_check_branch
        %493 = sbr.rel (%p491) target = $region24
      $region23: #{gat_gcn_forward.2} parent=15 // pred_region
        %p494 = scmp.lt.s32.totalorder %s22, 1
        %s495 = scalar_select %p494, %s22, 1
        %s496 = smul.addr %s495, 2
        %s497 = smul.addr %s496, 8
        %s498 = scalar_lea.vmem %s1, %s497
      $region24: #{gat_gcn_forward.2} parent=15 // pred_fallthru
        _
      // Predicated region
      $region25: #{gat_gcn_forward.2} parent=15 // pred_check
        %p499 = pneg %p94
      $region26: #{gat_gcn_forward.2} parent=15 // pred_check_branch
        %501 = sbr.rel (%p499) target = $region28
      $region27: #{gat_gcn_forward.2} parent=15 // pred_region
        %p502 = scmp.lt.s32.totalorder %s22, 1
        %s503 = scalar_select %p502, %s22, 1
        %s504 = smul.addr %s503, 2
        %s505 = smul.addr %s504, 8
        %s506 = scalar_lea.vmem %s2, %s505
      $region28: #{gat_gcn_forward.2} parent=15 // pred_fallthru
        _
      // Predicated region
      $region29: #{gat_gcn_forward.2} parent=15 // pred_check
        %p507 = pneg %p120
      $region30: #{gat_gcn_forward.2} parent=15 // pred_check_branch
        %509 = sbr.rel (%p507) target = $region32
      $region31: #{gat_gcn_forward.2} parent=15 // pred_region
        %p510 = scmp.lt.s32.totalorder %s22, 1
        %s511 = scalar_select %p510, %s22, 1
        %s512 = smul.addr %s511, 2
        %s513 = scalar_lea.vmem %s3, %s512
      $region32: #{gat_gcn_forward.2} parent=15 // pred_fallthru
        _
      // Predicated region
      $region33: #{gat_gcn_forward.2} parent=15 // pred_check
        %p514 = pneg %p146
      $region34: #{gat_gcn_forward.2} parent=15 // pred_check_branch
        %516 = sbr.rel (%p514) target = $region36
      $region35: #{gat_gcn_forward.2} parent=15 // pred_region
        %p517 = scmp.lt.s32.totalorder %s22, 1
        %s518 = scalar_select %p517, %s22, 1
        %s519 = smul.addr %s518, 2
        %s520 = smul.addr %s519, 8
        %s521 = scalar_lea.vmem %s4, %s520
      $region36: #{gat_gcn_forward.2} parent=15 // pred_fallthru
        _
      // Predicated region
      $region37: #{gat_gcn_forward.2} parent=15 // pred_check
        %p522 = pneg %p172
      $region38: #{gat_gcn_forward.2} parent=15 // pred_check_branch
        %524 = sbr.rel (%p522) target = $region40
      $region39: #{gat_gcn_forward.2} parent=15 // pred_region
        %p525 = scmp.lt.s32.totalorder %s22, 1
        %s526 = scalar_select %p525, %s22, 1
        %s527 = smul.addr %s526, 2
        %s528 = scalar_lea.vmem %s5, %s527
      $region40: #{gat_gcn_forward.2} parent=15 // pred_fallthru
        _
      // Predicated region
      $region41: #{gat_gcn_forward.2} parent=15 // pred_check
        %p529 = pneg %p198
      $region42: #{gat_gcn_forward.2} parent=15 // pred_check_branch
        %531 = sbr.rel (%p529) target = $region44
      $region43: #{gat_gcn_forward.2} parent=15 // pred_region
        %p532 = scmp.lt.s32.totalorder %s22, 1
        %s533 = scalar_select %p532, %s22, 1
        %s534 = smul.addr %s533, 4
        %s535 = smul.addr %s534, 8
        %s536 = scalar_lea.vmem %s6, %s535
      $region44: #{gat_gcn_forward.2} parent=15 // pred_fallthru
        _
      // Predicated region
      $region45: #{gat_gcn_forward.2} parent=15 // pred_check
        %p537 = pneg %p224
      $region46: #{gat_gcn_forward.2} parent=15 // pred_check_branch
        %539 = sbr.rel (%p537) target = $region48
      $region47: #{gat_gcn_forward.2} parent=15 // pred_region
        %p540 = scmp.lt.s32.totalorder %s22, 1
        %s541 = scalar_select %p540, %s22, 1
        %s542 = smul.addr %s541, 2
        %s543 = scalar_lea.vmem %s7, %s542
      $region48: #{gat_gcn_forward.2} parent=15 // pred_fallthru
        _
      // Predicated region
      $region49: #{gat_gcn_forward.2} parent=15 // pred_check
        %p544 = pneg %p250
      $region50: #{gat_gcn_forward.2} parent=15 // pred_check_branch
        %546 = sbr.rel (%p544) target = $region52
      $region51: #{gat_gcn_forward.2} parent=15 // pred_region
        %p547 = scmp.lt.s32.totalorder %s22, 1
        %s548 = scalar_select %p547, %s22, 1
        %s549 = smul.addr %s548, 2
        %s550 = scalar_lea.vmem %s8, %s549
      $region52: #{gat_gcn_forward.2} parent=15 // pred_fallthru
        _
      // Predicated region
      $region53: #{gat_gcn_forward.2} parent=15 // pred_check
        %p551 = pneg %p276
      $region54: #{gat_gcn_forward.2} parent=15 // pred_check_branch
        %553 = sbr.rel (%p551) target = $region56
      $region55: #{gat_gcn_forward.2} parent=15 // pred_region
        %p554 = scmp.lt.s32.totalorder %s22, 1
        %s555 = scalar_select %p554, %s22, 1
        %s556 = smul.addr %s555, 2
        %s557 = scalar_lea.vmem %s9, %s556
      $region56: #{gat_gcn_forward.2} parent=15 // pred_fallthru
        _
      // Predicated region
      $region57: #{gat_gcn_forward.2} parent=15 // pred_check
        %p558 = pneg %p302
      $region58: #{gat_gcn_forward.2} parent=15 // pred_check_branch
        %560 = sbr.rel (%p558) target = $region60
      $region59: #{gat_gcn_forward.2} parent=15 // pred_region
        %p561 = scmp.lt.s32.totalorder %s22, 1
        %s562 = scalar_select %p561, %s22, 1
        %s563 = smul.addr %s562, 40
        %s564 = smul.addr %s563, 8
        %s565 = scalar_lea.vmem %s10, %s564
      $region60: #{gat_gcn_forward.2} parent=15 // pred_fallthru
        _
      // Predicated region
      $region61: #{gat_gcn_forward.2} parent=15 // pred_check
        %p566 = pneg %p328
      $region62: #{gat_gcn_forward.2} parent=15 // pred_check_branch
        %568 = sbr.rel (%p566) target = $region64
      $region63: #{gat_gcn_forward.2} parent=15 // pred_region
        %p569 = scmp.lt.s32.totalorder %s22, 1
        %s570 = scalar_select %p569, %s22, 1
        %s571 = smul.addr %s570, 2
        %s572 = scalar_lea.vmem %s11, %s571
      $region64: #{gat_gcn_forward.2} parent=15 // pred_fallthru
        _
      // Predicated region
      $region65: #{gat_gcn_forward.2} parent=15 // pred_check
        %p573 = pneg %p354
      $region66: #{gat_gcn_forward.2} parent=15 // pred_check_branch
        %575 = sbr.rel (%p573) target = $region68
      $region67: #{gat_gcn_forward.2} parent=15 // pred_region
        %p576 = scmp.lt.s32.totalorder %s22, 1
        %s577 = scalar_select %p576, %s22, 1
        %s578 = smul.addr %s577, 320
        %s579 = smul.addr %s578, 8
        %s580 = scalar_lea.vmem %s12, %s579
      $region68: #{gat_gcn_forward.2} parent=15 // pred_fallthru
        _
      // Predicated region
      $region69: #{gat_gcn_forward.2} parent=15 // pred_check
        %p581 = pneg %p380
      $region70: #{gat_gcn_forward.2} parent=15 // pred_check_branch
        %583 = sbr.rel (%p581) target = $region72
      $region71: #{gat_gcn_forward.2} parent=15 // pred_region
        %p584 = scmp.lt.s32.totalorder %s22, 1
        %s585 = scalar_select %p584, %s22, 1
        %s586 = smul.addr %s585, 8
        %s587 = scalar_lea.vmem %s13, %s586
      $region72: #{gat_gcn_forward.2} parent=15 // pred_fallthru
        _
      // Predicated region
      $region73: #{gat_gcn_forward.2} parent=15 // pred_check
        %p588 = pneg %p406
      $region74: #{gat_gcn_forward.2} parent=15 // pred_check_branch
        %590 = sbr.rel (%p588) target = $region76
      $region75: #{gat_gcn_forward.2} parent=15 // pred_region
        %p591 = scmp.lt.s32.totalorder %s22, 1
        %s592 = scalar_select %p591, %s22, 1
        %s593 = smul.addr %s592, 125
        %s594 = smul.addr %s593, 8
        %s595 = scalar_lea.vmem %s14, %s594
      $region76: #{gat_gcn_forward.2} parent=15 // pred_fallthru
        _
      // Predicated region
      $region77: #{gat_gcn_forward.2} parent=15 // pred_check
        %p596 = pneg %p432
      $region78: #{gat_gcn_forward.2} parent=15 // pred_check_branch
        %598 = sbr.rel (%p596) target = $region80
      $region79: #{gat_gcn_forward.2} parent=15 // pred_region
        %p599 = scmp.lt.s32.totalorder %s22, 1
        %s600 = scalar_select %p599, %s22, 1
        %s601 = scalar_lea.vmem %s15, %s600
      $region80: #{gat_gcn_forward.2} parent=15 // pred_fallthru
        _
    $region16: #{gat_gcn_forward.2} parent=5 // pred_fallthru
      _
    %p602 = scmp.le.s32.totalorder 1, %s22
    %p603 = scmp.lt.s32.totalorder %s22, 3
    %p604 = pnand %p602, %p603
    %p605 = pneg %p604
    // Predicated region
    $region81: #{gat_gcn_forward.2} parent=5 // pred_check
      _
    $region82: #{gat_gcn_forward.2} parent=5 // pred_check_branch
      %607 = sbr.rel (%p604) target = $region84
    $region83: #{gat_gcn_forward.2} parent=5 // pred_region
      %s608 = ssub.s32 %s22, 1
      %p609 = scmp.lt.s32.totalorder %s27, 1
      %s610 = scalar_select %p609, %s27, 1
      %s611 = smul.addr %s610, 2
      %s612 = smul.addr %s611, 8
      %s613 = scalar_lea.vmem %s0, %s612
      %p614 = pneg %p48
      %p615 = pneg %p45
      %p616 = scmp.lt.s32.totalorder %s27, 1
      %s617 = scalar_select %p616, %s27, 1
      %s618 = smul.addr %s617, 2
      %s619 = smul.addr %s618, 8
      %s620 = scalar_lea.vmem %s1, %s619
      %p621 = pneg %p74
      %p622 = pneg %p71
      %p623 = scmp.lt.s32.totalorder %s27, 1
      %s624 = scalar_select %p623, %s27, 1
      %s625 = smul.addr %s624, 2
      %s626 = smul.addr %s625, 8
      %s627 = scalar_lea.vmem %s2, %s626
      %p628 = pneg %p100
      %p629 = pneg %p97
      %p630 = scmp.lt.s32.totalorder %s27, 1
      %s631 = scalar_select %p630, %s27, 1
      %s632 = smul.addr %s631, 2
      %s633 = scalar_lea.vmem %s3, %s632
      %p634 = pneg %p126
      %p635 = pneg %p123
      %p636 = scmp.lt.s32.totalorder %s27, 1
      %s637 = scalar_select %p636, %s27, 1
      %s638 = smul.addr %s637, 2
      %s639 = smul.addr %s638, 8
      %s640 = scalar_lea.vmem %s4, %s639
      %p641 = pneg %p152
      %p642 = pneg %p149
      %p643 = scmp.lt.s32.totalorder %s27, 1
      %s644 = scalar_select %p643, %s27, 1
      %s645 = smul.addr %s644, 2
      %s646 = scalar_lea.vmem %s5, %s645
      %p647 = pneg %p178
      %p648 = pneg %p175
      %p649 = scmp.lt.s32.totalorder %s27, 1
      %s650 = scalar_select %p649, %s27, 1
      %s651 = smul.addr %s650, 4
      %s652 = smul.addr %s651, 8
      %s653 = scalar_lea.vmem %s6, %s652
      %p654 = pneg %p204
      %p655 = pneg %p201
      %p656 = scmp.lt.s32.totalorder %s27, 1
      %s657 = scalar_select %p656, %s27, 1
      %s658 = smul.addr %s657, 2
      %s659 = scalar_lea.vmem %s7, %s658
      %p660 = pneg %p230
      %p661 = pneg %p227
      %p662 = scmp.lt.s32.totalorder %s27, 1
      %s663 = scalar_select %p662, %s27, 1
      %s664 = smul.addr %s663, 2
      %s665 = scalar_lea.vmem %s8, %s664
      %p666 = pneg %p256
      %p667 = pneg %p253
      %p668 = scmp.lt.s32.totalorder %s27, 1
      %s669 = scalar_select %p668, %s27, 1
      %s670 = smul.addr %s669, 2
      %s671 = scalar_lea.vmem %s9, %s670
      %p672 = pneg %p282
      %p673 = pneg %p279
      %p674 = scmp.lt.s32.totalorder %s27, 1
      %s675 = scalar_select %p674, %s27, 1
      %s676 = smul.addr %s675, 40
      %s677 = smul.addr %s676, 8
      %s678 = scalar_lea.vmem %s10, %s677
      %p679 = pneg %p308
      %p680 = pneg %p305
      %p681 = scmp.lt.s32.totalorder %s27, 1
      %s682 = scalar_select %p681, %s27, 1
      %s683 = smul.addr %s682, 2
      %s684 = scalar_lea.vmem %s11, %s683
      %p685 = pneg %p334
      %p686 = pneg %p331
      %p687 = scmp.lt.s32.totalorder %s27, 1
      %s688 = scalar_select %p687, %s27, 1
      %s689 = smul.addr %s688, 320
      %s690 = smul.addr %s689, 8
      %s691 = scalar_lea.vmem %s12, %s690
      %p692 = pneg %p360
      %p693 = pneg %p357
      %p694 = scmp.lt.s32.totalorder %s27, 1
      %s695 = scalar_select %p694, %s27, 1
      %s696 = smul.addr %s695, 8
      %s697 = scalar_lea.vmem %s13, %s696
      %p698 = pneg %p386
      %p699 = pneg %p383
      %p700 = scmp.lt.s32.totalorder %s27, 1
      %s701 = scalar_select %p700, %s27, 1
      %s702 = smul.addr %s701, 125
      %s703 = smul.addr %s702, 8
      %s704 = scalar_lea.vmem %s14, %s703
      %p705 = pneg %p412
      %p706 = pneg %p409
      %p707 = scmp.lt.s32.totalorder %s27, 1
      %s708 = scalar_select %p707, %s27, 1
      %s709 = scalar_lea.vmem %s15, %s708
      %p710 = pneg %p438
      %p711 = pneg %p435
      %p712 = pneg %p464
      %p713 = pneg %p461
      %p714 = scmp.lt.s32.totalorder %s27, 1
      %s715 = scalar_select %p714, %s27, 1
      %s716 = smul.addr %s715, 2
      %s717 = scalar_lea.vmem %s16, %s716
      %p718 = scmp.lt.s32.totalorder %s27, 1
      %s719 = scalar_select %p718, %s27, 1
      %s720 = smul.addr %s719, 2
      %s721 = smul.addr %s720, 8
      %s722 = scalar_lea.vmem %s0, %s721
      %p723 = scmp.lt.s32.totalorder %s27, 1
      %s724 = scalar_select %p723, %s27, 1
      %s725 = smul.addr %s724, 2
      %s726 = smul.addr %s725, 8
      %s727 = scalar_lea.vmem %s1, %s726
      %p728 = scmp.lt.s32.totalorder %s27, 1
      %s729 = scalar_select %p728, %s27, 1
      %s730 = smul.addr %s729, 2
      %s731 = smul.addr %s730, 8
      %s732 = scalar_lea.vmem %s2, %s731
      %p733 = scmp.lt.s32.totalorder %s27, 1
      %s734 = scalar_select %p733, %s27, 1
      %s735 = smul.addr %s734, 2
      %s736 = scalar_lea.vmem %s3, %s735
      %p737 = scmp.lt.s32.totalorder %s27, 1
      %s738 = scalar_select %p737, %s27, 1
      %s739 = smul.addr %s738, 2
      %s740 = smul.addr %s739, 8
      %s741 = scalar_lea.vmem %s4, %s740
      %p742 = scmp.lt.s32.totalorder %s27, 1
      %s743 = scalar_select %p742, %s27, 1
      %s744 = smul.addr %s743, 2
      %s745 = scalar_lea.vmem %s5, %s744
      %p746 = scmp.lt.s32.totalorder %s27, 1
      %s747 = scalar_select %p746, %s27, 1
      %s748 = smul.addr %s747, 4
      %s749 = smul.addr %s748, 8
      %s750 = scalar_lea.vmem %s6, %s749
      %p751 = scmp.lt.s32.totalorder %s27, 1
      %s752 = scalar_select %p751, %s27, 1
      %s753 = smul.addr %s752, 2
      %s754 = scalar_lea.vmem %s7, %s753
      %p755 = scmp.lt.s32.totalorder %s27, 1
      %s756 = scalar_select %p755, %s27, 1
      %s757 = smul.addr %s756, 2
      %s758 = scalar_lea.vmem %s8, %s757
      %p759 = scmp.lt.s32.totalorder %s27, 1
      %s760 = scalar_select %p759, %s27, 1
      %s761 = smul.addr %s760, 2
      %s762 = scalar_lea.vmem %s9, %s761
      %p763 = scmp.lt.s32.totalorder %s27, 1
      %s764 = scalar_select %p763, %s27, 1
      %s765 = smul.addr %s764, 40
      %s766 = smul.addr %s765, 8
      %s767 = scalar_lea.vmem %s10, %s766
      %p768 = scmp.lt.s32.totalorder %s27, 1
      %s769 = scalar_select %p768, %s27, 1
      %s770 = smul.addr %s769, 2
      %s771 = scalar_lea.vmem %s11, %s770
      %p772 = scmp.lt.s32.totalorder %s27, 1
      %s773 = scalar_select %p772, %s27, 1
      %s774 = smul.addr %s773, 320
      %s775 = smul.addr %s774, 8
      %s776 = scalar_lea.vmem %s12, %s775
      %p777 = scmp.lt.s32.totalorder %s27, 1
      %s778 = scalar_select %p777, %s27, 1
      %s779 = smul.addr %s778, 8
      %s780 = scalar_lea.vmem %s13, %s779
      %p781 = scmp.lt.s32.totalorder %s27, 1
      %s782 = scalar_select %p781, %s27, 1
      %s783 = smul.addr %s782, 125
      %s784 = smul.addr %s783, 8
      %s785 = scalar_lea.vmem %s14, %s784
      %p786 = scmp.lt.s32.totalorder %s27, 1
      %s787 = scalar_select %p786, %s27, 1
      %s788 = scalar_lea.vmem %s15, %s787
      %p789 = scmp.lt.s32.totalorder %s27, 1
      %s790 = scalar_select %p789, %s27, 1
      %s791 = smul.addr %s790, 2
      %s792 = scalar_lea.vmem %s16, %s791
      %v793 = vld [vmem:[%s722] sm:$0xff]
      %v794 = vld [vmem:[%s722 + $0x8] sm:$0xff]
      %v795 = vld [vmem:[%s727] sm:$0xff]
      %v796 = vld [vmem:[%s727 + $0x8] sm:$0xff]
      %v797 = vld [vmem:[%s750] sm:$0xff]
      %v798 = vld [vmem:[%s750 + $0x8] sm:$0xff]
      %v799 = vld [vmem:[%s750 + $0x10] sm:$0xff]
      %v800 = vld [vmem:[%s750 + $0x18] sm:$0xff]
      %vm801 = vcmask 130048
      %v803 = vsel %vm801, %v793, 0
      %v806 = vsel %vm801, %v794, 0
      %808 = vmatpush.msra.mxu0 0.0
      %809 = vmatpush.msra.mxu0 0.0
      %810 = vmatpush.msra.mxu0 0.0
      %811 = vmatpush.msra.mxu0 0.0
      %812 = vmatpush.msra.mxu0 0.0
      %813 = vmatpush.msra.mxu0 0.0
      %814 = vmatpush.msra.mxu0 0.0
      %815 = vmatpush.msra.mxu0 0.0
      %816 = vmatpush.msra.mxu0 0.0
      %817 = vmatpush.msra.mxu0 0.0
      %818 = vmatpush.msra.mxu0 0.0
      %819 = vmatpush.msra.mxu0 0.0
      %820 = vmatpush.msra.mxu0 0.0
      %821 = vmatpush.msra.mxu0 0.0
      %822 = vmatpush.msra.mxu0 %v799
      %823 = vmatpush.msra.mxu0 %v797
      %824 = vmatmul.f32.gmra.mxu0 %v803
      %v825 = vpop.f32.mrf.mxu0
      %v826 = vadd.f32 0.0, %v825
      %827 = vmatmul.f32.gmra.mxu0 %v806
      %v828 = vpop.f32.mrf.mxu0
      %v829 = vadd.f32 0.0, %v828
      %830 = vdwg.mxu0
      %831 = vmatpush.msra.mxu0 0.0
      %832 = vmatpush.msra.mxu0 0.0
      %833 = vmatpush.msra.mxu0 0.0
      %834 = vmatpush.msra.mxu0 0.0
      %835 = vmatpush.msra.mxu0 0.0
      %836 = vmatpush.msra.mxu0 0.0
      %837 = vmatpush.msra.mxu0 0.0
      %838 = vmatpush.msra.mxu0 0.0
      %839 = vmatpush.msra.mxu0 0.0
      %840 = vmatpush.msra.mxu0 0.0
      %841 = vmatpush.msra.mxu0 0.0
      %842 = vmatpush.msra.mxu0 0.0
      %843 = vmatpush.msra.mxu0 0.0
      %844 = vmatpush.msra.mxu0 0.0
      %845 = vmatpush.msra.mxu0 %v800
      %846 = vmatpush.msra.mxu0 %v798
      %847 = vmatmul.f32.gmra.mxu0 %v803
      %v848 = vpop.f32.mrf.mxu0
      %v849 = vadd.f32 0.0, %v848
      %850 = vmatmul.f32.gmra.mxu0 %v806
      %v851 = vpop.f32.mrf.mxu0
      %v852 = vadd.f32 0.0, %v851
      %853 = vdwg.mxu0
      %854 = vst [vmem:[#allocation2] sm:$0xff] %v826
      %vm855 = vcmask 261120
      %856 = vst.msk [vmem:[#allocation2 + $0x8] sm:$0xff] %vm855, %v849
      %857 = vst [vmem:[#allocation2 + $0x10] sm:$0xff] %v829
      %858 = vst.msk [vmem:[#allocation2 + $0x18] sm:$0xff] %vm855, %v852
      %v859 = vld [vmem:[#allocation2] sm:$0xff]
      %v860 = vld [vmem:[#allocation2 + $0x10] sm:$0xff]
      %v861 = vld [vmem:[%s754] sm:$0x1]
      %v862 = vld [vmem:[%s758] sm:$0x1]
      %v864 = vsel %vm801, %v861, 0
      %v867 = vsel %vm801, %v859, 0
      %v870 = vsel %vm801, %v860, 0
      %872 = vmatpush.xpose.msra.mxu0 0.0
      %873 = vmatpush.xpose.msra.mxu0 0.0
      %874 = vmatpush.xpose.msra.mxu0 0.0
      %875 = vmatpush.xpose.msra.mxu0 0.0
      %876 = vmatpush.xpose.msra.mxu0 0.0
      %877 = vmatpush.xpose.msra.mxu0 0.0
      %878 = vmatpush.xpose.msra.mxu0 0.0
      %879 = vmatpush.xpose.msra.mxu0 0.0
      %880 = vmatpush.xpose.msra.mxu0 0.0
      %881 = vmatpush.xpose.msra.mxu0 0.0
      %882 = vmatpush.xpose.msra.mxu0 0.0
      %883 = vmatpush.xpose.msra.mxu0 0.0
      %884 = vmatpush.xpose.msra.mxu0 0.0
      %885 = vmatpush.xpose.msra.mxu0 0.0
      %886 = vmatpush.xpose.msra.mxu0 %v870
      %887 = vmatpush.xpose.msra.mxu0 %v867
      %888 = vmatmul.f32.gmra.mxu0 %v864
      %v889 = vpop.f32.mrf.mxu0
      %v890 = vadd.f32 0.0, %v889
      %891 = vdwg.mxu0
      %v893 = vperm.slane %v862, 0
      %v895 = vmul.f32 %v859, %v893
      %v896 = vmul.f32 %v860, %v893
      %v897 = vsel %vm801, %v895, 0.0
      %898 = vadd.xlane.f32.xlu0 %v897
      %v899 = vpop.xlane.xlu0 %898
      %v900 = vsel %vm801, %v896, 0.0
      %901 = vadd.xlane.f32.xlu0 %v900
      %v902 = vpop.xlane.xlu0 %901
      %v903 = vperm.slane %v890, 0
      %v904 = vadd.f32 %v899, %v903
      %v905 = vadd.f32 %v902, %v903
      %vm906 = vcmp.gt.f32.partialorder %v904, 0.0
      %vm907 = vcmp.gt.f32.partialorder %v905, 0.0
      %v908 = vmul.f32 %v904, 0.2
      %v909 = vmul.f32 %v905, 0.2
      %v910 = vsel %vm906, %v904, %v908
      %v911 = vsel %vm907, %v905, %v909
      %vm912 = vcmp.gt.f32.partialorder %v795, 0.0
      %vm913 = vcmp.gt.f32.partialorder %v796, 0.0
      %v914 = vsel %vm912, %v910, -1e+30
      %v915 = vsel %vm913, %v911, -1e+30
      %v916 = vsel %vm801, %v914, -inf
      %917 = vmax.xlane.f32.xlu0 %v916
      %v918 = vpop.xlane.xlu0 %917
      %v919 = vsel %vm801, %v915, -inf
      %920 = vmax.xlane.f32.xlu0 %v919
      %v921 = vpop.xlane.xlu0 %920
      %v922 = vsub.f32 %v914, %v918
      %v923 = vsub.f32 %v915, %v921
      %v924 = vmul.f32 %v922, 1.442695
      %v925 = vpow.pop %v924
      %v926 = vmul.f32 %v923, 1.442695
      %v927 = vpow.pop %v926
      %v928 = vmul.f32 %v925, %v795
      %v929 = vmul.f32 %v927, %v796
      %v930 = vsel %vm801, %v928, 0.0
      %931 = vadd.xlane.f32.xlu0 %v930
      %v932 = vpop.xlane.xlu0 %931
      %v933 = vsel %vm801, %v929, 0.0
      %934 = vadd.xlane.f32.xlu0 %v933
      %v935 = vpop.xlane.xlu0 %934
      %v936 = vmax.f32 %v932, 1e-20
      %v937 = vmax.f32 %v935, 1e-20
      %v938 = vrcp.pop %v936
      %v939 = vrcp.pop %v937
      %v940 = vmul.f32 %v928, %v938
      %v941 = vmul.f32 %v929, %v939
      %v943 = vsel %vm801, %v940, 0
      %v946 = vsel %vm801, %v941, 0
      %948 = vmatpush.msra.mxu0 0.0
      %949 = vmatpush.msra.mxu0 0.0
      %950 = vmatpush.msra.mxu0 0.0
      %951 = vmatpush.msra.mxu0 0.0
      %952 = vmatpush.msra.mxu0 0.0
      %953 = vmatpush.msra.mxu0 0.0
      %954 = vmatpush.msra.mxu0 0.0
      %955 = vmatpush.msra.mxu0 0.0
      %956 = vmatpush.msra.mxu0 0.0
      %957 = vmatpush.msra.mxu0 0.0
      %958 = vmatpush.msra.mxu0 0.0
      %959 = vmatpush.msra.mxu0 0.0
      %960 = vmatpush.msra.mxu0 0.0
      %961 = vmatpush.msra.mxu0 0.0
      %962 = vmatpush.msra.mxu0 %v860
      %963 = vmatpush.msra.mxu0 %v859
      %964 = vmatmul.f32.gmra.mxu0 %v943
      %v965 = vpop.f32.mrf.mxu0
      %v966 = vadd.f32 0.0, %v965
      %967 = vmatmul.f32.gmra.mxu0 %v946
      %v968 = vpop.f32.mrf.mxu0
      %v969 = vadd.f32 0.0, %v968
      %970 = vdwg.mxu0
      %971 = vst.msk [vmem:[#allocation3] sm:$0xff] %vm801, %v966
      %972 = vst.msk [vmem:[#allocation3 + $0x10] sm:$0xff] %vm801, %v969
      %v973 = vld [vmem:[#allocation2] sm:$0xff]
      %v974 = vld [vmem:[#allocation2 + $0x10] sm:$0xff]
      %v975 = vld [vmem:[%s754] sm:$0x1]
      %v976 = vld [vmem:[%s758] sm:$0x1]
      %v978 = vperm.slane %v975, 0
      %979 = vrot.lane.b32.xlu0 %v978, 112
      %v980 = vpop.permute.xlu0 %979
      %983 = vrot.lane.b32.xlu0 %v973, 112
      %v984 = vpop.permute.xlu0 %983
      %985 = vrot.lane.b32.xlu0 %v974, 112
      %v986 = vpop.permute.xlu0 %985
      %v987 = vsel %vm801, %v980, 0
      %v989 = vsel %vm801, %v984, 0
      %v991 = vsel %vm801, %v986, 0
      %993 = vmatpush.xpose.msra.mxu0 0.0
      %994 = vmatpush.xpose.msra.mxu0 0.0
      %995 = vmatpush.xpose.msra.mxu0 0.0
      %996 = vmatpush.xpose.msra.mxu0 0.0
      %997 = vmatpush.xpose.msra.mxu0 0.0
      %998 = vmatpush.xpose.msra.mxu0 0.0
      %999 = vmatpush.xpose.msra.mxu0 0.0
      %1000 = vmatpush.xpose.msra.mxu0 0.0
      %1001 = vmatpush.xpose.msra.mxu0 0.0
      %1002 = vmatpush.xpose.msra.mxu0 0.0
      %1003 = vmatpush.xpose.msra.mxu0 0.0
      %1004 = vmatpush.xpose.msra.mxu0 0.0
      %1005 = vmatpush.xpose.msra.mxu0 0.0
      %1006 = vmatpush.xpose.msra.mxu0 0.0
      %1007 = vmatpush.xpose.msra.mxu0 %v991
      %1008 = vmatpush.xpose.msra.mxu0 %v989
      %1009 = vmatmul.f32.gmra.mxu0 %v987
      %v1010 = vpop.f32.mrf.mxu0
      %v1011 = vadd.f32 0.0, %v1010
      %1012 = vdwg.mxu0
      %v1014 = vperm.slane %v976, 0
      %v1016 = vmul.f32 %v973, %v1014
      %v1017 = vmul.f32 %v974, %v1014
      %1020 = vrot.lane.b32.xlu0 %v1016, 112
      %v1021 = vpop.permute.xlu0 %1020
      %1022 = vrot.lane.b32.xlu0 %v1017, 112
      %v1023 = vpop.permute.xlu0 %1022
      %v1026 = vsel %vm801, %v1021, 0.0
      %1027 = vadd.xlane.f32.xlu0 %v1026
      %v1028 = vpop.xlane.xlu0 %1027
      %v1029 = vsel %vm801, %v1023, 0.0
      %1030 = vadd.xlane.f32.xlu0 %v1029
      %v1031 = vpop.xlane.xlu0 %1030
      %v1032 = vperm.slane %v1011, 0
      %v1033 = vadd.f32 %v1028, %v1032
      %v1034 = vadd.f32 %v1031, %v1032
      %vm1035 = vcmp.gt.f32.partialorder %v1033, 0.0
      %vm1036 = vcmp.gt.f32.partialorder %v1034, 0.0
      %v1037 = vmul.f32 %v1033, 0.2
      %v1038 = vmul.f32 %v1034, 0.2
      %v1039 = vsel %vm1035, %v1033, %v1037
      %v1040 = vsel %vm1036, %v1034, %v1038
      %v1041 = vsel %vm912, %v1039, -1e+30
      %v1042 = vsel %vm913, %v1040, -1e+30
      %v1043 = vsel %vm801, %v1041, -inf
      %1044 = vmax.xlane.f32.xlu0 %v1043
      %v1045 = vpop.xlane.xlu0 %1044
      %v1046 = vsel %vm801, %v1042, -inf
      %1047 = vmax.xlane.f32.xlu0 %v1046
      %v1048 = vpop.xlane.xlu0 %1047
      %v1049 = vsub.f32 %v1041, %v1045
      %v1050 = vsub.f32 %v1042, %v1048
      %v1051 = vmul.f32 %v1049, 1.442695
      %v1052 = vpow.pop %v1051
      %v1053 = vmul.f32 %v1050, 1.442695
      %v1054 = vpow.pop %v1053
      %v1055 = vmul.f32 %v1052, %v795
      %v1056 = vmul.f32 %v1054, %v796
      %v1057 = vsel %vm801, %v1055, 0.0
      %1058 = vadd.xlane.f32.xlu0 %v1057
      %v1059 = vpop.xlane.xlu0 %1058
      %v1060 = vsel %vm801, %v1056, 0.0
      %1061 = vadd.xlane.f32.xlu0 %v1060
      %v1062 = vpop.xlane.xlu0 %1061
      %v1063 = vmax.f32 %v1059, 1e-20
      %v1064 = vmax.f32 %v1062, 1e-20
      %v1065 = vrcp.pop %v1063
      %v1066 = vrcp.pop %v1064
      %v1067 = vmul.f32 %v1055, %v1065
      %v1068 = vmul.f32 %v1056, %v1066
      %v1072 = vsel %vm801, %v1067, 0
      %v1075 = vsel %vm801, %v1068, 0
      %1077 = vmatpush.msra.mxu0 0.0
      %1078 = vmatpush.msra.mxu0 0.0
      %1079 = vmatpush.msra.mxu0 0.0
      %1080 = vmatpush.msra.mxu0 0.0
      %1081 = vmatpush.msra.mxu0 0.0
      %1082 = vmatpush.msra.mxu0 0.0
      %1083 = vmatpush.msra.mxu0 0.0
      %1084 = vmatpush.msra.mxu0 0.0
      %1085 = vmatpush.msra.mxu0 0.0
      %1086 = vmatpush.msra.mxu0 0.0
      %1087 = vmatpush.msra.mxu0 0.0
      %1088 = vmatpush.msra.mxu0 0.0
      %1089 = vmatpush.msra.mxu0 0.0
      %1090 = vmatpush.msra.mxu0 0.0
      %1091 = vmatpush.msra.mxu0 %v986
      %1092 = vmatpush.msra.mxu0 %v984
      %1093 = vmatmul.f32.gmra.mxu0 %v1072
      %v1094 = vpop.f32.mrf.mxu0
      %v1095 = vadd.f32 0.0, %v1094
      %1096 = vmatmul.f32.gmra.mxu0 %v1075
      %v1097 = vpop.f32.mrf.mxu0
      %v1098 = vadd.f32 0.0, %v1097
      %1099 = vdwg.mxu0
      %1102 = vrot.lane.b32.xlu0 %v1095, 16
      %v1103 = vpop.permute.xlu0 %1102
      %1104 = vrot.lane.b32.xlu0 %v1098, 16
      %v1105 = vpop.permute.xlu0 %1104
      %vm1108 = vcmask 261248
      %1109 = vst.msk [vmem:[#allocation3] sm:$0xff] %vm1108, %v1103
      %1110 = vst.msk [vmem:[#allocation3 + $0x10] sm:$0xff] %vm1108, %v1105
      %v1111 = vld [vmem:[#allocation2] sm:$0xff]
      %v1112 = vld [vmem:[#allocation2 + $0x10] sm:$0xff]
      %v1113 = vld [vmem:[%s754] sm:$0x1]
      %v1114 = vld [vmem:[%s758] sm:$0x1]
      %v1116 = vperm.slane %v1113, 0
      %1117 = vrot.lane.b32.xlu0 %v1116, 96
      %v1118 = vpop.permute.xlu0 %1117
      %1121 = vrot.lane.b32.xlu0 %v1111, 96
      %v1122 = vpop.permute.xlu0 %1121
      %1123 = vrot.lane.b32.xlu0 %v1112, 96
      %v1124 = vpop.permute.xlu0 %1123
      %v1125 = vsel %vm801, %v1118, 0
      %v1127 = vsel %vm801, %v1122, 0
      %v1129 = vsel %vm801, %v1124, 0
      %1131 = vmatpush.xpose.msra.mxu0 0.0
      %1132 = vmatpush.xpose.msra.mxu0 0.0
      %1133 = vmatpush.xpose.msra.mxu0 0.0
      %1134 = vmatpush.xpose.msra.mxu0 0.0
      %1135 = vmatpush.xpose.msra.mxu0 0.0
      %1136 = vmatpush.xpose.msra.mxu0 0.0
      %1137 = vmatpush.xpose.msra.mxu0 0.0
      %1138 = vmatpush.xpose.msra.mxu0 0.0
      %1139 = vmatpush.xpose.msra.mxu0 0.0
      %1140 = vmatpush.xpose.msra.mxu0 0.0
      %1141 = vmatpush.xpose.msra.mxu0 0.0
      %1142 = vmatpush.xpose.msra.mxu0 0.0
      %1143 = vmatpush.xpose.msra.mxu0 0.0
      %1144 = vmatpush.xpose.msra.mxu0 0.0
      %1145 = vmatpush.xpose.msra.mxu0 %v1129
      %1146 = vmatpush.xpose.msra.mxu0 %v1127
      %1147 = vmatmul.f32.gmra.mxu0 %v1125
      %v1148 = vpop.f32.mrf.mxu0
      %v1149 = vadd.f32 0.0, %v1148
      %1150 = vdwg.mxu0
      %v1152 = vperm.slane %v1114, 0
      %v1154 = vmul.f32 %v1111, %v1152
      %v1155 = vmul.f32 %v1112, %v1152
      %1158 = vrot.lane.b32.xlu0 %v1154, 96
      %v1159 = vpop.permute.xlu0 %1158
      %1160 = vrot.lane.b32.xlu0 %v1155, 96
      %v1161 = vpop.permute.xlu0 %1160
      %v1164 = vsel %vm801, %v1159, 0.0
      %1165 = vadd.xlane.f32.xlu0 %v1164
      %v1166 = vpop.xlane.xlu0 %1165
      %v1167 = vsel %vm801, %v1161, 0.0
      %1168 = vadd.xlane.f32.xlu0 %v1167
      %v1169 = vpop.xlane.xlu0 %1168
      %v1170 = vperm.slane %v1149, 0
      %v1171 = vadd.f32 %v1166, %v1170
      %v1172 = vadd.f32 %v1169, %v1170
      %vm1173 = vcmp.gt.f32.partialorder %v1171, 0.0
      %vm1174 = vcmp.gt.f32.partialorder %v1172, 0.0
      %v1175 = vmul.f32 %v1171, 0.2
      %v1176 = vmul.f32 %v1172, 0.2
      %v1177 = vsel %vm1173, %v1171, %v1175
      %v1178 = vsel %vm1174, %v1172, %v1176
      %v1179 = vsel %vm912, %v1177, -1e+30
      %v1180 = vsel %vm913, %v1178, -1e+30
      %v1181 = vsel %vm801, %v1179, -inf
      %1182 = vmax.xlane.f32.xlu0 %v1181
      %v1183 = vpop.xlane.xlu0 %1182
      %v1184 = vsel %vm801, %v1180, -inf
      %1185 = vmax.xlane.f32.xlu0 %v1184
      %v1186 = vpop.xlane.xlu0 %1185
      %v1187 = vsub.f32 %v1179, %v1183
      %v1188 = vsub.f32 %v1180, %v1186
      %v1189 = vmul.f32 %v1187, 1.442695
      %v1190 = vpow.pop %v1189
      %v1191 = vmul.f32 %v1188, 1.442695
      %v1192 = vpow.pop %v1191
      %v1193 = vmul.f32 %v1190, %v795
      %v1194 = vmul.f32 %v1192, %v796
      %v1195 = vsel %vm801, %v1193, 0.0
      %1196 = vadd.xlane.f32.xlu0 %v1195
      %v1197 = vpop.xlane.xlu0 %1196
      %v1198 = vsel %vm801, %v1194, 0.0
      %1199 = vadd.xlane.f32.xlu0 %v1198
      %v1200 = vpop.xlane.xlu0 %1199
      %v1201 = vmax.f32 %v1197, 1e-20
      %v1202 = vmax.f32 %v1200, 1e-20
      %v1203 = vrcp.pop %v1201
      %v1204 = vrcp.pop %v1202
      %v1205 = vmul.f32 %v1193, %v1203
      %v1206 = vmul.f32 %v1194, %v1204
      %v1210 = vsel %vm801, %v1205, 0
      %v1213 = vsel %vm801, %v1206, 0
      %1215 = vmatpush.msra.mxu0 0.0
      %1216 = vmatpush.msra.mxu0 0.0
      %1217 = vmatpush.msra.mxu0 0.0
      %1218 = vmatpush.msra.mxu0 0.0
      %1219 = vmatpush.msra.mxu0 0.0
      %1220 = vmatpush.msra.mxu0 0.0
      %1221 = vmatpush.msra.mxu0 0.0
      %1222 = vmatpush.msra.mxu0 0.0
      %1223 = vmatpush.msra.mxu0 0.0
      %1224 = vmatpush.msra.mxu0 0.0
      %1225 = vmatpush.msra.mxu0 0.0
      %1226 = vmatpush.msra.mxu0 0.0
      %1227 = vmatpush.msra.mxu0 0.0
      %1228 = vmatpush.msra.mxu0 0.0
      %1229 = vmatpush.msra.mxu0 %v1124
      %1230 = vmatpush.msra.mxu0 %v1122
      %1231 = vmatmul.f32.gmra.mxu0 %v1210
      %v1232 = vpop.f32.mrf.mxu0
      %v1233 = vadd.f32 0.0, %v1232
      %1234 = vmatmul.f32.gmra.mxu0 %v1213
      %v1235 = vpop.f32.mrf.mxu0
      %v1236 = vadd.f32 0.0, %v1235
      %1237 = vdwg.mxu0
      %1240 = vrot.lane.b32.xlu0 %v1233, 32
      %v1241 = vpop.permute.xlu0 %1240
      %1242 = vrot.lane.b32.xlu0 %v1236, 32
      %v1243 = vpop.permute.xlu0 %1242
      %vm1246 = vcmask 392448
      %1247 = vst.msk [vmem:[#allocation3] sm:$0xff] %vm1246, %v1241
      %1248 = vst.msk [vmem:[#allocation3 + $0x10] sm:$0xff] %vm1246, %v1243
      %v1249 = vld [vmem:[#allocation2] sm:$0xff]
      %v1250 = vld [vmem:[#allocation2 + $0x10] sm:$0xff]
      %v1251 = vld [vmem:[%s754] sm:$0x1]
      %v1252 = vld [vmem:[%s758] sm:$0x1]
      %v1254 = vperm.slane %v1251, 0
      %1255 = vrot.lane.b32.xlu0 %v1254, 80
      %v1256 = vpop.permute.xlu0 %1255
      %1259 = vrot.lane.b32.xlu0 %v1249, 80
      %v1260 = vpop.permute.xlu0 %1259
      %1261 = vrot.lane.b32.xlu0 %v1250, 80
      %v1262 = vpop.permute.xlu0 %1261
      %v1263 = vsel %vm801, %v1256, 0
      %v1265 = vsel %vm801, %v1260, 0
      %v1267 = vsel %vm801, %v1262, 0
      %1269 = vmatpush.xpose.msra.mxu0 0.0
      %1270 = vmatpush.xpose.msra.mxu0 0.0
      %1271 = vmatpush.xpose.msra.mxu0 0.0
      %1272 = vmatpush.xpose.msra.mxu0 0.0
      %1273 = vmatpush.xpose.msra.mxu0 0.0
      %1274 = vmatpush.xpose.msra.mxu0 0.0
      %1275 = vmatpush.xpose.msra.mxu0 0.0
      %1276 = vmatpush.xpose.msra.mxu0 0.0
      %1277 = vmatpush.xpose.msra.mxu0 0.0
      %1278 = vmatpush.xpose.msra.mxu0 0.0
      %1279 = vmatpush.xpose.msra.mxu0 0.0
      %1280 = vmatpush.xpose.msra.mxu0 0.0
      %1281 = vmatpush.xpose.msra.mxu0 0.0
      %1282 = vmatpush.xpose.msra.mxu0 0.0
      %1283 = vmatpush.xpose.msra.mxu0 %v1267
      %1284 = vmatpush.xpose.msra.mxu0 %v1265
      %1285 = vmatmul.f32.gmra.mxu0 %v1263
      %v1286 = vpop.f32.mrf.mxu0
      %v1287 = vadd.f32 0.0, %v1286
      %1288 = vdwg.mxu0
      %v1290 = vperm.slane %v1252, 0
      %v1292 = vmul.f32 %v1249, %v1290
      %v1293 = vmul.f32 %v1250, %v1290
      %1296 = vrot.lane.b32.xlu0 %v1292, 80
      %v1297 = vpop.permute.xlu0 %1296
      %1298 = vrot.lane.b32.xlu0 %v1293, 80
      %v1299 = vpop.permute.xlu0 %1298
      %v1302 = vsel %vm801, %v1297, 0.0
      %1303 = vadd.xlane.f32.xlu0 %v1302
      %v1304 = vpop.xlane.xlu0 %1303
      %v1305 = vsel %vm801, %v1299, 0.0
      %1306 = vadd.xlane.f32.xlu0 %v1305
      %v1307 = vpop.xlane.xlu0 %1306
      %v1308 = vperm.slane %v1287, 0
      %v1309 = vadd.f32 %v1304, %v1308
      %v1310 = vadd.f32 %v1307, %v1308
      %vm1311 = vcmp.gt.f32.partialorder %v1309, 0.0
      %vm1312 = vcmp.gt.f32.partialorder %v1310, 0.0
      %v1313 = vmul.f32 %v1309, 0.2
      %v1314 = vmul.f32 %v1310, 0.2
      %v1315 = vsel %vm1311, %v1309, %v1313
      %v1316 = vsel %vm1312, %v1310, %v1314
      %v1317 = vsel %vm912, %v1315, -1e+30
      %v1318 = vsel %vm913, %v1316, -1e+30
      %v1319 = vsel %vm801, %v1317, -inf
      %1320 = vmax.xlane.f32.xlu0 %v1319
      %v1321 = vpop.xlane.xlu0 %1320
      %v1322 = vsel %vm801, %v1318, -inf
      %1323 = vmax.xlane.f32.xlu0 %v1322
      %v1324 = vpop.xlane.xlu0 %1323
      %v1325 = vsub.f32 %v1317, %v1321
      %v1326 = vsub.f32 %v1318, %v1324
      %v1327 = vmul.f32 %v1325, 1.442695
      %v1328 = vpow.pop %v1327
      %v1329 = vmul.f32 %v1326, 1.442695
      %v1330 = vpow.pop %v1329
      %v1331 = vmul.f32 %v1328, %v795
      %v1332 = vmul.f32 %v1330, %v796
      %v1333 = vsel %vm801, %v1331, 0.0
      %1334 = vadd.xlane.f32.xlu0 %v1333
      %v1335 = vpop.xlane.xlu0 %1334
      %v1336 = vsel %vm801, %v1332, 0.0
      %1337 = vadd.xlane.f32.xlu0 %v1336
      %v1338 = vpop.xlane.xlu0 %1337
      %v1339 = vmax.f32 %v1335, 1e-20
      %v1340 = vmax.f32 %v1338, 1e-20
      %v1341 = vrcp.pop %v1339
      %v1342 = vrcp.pop %v1340
      %v1343 = vmul.f32 %v1331, %v1341
      %v1344 = vmul.f32 %v1332, %v1342
      %v1348 = vsel %vm801, %v1343, 0
      %v1351 = vsel %vm801, %v1344, 0
      %1353 = vmatpush.msra.mxu0 0.0
      %1354 = vmatpush.msra.mxu0 0.0
      %1355 = vmatpush.msra.mxu0 0.0
      %1356 = vmatpush.msra.mxu0 0.0
      %1357 = vmatpush.msra.mxu0 0.0
      %1358 = vmatpush.msra.mxu0 0.0
      %1359 = vmatpush.msra.mxu0 0.0
      %1360 = vmatpush.msra.mxu0 0.0
      %1361 = vmatpush.msra.mxu0 0.0
      %1362 = vmatpush.msra.mxu0 0.0
      %1363 = vmatpush.msra.mxu0 0.0
      %1364 = vmatpush.msra.mxu0 0.0
      %1365 = vmatpush.msra.mxu0 0.0
      %1366 = vmatpush.msra.mxu0 0.0
      %1367 = vmatpush.msra.mxu0 %v1262
      %1368 = vmatpush.msra.mxu0 %v1260
      %1369 = vmatmul.f32.gmra.mxu0 %v1348
      %v1370 = vpop.f32.mrf.mxu0
      %v1371 = vadd.f32 0.0, %v1370
      %1372 = vmatmul.f32.gmra.mxu0 %v1351
      %v1373 = vpop.f32.mrf.mxu0
      %v1374 = vadd.f32 0.0, %v1373
      %1375 = vdwg.mxu0
      %1378 = vrot.lane.b32.xlu0 %v1371, 48
      %v1379 = vpop.permute.xlu0 %1378
      %1380 = vrot.lane.b32.xlu0 %v1374, 48
      %v1381 = vpop.permute.xlu0 %1380
      %vm1384 = vcmask 523648
      %1385 = vst.msk [vmem:[#allocation3] sm:$0xff] %vm1384, %v1379
      %1386 = vst.msk [vmem:[#allocation3 + $0x10] sm:$0xff] %vm1384, %v1381
      %v1387 = vld [vmem:[#allocation2] sm:$0xff]
      %v1388 = vld [vmem:[#allocation2 + $0x10] sm:$0xff]
      %v1389 = vld [vmem:[%s754] sm:$0x1]
      %v1390 = vld [vmem:[%s758] sm:$0x1]
      %v1392 = vperm.slane %v1389, 0
      %1393 = vrot.lane.b32.xlu0 %v1392, 64
      %v1394 = vpop.permute.xlu0 %1393
      %1397 = vrot.lane.b32.xlu0 %v1387, 64
      %v1398 = vpop.permute.xlu0 %1397
      %1399 = vrot.lane.b32.xlu0 %v1388, 64
      %v1400 = vpop.permute.xlu0 %1399
      %v1401 = vsel %vm801, %v1394, 0
      %v1403 = vsel %vm801, %v1398, 0
      %v1405 = vsel %vm801, %v1400, 0
      %1407 = vmatpush.xpose.msra.mxu0 0.0
      %1408 = vmatpush.xpose.msra.mxu0 0.0
      %1409 = vmatpush.xpose.msra.mxu0 0.0
      %1410 = vmatpush.xpose.msra.mxu0 0.0
      %1411 = vmatpush.xpose.msra.mxu0 0.0
      %1412 = vmatpush.xpose.msra.mxu0 0.0
      %1413 = vmatpush.xpose.msra.mxu0 0.0
      %1414 = vmatpush.xpose.msra.mxu0 0.0
      %1415 = vmatpush.xpose.msra.mxu0 0.0
      %1416 = vmatpush.xpose.msra.mxu0 0.0
      %1417 = vmatpush.xpose.msra.mxu0 0.0
      %1418 = vmatpush.xpose.msra.mxu0 0.0
      %1419 = vmatpush.xpose.msra.mxu0 0.0
      %1420 = vmatpush.xpose.msra.mxu0 0.0
      %1421 = vmatpush.xpose.msra.mxu0 %v1405
      %1422 = vmatpush.xpose.msra.mxu0 %v1403
      %1423 = vmatmul.f32.gmra.mxu0 %v1401
      %v1424 = vpop.f32.mrf.mxu0
      %v1425 = vadd.f32 0.0, %v1424
      %1426 = vdwg.mxu0
      %v1428 = vperm.slane %v1390, 0
      %v1430 = vmul.f32 %v1387, %v1428
      %v1431 = vmul.f32 %v1388, %v1428
      %1434 = vrot.lane.b32.xlu0 %v1430, 64
      %v1435 = vpop.permute.xlu0 %1434
      %1436 = vrot.lane.b32.xlu0 %v1431, 64
      %v1437 = vpop.permute.xlu0 %1436
      %v1440 = vsel %vm801, %v1435, 0.0
      %1441 = vadd.xlane.f32.xlu0 %v1440
      %v1442 = vpop.xlane.xlu0 %1441
      %v1443 = vsel %vm801, %v1437, 0.0
      %1444 = vadd.xlane.f32.xlu0 %v1443
      %v1445 = vpop.xlane.xlu0 %1444
      %v1446 = vperm.slane %v1425, 0
      %v1447 = vadd.f32 %v1442, %v1446
      %v1448 = vadd.f32 %v1445, %v1446
      %vm1449 = vcmp.gt.f32.partialorder %v1447, 0.0
      %vm1450 = vcmp.gt.f32.partialorder %v1448, 0.0
      %v1451 = vmul.f32 %v1447, 0.2
      %v1452 = vmul.f32 %v1448, 0.2
      %v1453 = vsel %vm1449, %v1447, %v1451
      %v1454 = vsel %vm1450, %v1448, %v1452
      %v1455 = vsel %vm912, %v1453, -1e+30
      %v1456 = vsel %vm913, %v1454, -1e+30
      %v1457 = vsel %vm801, %v1455, -inf
      %1458 = vmax.xlane.f32.xlu0 %v1457
      %v1459 = vpop.xlane.xlu0 %1458
      %v1460 = vsel %vm801, %v1456, -inf
      %1461 = vmax.xlane.f32.xlu0 %v1460
      %v1462 = vpop.xlane.xlu0 %1461
      %v1463 = vsub.f32 %v1455, %v1459
      %v1464 = vsub.f32 %v1456, %v1462
      %v1465 = vmul.f32 %v1463, 1.442695
      %v1466 = vpow.pop %v1465
      %v1467 = vmul.f32 %v1464, 1.442695
      %v1468 = vpow.pop %v1467
      %v1469 = vmul.f32 %v1466, %v795
      %v1470 = vmul.f32 %v1468, %v796
      %v1471 = vsel %vm801, %v1469, 0.0
      %1472 = vadd.xlane.f32.xlu0 %v1471
      %v1473 = vpop.xlane.xlu0 %1472
      %v1474 = vsel %vm801, %v1470, 0.0
      %1475 = vadd.xlane.f32.xlu0 %v1474
      %v1476 = vpop.xlane.xlu0 %1475
      %v1477 = vmax.f32 %v1473, 1e-20
      %v1478 = vmax.f32 %v1476, 1e-20
      %v1479 = vrcp.pop %v1477
      %v1480 = vrcp.pop %v1478
      %v1481 = vmul.f32 %v1469, %v1479
      %v1482 = vmul.f32 %v1470, %v1480
      %v1486 = vsel %vm801, %v1481, 0
      %v1489 = vsel %vm801, %v1482, 0
      %1491 = vmatpush.msra.mxu0 0.0
      %1492 = vmatpush.msra.mxu0 0.0
      %1493 = vmatpush.msra.mxu0 0.0
      %1494 = vmatpush.msra.mxu0 0.0
      %1495 = vmatpush.msra.mxu0 0.0
      %1496 = vmatpush.msra.mxu0 0.0
      %1497 = vmatpush.msra.mxu0 0.0
      %1498 = vmatpush.msra.mxu0 0.0
      %1499 = vmatpush.msra.mxu0 0.0
      %1500 = vmatpush.msra.mxu0 0.0
      %1501 = vmatpush.msra.mxu0 0.0
      %1502 = vmatpush.msra.mxu0 0.0
      %1503 = vmatpush.msra.mxu0 0.0
      %1504 = vmatpush.msra.mxu0 0.0
      %1505 = vmatpush.msra.mxu0 %v1400
      %1506 = vmatpush.msra.mxu0 %v1398
      %1507 = vmatmul.f32.gmra.mxu0 %v1486
      %v1508 = vpop.f32.mrf.mxu0
      %v1509 = vadd.f32 0.0, %v1508
      %1510 = vmatmul.f32.gmra.mxu0 %v1489
      %v1511 = vpop.f32.mrf.mxu0
      %v1512 = vadd.f32 0.0, %v1511
      %1513 = vdwg.mxu0
      %1516 = vrot.lane.b32.xlu0 %v1509, 64
      %v1517 = vpop.permute.xlu0 %1516
      %1518 = vrot.lane.b32.xlu0 %v1512, 64
      %v1519 = vpop.permute.xlu0 %1518
      %vm1522 = vcmask 654848
      %1523 = vst.msk [vmem:[#allocation3] sm:$0xff] %vm1522, %v1517
      %1524 = vst.msk [vmem:[#allocation3 + $0x10] sm:$0xff] %vm1522, %v1519
      %v1525 = vld [vmem:[#allocation2] sm:$0xff]
      %v1526 = vld [vmem:[#allocation2 + $0x10] sm:$0xff]
      %v1527 = vld [vmem:[%s754] sm:$0x1]
      %v1528 = vld [vmem:[%s758] sm:$0x1]
      %v1530 = vperm.slane %v1527, 0
      %1531 = vrot.lane.b32.xlu0 %v1530, 48
      %v1532 = vpop.permute.xlu0 %1531
      %1535 = vrot.lane.b32.xlu0 %v1525, 48
      %v1536 = vpop.permute.xlu0 %1535
      %1537 = vrot.lane.b32.xlu0 %v1526, 48
      %v1538 = vpop.permute.xlu0 %1537
      %v1539 = vsel %vm801, %v1532, 0
      %v1541 = vsel %vm801, %v1536, 0
      %v1543 = vsel %vm801, %v1538, 0
      %1545 = vmatpush.xpose.msra.mxu0 0.0
      %1546 = vmatpush.xpose.msra.mxu0 0.0
      %1547 = vmatpush.xpose.msra.mxu0 0.0
      %1548 = vmatpush.xpose.msra.mxu0 0.0
      %1549 = vmatpush.xpose.msra.mxu0 0.0
      %1550 = vmatpush.xpose.msra.mxu0 0.0
      %1551 = vmatpush.xpose.msra.mxu0 0.0
      %1552 = vmatpush.xpose.msra.mxu0 0.0
      %1553 = vmatpush.xpose.msra.mxu0 0.0
      %1554 = vmatpush.xpose.msra.mxu0 0.0
      %1555 = vmatpush.xpose.msra.mxu0 0.0
      %1556 = vmatpush.xpose.msra.mxu0 0.0
      %1557 = vmatpush.xpose.msra.mxu0 0.0
      %1558 = vmatpush.xpose.msra.mxu0 0.0
      %1559 = vmatpush.xpose.msra.mxu0 %v1543
      %1560 = vmatpush.xpose.msra.mxu0 %v1541
      %1561 = vmatmul.f32.gmra.mxu0 %v1539
      %v1562 = vpop.f32.mrf.mxu0
      %v1563 = vadd.f32 0.0, %v1562
      %1564 = vdwg.mxu0
      %v1566 = vperm.slane %v1528, 0
      %v1568 = vmul.f32 %v1525, %v1566
      %v1569 = vmul.f32 %v1526, %v1566
      %1572 = vrot.lane.b32.xlu0 %v1568, 48
      %v1573 = vpop.permute.xlu0 %1572
      %1574 = vrot.lane.b32.xlu0 %v1569, 48
      %v1575 = vpop.permute.xlu0 %1574
      %v1578 = vsel %vm801, %v1573, 0.0
      %1579 = vadd.xlane.f32.xlu0 %v1578
      %v1580 = vpop.xlane.xlu0 %1579
      %v1581 = vsel %vm801, %v1575, 0.0
      %1582 = vadd.xlane.f32.xlu0 %v1581
      %v1583 = vpop.xlane.xlu0 %1582
      %v1584 = vperm.slane %v1563, 0
      %v1585 = vadd.f32 %v1580, %v1584
      %v1586 = vadd.f32 %v1583, %v1584
      %vm1587 = vcmp.gt.f32.partialorder %v1585, 0.0
      %vm1588 = vcmp.gt.f32.partialorder %v1586, 0.0
      %v1589 = vmul.f32 %v1585, 0.2
      %v1590 = vmul.f32 %v1586, 0.2
      %v1591 = vsel %vm1587, %v1585, %v1589
      %v1592 = vsel %vm1588, %v1586, %v1590
      %v1593 = vsel %vm912, %v1591, -1e+30
      %v1594 = vsel %vm913, %v1592, -1e+30
      %v1595 = vsel %vm801, %v1593, -inf
      %1596 = vmax.xlane.f32.xlu0 %v1595
      %v1597 = vpop.xlane.xlu0 %1596
      %v1598 = vsel %vm801, %v1594, -inf
      %1599 = vmax.xlane.f32.xlu0 %v1598
      %v1600 = vpop.xlane.xlu0 %1599
      %v1601 = vsub.f32 %v1593, %v1597
      %v1602 = vsub.f32 %v1594, %v1600
      %v1603 = vmul.f32 %v1601, 1.442695
      %v1604 = vpow.pop %v1603
      %v1605 = vmul.f32 %v1602, 1.442695
      %v1606 = vpow.pop %v1605
      %v1607 = vmul.f32 %v1604, %v795
      %v1608 = vmul.f32 %v1606, %v796
      %v1609 = vsel %vm801, %v1607, 0.0
      %1610 = vadd.xlane.f32.xlu0 %v1609
      %v1611 = vpop.xlane.xlu0 %1610
      %v1612 = vsel %vm801, %v1608, 0.0
      %1613 = vadd.xlane.f32.xlu0 %v1612
      %v1614 = vpop.xlane.xlu0 %1613
      %v1615 = vmax.f32 %v1611, 1e-20
      %v1616 = vmax.f32 %v1614, 1e-20
      %v1617 = vrcp.pop %v1615
      %v1618 = vrcp.pop %v1616
      %v1619 = vmul.f32 %v1607, %v1617
      %v1620 = vmul.f32 %v1608, %v1618
      %v1624 = vsel %vm801, %v1619, 0
      %v1627 = vsel %vm801, %v1620, 0
      %1629 = vmatpush.msra.mxu0 0.0
      %1630 = vmatpush.msra.mxu0 0.0
      %1631 = vmatpush.msra.mxu0 0.0
      %1632 = vmatpush.msra.mxu0 0.0
      %1633 = vmatpush.msra.mxu0 0.0
      %1634 = vmatpush.msra.mxu0 0.0
      %1635 = vmatpush.msra.mxu0 0.0
      %1636 = vmatpush.msra.mxu0 0.0
      %1637 = vmatpush.msra.mxu0 0.0
      %1638 = vmatpush.msra.mxu0 0.0
      %1639 = vmatpush.msra.mxu0 0.0
      %1640 = vmatpush.msra.mxu0 0.0
      %1641 = vmatpush.msra.mxu0 0.0
      %1642 = vmatpush.msra.mxu0 0.0
      %1643 = vmatpush.msra.mxu0 %v1538
      %1644 = vmatpush.msra.mxu0 %v1536
      %1645 = vmatmul.f32.gmra.mxu0 %v1624
      %v1646 = vpop.f32.mrf.mxu0
      %v1647 = vadd.f32 0.0, %v1646
      %1648 = vmatmul.f32.gmra.mxu0 %v1627
      %v1649 = vpop.f32.mrf.mxu0
      %v1650 = vadd.f32 0.0, %v1649
      %1651 = vdwg.mxu0
      %1654 = vrot.lane.b32.xlu0 %v1647, 80
      %v1655 = vpop.permute.xlu0 %1654
      %1656 = vrot.lane.b32.xlu0 %v1650, 80
      %v1657 = vpop.permute.xlu0 %1656
      %vm1660 = vcmask 786048
      %1661 = vst.msk [vmem:[#allocation3] sm:$0xff] %vm1660, %v1655
      %1662 = vst.msk [vmem:[#allocation3 + $0x10] sm:$0xff] %vm1660, %v1657
      %v1663 = vld [vmem:[#allocation2] sm:$0xff]
      %v1664 = vld [vmem:[#allocation2 + $0x10] sm:$0xff]
      %v1665 = vld [vmem:[%s754] sm:$0x1]
      %v1666 = vld [vmem:[%s758] sm:$0x1]
      %v1668 = vperm.slane %v1665, 0
      %1669 = vrot.lane.b32.xlu0 %v1668, 32
      %v1670 = vpop.permute.xlu0 %1669
      %1673 = vrot.lane.b32.xlu0 %v1663, 32
      %v1674 = vpop.permute.xlu0 %1673
      %1675 = vrot.lane.b32.xlu0 %v1664, 32
      %v1676 = vpop.permute.xlu0 %1675
      %v1677 = vsel %vm801, %v1670, 0
      %v1679 = vsel %vm801, %v1674, 0
      %v1681 = vsel %vm801, %v1676, 0
      %1683 = vmatpush.xpose.msra.mxu0 0.0
      %1684 = vmatpush.xpose.msra.mxu0 0.0
      %1685 = vmatpush.xpose.msra.mxu0 0.0
      %1686 = vmatpush.xpose.msra.mxu0 0.0
      %1687 = vmatpush.xpose.msra.mxu0 0.0
      %1688 = vmatpush.xpose.msra.mxu0 0.0
      %1689 = vmatpush.xpose.msra.mxu0 0.0
      %1690 = vmatpush.xpose.msra.mxu0 0.0
      %1691 = vmatpush.xpose.msra.mxu0 0.0
      %1692 = vmatpush.xpose.msra.mxu0 0.0
      %1693 = vmatpush.xpose.msra.mxu0 0.0
      %1694 = vmatpush.xpose.msra.mxu0 0.0
      %1695 = vmatpush.xpose.msra.mxu0 0.0
      %1696 = vmatpush.xpose.msra.mxu0 0.0
      %1697 = vmatpush.xpose.msra.mxu0 %v1681
      %1698 = vmatpush.xpose.msra.mxu0 %v1679
      %1699 = vmatmul.f32.gmra.mxu0 %v1677
      %v1700 = vpop.f32.mrf.mxu0
      %v1701 = vadd.f32 0.0, %v1700
      %1702 = vdwg.mxu0
      %v1704 = vperm.slane %v1666, 0
      %v1706 = vmul.f32 %v1663, %v1704
      %v1707 = vmul.f32 %v1664, %v1704
      %1710 = vrot.lane.b32.xlu0 %v1706, 32
      %v1711 = vpop.permute.xlu0 %1710
      %1712 = vrot.lane.b32.xlu0 %v1707, 32
      %v1713 = vpop.permute.xlu0 %1712
      %v1716 = vsel %vm801, %v1711, 0.0
      %1717 = vadd.xlane.f32.xlu0 %v1716
      %v1718 = vpop.xlane.xlu0 %1717
      %v1719 = vsel %vm801, %v1713, 0.0
      %1720 = vadd.xlane.f32.xlu0 %v1719
      %v1721 = vpop.xlane.xlu0 %1720
      %v1722 = vperm.slane %v1701, 0
      %v1723 = vadd.f32 %v1718, %v1722
      %v1724 = vadd.f32 %v1721, %v1722
      %vm1725 = vcmp.gt.f32.partialorder %v1723, 0.0
      %vm1726 = vcmp.gt.f32.partialorder %v1724, 0.0
      %v1727 = vmul.f32 %v1723, 0.2
      %v1728 = vmul.f32 %v1724, 0.2
      %v1729 = vsel %vm1725, %v1723, %v1727
      %v1730 = vsel %vm1726, %v1724, %v1728
      %v1731 = vsel %vm912, %v1729, -1e+30
      %v1732 = vsel %vm913, %v1730, -1e+30
      %v1733 = vsel %vm801, %v1731, -inf
      %1734 = vmax.xlane.f32.xlu0 %v1733
      %v1735 = vpop.xlane.xlu0 %1734
      %v1736 = vsel %vm801, %v1732, -inf
      %1737 = vmax.xlane.f32.xlu0 %v1736
      %v1738 = vpop.xlane.xlu0 %1737
      %v1739 = vsub.f32 %v1731, %v1735
      %v1740 = vsub.f32 %v1732, %v1738
      %v1741 = vmul.f32 %v1739, 1.442695
      %v1742 = vpow.pop %v1741
      %v1743 = vmul.f32 %v1740, 1.442695
      %v1744 = vpow.pop %v1743
      %v1745 = vmul.f32 %v1742, %v795
      %v1746 = vmul.f32 %v1744, %v796
      %v1747 = vsel %vm801, %v1745, 0.0
      %1748 = vadd.xlane.f32.xlu0 %v1747
      %v1749 = vpop.xlane.xlu0 %1748
      %v1750 = vsel %vm801, %v1746, 0.0
      %1751 = vadd.xlane.f32.xlu0 %v1750
      %v1752 = vpop.xlane.xlu0 %1751
      %v1753 = vmax.f32 %v1749, 1e-20
      %v1754 = vmax.f32 %v1752, 1e-20
      %v1755 = vrcp.pop %v1753
      %v1756 = vrcp.pop %v1754
      %v1757 = vmul.f32 %v1745, %v1755
      %v1758 = vmul.f32 %v1746, %v1756
      %v1762 = vsel %vm801, %v1757, 0
      %v1765 = vsel %vm801, %v1758, 0
      %1767 = vmatpush.msra.mxu0 0.0
      %1768 = vmatpush.msra.mxu0 0.0
      %1769 = vmatpush.msra.mxu0 0.0
      %1770 = vmatpush.msra.mxu0 0.0
      %1771 = vmatpush.msra.mxu0 0.0
      %1772 = vmatpush.msra.mxu0 0.0
      %1773 = vmatpush.msra.mxu0 0.0
      %1774 = vmatpush.msra.mxu0 0.0
      %1775 = vmatpush.msra.mxu0 0.0
      %1776 = vmatpush.msra.mxu0 0.0
      %1777 = vmatpush.msra.mxu0 0.0
      %1778 = vmatpush.msra.mxu0 0.0
      %1779 = vmatpush.msra.mxu0 0.0
      %1780 = vmatpush.msra.mxu0 0.0
      %1781 = vmatpush.msra.mxu0 %v1676
      %1782 = vmatpush.msra.mxu0 %v1674
      %1783 = vmatmul.f32.gmra.mxu0 %v1762
      %v1784 = vpop.f32.mrf.mxu0
      %v1785 = vadd.f32 0.0, %v1784
      %1786 = vmatmul.f32.gmra.mxu0 %v1765
      %v1787 = vpop.f32.mrf.mxu0
      %v1788 = vadd.f32 0.0, %v1787
      %1789 = vdwg.mxu0
      %1792 = vrot.lane.b32.xlu0 %v1785, 96
      %v1793 = vpop.permute.xlu0 %1792
      %1794 = vrot.lane.b32.xlu0 %v1788, 96
      %v1795 = vpop.permute.xlu0 %1794
      %vm1798 = vcmask 917248
      %1799 = vst.msk [vmem:[#allocation3] sm:$0xff] %vm1798, %v1793
      %1800 = vst.msk [vmem:[#allocation3 + $0x10] sm:$0xff] %vm1798, %v1795
      %v1801 = vld [vmem:[#allocation2] sm:$0xff]
      %v1802 = vld [vmem:[#allocation2 + $0x10] sm:$0xff]
      %v1803 = vld [vmem:[%s754] sm:$0x1]
      %v1804 = vld [vmem:[%s758] sm:$0x1]
      %v1806 = vperm.slane %v1803, 0
      %1807 = vrot.lane.b32.xlu0 %v1806, 16
      %v1808 = vpop.permute.xlu0 %1807
      %1811 = vrot.lane.b32.xlu0 %v1801, 16
      %v1812 = vpop.permute.xlu0 %1811
      %1813 = vrot.lane.b32.xlu0 %v1802, 16
      %v1814 = vpop.permute.xlu0 %1813
      %v1815 = vsel %vm801, %v1808, 0
      %v1817 = vsel %vm801, %v1812, 0
      %v1819 = vsel %vm801, %v1814, 0
      %1821 = vmatpush.xpose.msra.mxu0 0.0
      %1822 = vmatpush.xpose.msra.mxu0 0.0
      %1823 = vmatpush.xpose.msra.mxu0 0.0
      %1824 = vmatpush.xpose.msra.mxu0 0.0
      %1825 = vmatpush.xpose.msra.mxu0 0.0
      %1826 = vmatpush.xpose.msra.mxu0 0.0
      %1827 = vmatpush.xpose.msra.mxu0 0.0
      %1828 = vmatpush.xpose.msra.mxu0 0.0
      %1829 = vmatpush.xpose.msra.mxu0 0.0
      %1830 = vmatpush.xpose.msra.mxu0 0.0
      %1831 = vmatpush.xpose.msra.mxu0 0.0
      %1832 = vmatpush.xpose.msra.mxu0 0.0
      %1833 = vmatpush.xpose.msra.mxu0 0.0
      %1834 = vmatpush.xpose.msra.mxu0 0.0
      %1835 = vmatpush.xpose.msra.mxu0 %v1819
      %1836 = vmatpush.xpose.msra.mxu0 %v1817
      %1837 = vmatmul.f32.gmra.mxu0 %v1815
      %v1838 = vpop.f32.mrf.mxu0
      %v1839 = vadd.f32 0.0, %v1838
      %1840 = vdwg.mxu0
      %v1842 = vperm.slane %v1804, 0
      %v1844 = vmul.f32 %v1801, %v1842
      %v1845 = vmul.f32 %v1802, %v1842
      %1848 = vrot.lane.b32.xlu0 %v1844, 16
      %v1849 = vpop.permute.xlu0 %1848
      %1850 = vrot.lane.b32.xlu0 %v1845, 16
      %v1851 = vpop.permute.xlu0 %1850
      %v1854 = vsel %vm801, %v1849, 0.0
      %1855 = vadd.xlane.f32.xlu0 %v1854
      %v1856 = vpop.xlane.xlu0 %1855
      %v1857 = vsel %vm801, %v1851, 0.0
      %1858 = vadd.xlane.f32.xlu0 %v1857
      %v1859 = vpop.xlane.xlu0 %1858
      %v1860 = vperm.slane %v1839, 0
      %v1861 = vadd.f32 %v1856, %v1860
      %v1862 = vadd.f32 %v1859, %v1860
      %vm1863 = vcmp.gt.f32.partialorder %v1861, 0.0
      %vm1864 = vcmp.gt.f32.partialorder %v1862, 0.0
      %v1865 = vmul.f32 %v1861, 0.2
      %v1866 = vmul.f32 %v1862, 0.2
      %v1867 = vsel %vm1863, %v1861, %v1865
      %v1868 = vsel %vm1864, %v1862, %v1866
      %v1869 = vsel %vm912, %v1867, -1e+30
      %v1870 = vsel %vm913, %v1868, -1e+30
      %v1871 = vsel %vm801, %v1869, -inf
      %1872 = vmax.xlane.f32.xlu0 %v1871
      %v1873 = vpop.xlane.xlu0 %1872
      %v1874 = vsel %vm801, %v1870, -inf
      %1875 = vmax.xlane.f32.xlu0 %v1874
      %v1876 = vpop.xlane.xlu0 %1875
      %v1877 = vsub.f32 %v1869, %v1873
      %v1878 = vsub.f32 %v1870, %v1876
      %v1879 = vmul.f32 %v1877, 1.442695
      %v1880 = vpow.pop %v1879
      %v1881 = vmul.f32 %v1878, 1.442695
      %v1882 = vpow.pop %v1881
      %v1883 = vmul.f32 %v1880, %v795
      %v1884 = vmul.f32 %v1882, %v796
      %v1885 = vsel %vm801, %v1883, 0.0
      %1886 = vadd.xlane.f32.xlu0 %v1885
      %v1887 = vpop.xlane.xlu0 %1886
      %v1888 = vsel %vm801, %v1884, 0.0
      %1889 = vadd.xlane.f32.xlu0 %v1888
      %v1890 = vpop.xlane.xlu0 %1889
      %v1891 = vmax.f32 %v1887, 1e-20
      %v1892 = vmax.f32 %v1890, 1e-20
      %v1893 = vrcp.pop %v1891
      %v1894 = vrcp.pop %v1892
      %v1895 = vmul.f32 %v1883, %v1893
      %v1896 = vmul.f32 %v1884, %v1894
      %v1900 = vsel %vm801, %v1895, 0
      %v1903 = vsel %vm801, %v1896, 0
      %1905 = vmatpush.msra.mxu0 0.0
      %1906 = vmatpush.msra.mxu0 0.0
      %1907 = vmatpush.msra.mxu0 0.0
      %1908 = vmatpush.msra.mxu0 0.0
      %1909 = vmatpush.msra.mxu0 0.0
      %1910 = vmatpush.msra.mxu0 0.0
      %1911 = vmatpush.msra.mxu0 0.0
      %1912 = vmatpush.msra.mxu0 0.0
      %1913 = vmatpush.msra.mxu0 0.0
      %1914 = vmatpush.msra.mxu0 0.0
      %1915 = vmatpush.msra.mxu0 0.0
      %1916 = vmatpush.msra.mxu0 0.0
      %1917 = vmatpush.msra.mxu0 0.0
      %1918 = vmatpush.msra.mxu0 0.0
      %1919 = vmatpush.msra.mxu0 %v1814
      %1920 = vmatpush.msra.mxu0 %v1812
      %1921 = vmatmul.f32.gmra.mxu0 %v1900
      %v1922 = vpop.f32.mrf.mxu0
      %v1923 = vadd.f32 0.0, %v1922
      %1924 = vmatmul.f32.gmra.mxu0 %v1903
      %v1925 = vpop.f32.mrf.mxu0
      %v1926 = vadd.f32 0.0, %v1925
      %1927 = vdwg.mxu0
      %1930 = vrot.lane.b32.xlu0 %v1923, 112
      %v1931 = vpop.permute.xlu0 %1930
      %1932 = vrot.lane.b32.xlu0 %v1926, 112
      %v1933 = vpop.permute.xlu0 %1932
      %vm1936 = vcmask 1048448
      %1937 = vst.msk [vmem:[#allocation3] sm:$0xff] %vm1936, %v1931
      %1938 = vst.msk [vmem:[#allocation3 + $0x10] sm:$0xff] %vm1936, %v1933
      %v1939 = vld [vmem:[#allocation2 + $0x8] sm:$0xff]
      %v1940 = vld [vmem:[#allocation2 + $0x18] sm:$0xff]
      %v1941 = vld [vmem:[%s754 + $0x1] sm:$0x1]
      %v1942 = vld [vmem:[%s758 + $0x1] sm:$0x1]
      %v1944 = vsel %vm801, %v1941, 0
      %v1947 = vsel %vm801, %v1939, 0
      %v1950 = vsel %vm801, %v1940, 0
      %1952 = vmatpush.xpose.msra.mxu0 0.0
      %1953 = vmatpush.xpose.msra.mxu0 0.0
      %1954 = vmatpush.xpose.msra.mxu0 0.0
      %1955 = vmatpush.xpose.msra.mxu0 0.0
      %1956 = vmatpush.xpose.msra.mxu0 0.0
      %1957 = vmatpush.xpose.msra.mxu0 0.0
      %1958 = vmatpush.xpose.msra.mxu0 0.0
      %1959 = vmatpush.xpose.msra.mxu0 0.0
      %1960 = vmatpush.xpose.msra.mxu0 0.0
      %1961 = vmatpush.xpose.msra.mxu0 0.0
      %1962 = vmatpush.xpose.msra.mxu0 0.0
      %1963 = vmatpush.xpose.msra.mxu0 0.0
      %1964 = vmatpush.xpose.msra.mxu0 0.0
      %1965 = vmatpush.xpose.msra.mxu0 0.0
      %1966 = vmatpush.xpose.msra.mxu0 %v1950
      %1967 = vmatpush.xpose.msra.mxu0 %v1947
      %1968 = vmatmul.f32.gmra.mxu0 %v1944
      %v1969 = vpop.f32.mrf.mxu0
      %v1970 = vadd.f32 0.0, %v1969
      %1971 = vdwg.mxu0
      %v1973 = vperm.slane %v1942, 0
      %v1975 = vmul.f32 %v1939, %v1973
      %v1976 = vmul.f32 %v1940, %v1973
      %v1977 = vsel %vm801, %v1975, 0.0
      %1978 = vadd.xlane.f32.xlu0 %v1977
      %v1979 = vpop.xlane.xlu0 %1978
      %v1980 = vsel %vm801, %v1976, 0.0
      %1981 = vadd.xlane.f32.xlu0 %v1980
      %v1982 = vpop.xlane.xlu0 %1981
      %v1983 = vperm.slane %v1970, 0
      %v1984 = vadd.f32 %v1979, %v1983
      %v1985 = vadd.f32 %v1982, %v1983
      %vm1986 = vcmp.gt.f32.partialorder %v1984, 0.0
      %vm1987 = vcmp.gt.f32.partialorder %v1985, 0.0
      %v1988 = vmul.f32 %v1984, 0.2
      %v1989 = vmul.f32 %v1985, 0.2
      %v1990 = vsel %vm1986, %v1984, %v1988
      %v1991 = vsel %vm1987, %v1985, %v1989
      %v1992 = vsel %vm912, %v1990, -1e+30
      %v1993 = vsel %vm913, %v1991, -1e+30
      %v1994 = vsel %vm801, %v1992, -inf
      %1995 = vmax.xlane.f32.xlu0 %v1994
      %v1996 = vpop.xlane.xlu0 %1995
      %v1997 = vsel %vm801, %v1993, -inf
      %1998 = vmax.xlane.f32.xlu0 %v1997
      %v1999 = vpop.xlane.xlu0 %1998
      %v2000 = vsub.f32 %v1992, %v1996
      %v2001 = vsub.f32 %v1993, %v1999
      %v2002 = vmul.f32 %v2000, 1.442695
      %v2003 = vpow.pop %v2002
      %v2004 = vmul.f32 %v2001, 1.442695
      %v2005 = vpow.pop %v2004
      %v2006 = vmul.f32 %v2003, %v795
      %v2007 = vmul.f32 %v2005, %v796
      %v2008 = vsel %vm801, %v2006, 0.0
      %2009 = vadd.xlane.f32.xlu0 %v2008
      %v2010 = vpop.xlane.xlu0 %2009
      %v2011 = vsel %vm801, %v2007, 0.0
      %2012 = vadd.xlane.f32.xlu0 %v2011
      %v2013 = vpop.xlane.xlu0 %2012
      %v2014 = vmax.f32 %v2010, 1e-20
      %v2015 = vmax.f32 %v2013, 1e-20
      %v2016 = vrcp.pop %v2014
      %v2017 = vrcp.pop %v2015
      %v2018 = vmul.f32 %v2006, %v2016
      %v2019 = vmul.f32 %v2007, %v2017
      %v2021 = vsel %vm801, %v2018, 0
      %v2024 = vsel %vm801, %v2019, 0
      %2026 = vmatpush.msra.mxu0 0.0
      %2027 = vmatpush.msra.mxu0 0.0
      %2028 = vmatpush.msra.mxu0 0.0
      %2029 = vmatpush.msra.mxu0 0.0
      %2030 = vmatpush.msra.mxu0 0.0
      %2031 = vmatpush.msra.mxu0 0.0
      %2032 = vmatpush.msra.mxu0 0.0
      %2033 = vmatpush.msra.mxu0 0.0
      %2034 = vmatpush.msra.mxu0 0.0
      %2035 = vmatpush.msra.mxu0 0.0
      %2036 = vmatpush.msra.mxu0 0.0
      %2037 = vmatpush.msra.mxu0 0.0
      %2038 = vmatpush.msra.mxu0 0.0
      %2039 = vmatpush.msra.mxu0 0.0
      %2040 = vmatpush.msra.mxu0 %v1940
      %2041 = vmatpush.msra.mxu0 %v1939
      %2042 = vmatmul.f32.gmra.mxu0 %v2021
      %v2043 = vpop.f32.mrf.mxu0
      %v2044 = vadd.f32 0.0, %v2043
      %2045 = vmatmul.f32.gmra.mxu0 %v2024
      %v2046 = vpop.f32.mrf.mxu0
      %v2047 = vadd.f32 0.0, %v2046
      %2048 = vdwg.mxu0
      %2049 = vst.msk [vmem:[#allocation3 + $0x8] sm:$0xff] %vm801, %v2044
      %2050 = vst.msk [vmem:[#allocation3 + $0x18] sm:$0xff] %vm801, %v2047
      %v2051 = vld [vmem:[#allocation2 + $0x8] sm:$0xff]
      %v2052 = vld [vmem:[#allocation2 + $0x18] sm:$0xff]
      %v2053 = vld [vmem:[%s754 + $0x1] sm:$0x1]
      %v2054 = vld [vmem:[%s758 + $0x1] sm:$0x1]
      %v2056 = vperm.slane %v2053, 0
      %2057 = vrot.lane.b32.xlu0 %v2056, 112
      %v2058 = vpop.permute.xlu0 %2057
      %2061 = vrot.lane.b32.xlu0 %v2051, 112
      %v2062 = vpop.permute.xlu0 %2061
      %2063 = vrot.lane.b32.xlu0 %v2052, 112
      %v2064 = vpop.permute.xlu0 %2063
      %v2065 = vsel %vm801, %v2058, 0
      %v2067 = vsel %vm801, %v2062, 0
      %v2069 = vsel %vm801, %v2064, 0
      %2071 = vmatpush.xpose.msra.mxu0 0.0
      %2072 = vmatpush.xpose.msra.mxu0 0.0
      %2073 = vmatpush.xpose.msra.mxu0 0.0
      %2074 = vmatpush.xpose.msra.mxu0 0.0
      %2075 = vmatpush.xpose.msra.mxu0 0.0
      %2076 = vmatpush.xpose.msra.mxu0 0.0
      %2077 = vmatpush.xpose.msra.mxu0 0.0
      %2078 = vmatpush.xpose.msra.mxu0 0.0
      %2079 = vmatpush.xpose.msra.mxu0 0.0
      %2080 = vmatpush.xpose.msra.mxu0 0.0
      %2081 = vmatpush.xpose.msra.mxu0 0.0
      %2082 = vmatpush.xpose.msra.mxu0 0.0
      %2083 = vmatpush.xpose.msra.mxu0 0.0
      %2084 = vmatpush.xpose.msra.mxu0 0.0
      %2085 = vmatpush.xpose.msra.mxu0 %v2069
      %2086 = vmatpush.xpose.msra.mxu0 %v2067
      %2087 = vmatmul.f32.gmra.mxu0 %v2065
      %v2088 = vpop.f32.mrf.mxu0
      %v2089 = vadd.f32 0.0, %v2088
      %2090 = vdwg.mxu0
      %v2092 = vperm.slane %v2054, 0
      %v2094 = vmul.f32 %v2051, %v2092
      %v2095 = vmul.f32 %v2052, %v2092
      %2098 = vrot.lane.b32.xlu0 %v2094, 112
      %v2099 = vpop.permute.xlu0 %2098
      %2100 = vrot.lane.b32.xlu0 %v2095, 112
      %v2101 = vpop.permute.xlu0 %2100
      %v2104 = vsel %vm801, %v2099, 0.0
      %2105 = vadd.xlane.f32.xlu0 %v2104
      %v2106 = vpop.xlane.xlu0 %2105
      %v2107 = vsel %vm801, %v2101, 0.0
      %2108 = vadd.xlane.f32.xlu0 %v2107
      %v2109 = vpop.xlane.xlu0 %2108
      %v2110 = vperm.slane %v2089, 0
      %v2111 = vadd.f32 %v2106, %v2110
      %v2112 = vadd.f32 %v2109, %v2110
      %vm2113 = vcmp.gt.f32.partialorder %v2111, 0.0
      %vm2114 = vcmp.gt.f32.partialorder %v2112, 0.0
      %v2115 = vmul.f32 %v2111, 0.2
      %v2116 = vmul.f32 %v2112, 0.2
      %v2117 = vsel %vm2113, %v2111, %v2115
      %v2118 = vsel %vm2114, %v2112, %v2116
      %v2119 = vsel %vm912, %v2117, -1e+30
      %v2120 = vsel %vm913, %v2118, -1e+30
      %v2121 = vsel %vm801, %v2119, -inf
      %2122 = vmax.xlane.f32.xlu0 %v2121
      %v2123 = vpop.xlane.xlu0 %2122
      %v2124 = vsel %vm801, %v2120, -inf
      %2125 = vmax.xlane.f32.xlu0 %v2124
      %v2126 = vpop.xlane.xlu0 %2125
      %v2127 = vsub.f32 %v2119, %v2123
      %v2128 = vsub.f32 %v2120, %v2126
      %v2129 = vmul.f32 %v2127, 1.442695
      %v2130 = vpow.pop %v2129
      %v2131 = vmul.f32 %v2128, 1.442695
      %v2132 = vpow.pop %v2131
      %v2133 = vmul.f32 %v2130, %v795
      %v2134 = vmul.f32 %v2132, %v796
      %v2135 = vsel %vm801, %v2133, 0.0
      %2136 = vadd.xlane.f32.xlu0 %v2135
      %v2137 = vpop.xlane.xlu0 %2136
      %v2138 = vsel %vm801, %v2134, 0.0
      %2139 = vadd.xlane.f32.xlu0 %v2138
      %v2140 = vpop.xlane.xlu0 %2139
      %v2141 = vmax.f32 %v2137, 1e-20
      %v2142 = vmax.f32 %v2140, 1e-20
      %v2143 = vrcp.pop %v2141
      %v2144 = vrcp.pop %v2142
      %v2145 = vmul.f32 %v2133, %v2143
      %v2146 = vmul.f32 %v2134, %v2144
      %v2150 = vsel %vm801, %v2145, 0
      %v2153 = vsel %vm801, %v2146, 0
      %2155 = vmatpush.msra.mxu0 0.0
      %2156 = vmatpush.msra.mxu0 0.0
      %2157 = vmatpush.msra.mxu0 0.0
      %2158 = vmatpush.msra.mxu0 0.0
      %2159 = vmatpush.msra.mxu0 0.0
      %2160 = vmatpush.msra.mxu0 0.0
      %2161 = vmatpush.msra.mxu0 0.0
      %2162 = vmatpush.msra.mxu0 0.0
      %2163 = vmatpush.msra.mxu0 0.0
      %2164 = vmatpush.msra.mxu0 0.0
      %2165 = vmatpush.msra.mxu0 0.0
      %2166 = vmatpush.msra.mxu0 0.0
      %2167 = vmatpush.msra.mxu0 0.0
      %2168 = vmatpush.msra.mxu0 0.0
      %2169 = vmatpush.msra.mxu0 %v2064
      %2170 = vmatpush.msra.mxu0 %v2062
      %2171 = vmatmul.f32.gmra.mxu0 %v2150
      %v2172 = vpop.f32.mrf.mxu0
      %v2173 = vadd.f32 0.0, %v2172
      %2174 = vmatmul.f32.gmra.mxu0 %v2153
      %v2175 = vpop.f32.mrf.mxu0
      %v2176 = vadd.f32 0.0, %v2175
      %2177 = vdwg.mxu0
      %2180 = vrot.lane.b32.xlu0 %v2173, 16
      %v2181 = vpop.permute.xlu0 %2180
      %2182 = vrot.lane.b32.xlu0 %v2176, 16
      %v2183 = vpop.permute.xlu0 %2182
      %2186 = vst.msk [vmem:[#allocation3 + $0x8] sm:$0xff] %vm1108, %v2181
      %2187 = vst.msk [vmem:[#allocation3 + $0x18] sm:$0xff] %vm1108, %v2183
      %v2188 = vld [vmem:[#allocation3] sm:$0xff]
      %v2189 = vld [vmem:[#allocation3 + $0x8] sm:$0xff]
      %v2190 = vld [vmem:[#allocation3 + $0x10] sm:$0xff]
      %v2191 = vld [vmem:[#allocation3 + $0x18] sm:$0xff]
      %v2192 = vld [vmem:[%s762] sm:$0x3]
      %v2194 = vperm.slane %v2192, 0
      %v2195 = vperm.slane %v2192, 1
      %v2198 = vadd.f32 %v2188, %v2194
      %v2199 = vadd.f32 %v2189, %v2195
      %v2200 = vadd.f32 %v2190, %v2194
      %v2201 = vadd.f32 %v2191, %v2195
      %vm2202 = vcmp.gt.f32.partialorder %v2198, 0.0
      %vm2203 = vcmp.gt.f32.partialorder %v2199, 0.0
      %vm2204 = vcmp.gt.f32.partialorder %v2200, 0.0
      %vm2205 = vcmp.gt.f32.partialorder %v2201, 0.0
      %v2206 = vmul.f32 %v2198, 0.01
      %v2207 = vmul.f32 %v2199, 0.01
      %v2208 = vmul.f32 %v2200, 0.01
      %v2209 = vmul.f32 %v2201, 0.01
      %v2210 = vsel %vm2202, %v2198, %v2206
      %v2211 = vsel %vm2203, %v2199, %v2207
      %v2212 = vsel %vm2204, %v2200, %v2208
      %v2213 = vsel %vm2205, %v2201, %v2209
      %v2214 = vld [vmem:[%s767] sm:$0xff]
      %v2215 = vld [vmem:[%s767 + $0x8] sm:$0xff]
      %v2216 = vld [vmem:[%s767 + $0x10] sm:$0xff]
      %v2217 = vld [vmem:[%s767 + $0x18] sm:$0xff]
      %v2218 = vld [vmem:[%s767 + $0x20] sm:$0xff]
      %v2219 = vld [vmem:[%s767 + $0x28] sm:$0xff]
      %v2220 = vld [vmem:[%s767 + $0x30] sm:$0xff]
      %v2221 = vld [vmem:[%s767 + $0x38] sm:$0xff]
      %v2222 = vld [vmem:[%s767 + $0x40] sm:$0xff]
      %v2223 = vld [vmem:[%s767 + $0x48] sm:$0xff]
      %v2224 = vld [vmem:[%s767 + $0x50] sm:$0xff]
      %v2225 = vld [vmem:[%s767 + $0x58] sm:$0xff]
      %v2226 = vld [vmem:[%s767 + $0x60] sm:$0xff]
      %v2227 = vld [vmem:[%s767 + $0x68] sm:$0xff]
      %v2228 = vld [vmem:[%s767 + $0x70] sm:$0xff]
      %v2229 = vld [vmem:[%s767 + $0x78] sm:$0xff]
      %v2230 = vld [vmem:[%s767 + $0x80] sm:$0xff]
      %v2231 = vld [vmem:[%s767 + $0x88] sm:$0xff]
      %v2232 = vld [vmem:[%s767 + $0x90] sm:$0xff]
      %v2233 = vld [vmem:[%s767 + $0x98] sm:$0xff]
      %v2234 = vld [vmem:[%s767 + $0xa0] sm:$0xff]
      %v2235 = vld [vmem:[%s767 + $0xa8] sm:$0xff]
      %v2236 = vld [vmem:[%s767 + $0xb0] sm:$0xff]
      %v2237 = vld [vmem:[%s767 + $0xb8] sm:$0xff]
      %v2238 = vld [vmem:[%s767 + $0xc0] sm:$0xff]
      %v2239 = vld [vmem:[%s767 + $0xc8] sm:$0xff]
      %v2240 = vld [vmem:[%s767 + $0xd0] sm:$0xff]
      %v2241 = vld [vmem:[%s767 + $0xd8] sm:$0xff]
      %v2242 = vld [vmem:[%s767 + $0xe0] sm:$0xff]
      %v2243 = vld [vmem:[%s767 + $0xe8] sm:$0xff]
      %v2244 = vld [vmem:[%s767 + $0xf0] sm:$0xff]
      %v2245 = vld [vmem:[%s767 + $0xf8] sm:$0xff]
      %v2246 = vld [vmem:[%s767 + $0x100] sm:$0xff]
      %v2247 = vld [vmem:[%s767 + $0x108] sm:$0xff]
      %v2248 = vld [vmem:[%s767 + $0x110] sm:$0xff]
      %v2249 = vld [vmem:[%s767 + $0x118] sm:$0xff]
      %v2250 = vld [vmem:[%s767 + $0x120] sm:$0xff]
      %v2251 = vld [vmem:[%s767 + $0x128] sm:$0xff]
      %v2252 = vld [vmem:[%s767 + $0x130] sm:$0xff]
      %v2253 = vld [vmem:[%s767 + $0x138] sm:$0xff]
      %v2255 = vsel %vm855, %v2211, 0
      %v2258 = vsel %vm855, %v2213, 0
      %2260 = vmatpush.msra.mxu0 %v2244
      %2261 = vmatpush.msra.mxu0 %v2242
      %2262 = vmatpush.msra.mxu0 %v2240
      %2263 = vmatpush.msra.mxu0 %v2238
      %2264 = vmatpush.msra.mxu0 %v2236
      %2265 = vmatpush.msra.mxu0 %v2234
      %2266 = vmatpush.msra.mxu0 %v2232
      %2267 = vmatpush.msra.mxu0 %v2230
      %2268 = vmatpush.msra.mxu0 %v2228
      %2269 = vmatpush.msra.mxu0 %v2226
      %2270 = vmatpush.msra.mxu0 %v2224
      %2271 = vmatpush.msra.mxu0 %v2222
      %2272 = vmatpush.msra.mxu0 %v2220
      %2273 = vmatpush.msra.mxu0 %v2218
      %2274 = vmatpush.msra.mxu0 %v2216
      %2275 = vmatpush.msra.mxu0 %v2214
      %2276 = vmatmul.f32.gmra.mxu0 %v2210
      %v2277 = vpop.f32.mrf.mxu0
      %v2278 = vadd.f32 0.0, %v2277
      %2279 = vmatmul.f32.gmra.mxu0 %v2212
      %v2280 = vpop.f32.mrf.mxu0
      %v2281 = vadd.f32 0.0, %v2280
      %2282 = vdwg.mxu0
      %2283 = vmatpush.msra.mxu0 0.0
      %2284 = vmatpush.msra.mxu0 0.0
      %2285 = vmatpush.msra.mxu0 0.0
      %2286 = vmatpush.msra.mxu0 0.0
      %2287 = vmatpush.msra.mxu0 0.0
      %2288 = vmatpush.msra.mxu0 0.0
      %2289 = vmatpush.msra.mxu0 0.0
      %2290 = vmatpush.msra.mxu0 0.0
      %2291 = vmatpush.msra.mxu0 0.0
      %2292 = vmatpush.msra.mxu0 0.0
      %2293 = vmatpush.msra.mxu0 0.0
      %2294 = vmatpush.msra.mxu0 0.0
      %2295 = vmatpush.msra.mxu0 %v2252
      %2296 = vmatpush.msra.mxu0 %v2250
      %2297 = vmatpush.msra.mxu0 %v2248
      %2298 = vmatpush.msra.mxu0 %v2246
      %2299 = vmatmul.f32.gmra.mxu0 %v2255
      %v2300 = vpop.f32.mrf.mxu0
      %v2301 = vadd.f32 %v2278, %v2300
      %2302 = vmatmul.f32.gmra.mxu0 %v2258
      %v2303 = vpop.f32.mrf.mxu0
      %v2304 = vadd.f32 %v2281, %v2303
      %2305 = vdwg.mxu0
      %2306 = vmatpush.msra.mxu0 %v2245
      %2307 = vmatpush.msra.mxu0 %v2243
      %2308 = vmatpush.msra.mxu0 %v2241
      %2309 = vmatpush.msra.mxu0 %v2239
      %2310 = vmatpush.msra.mxu0 %v2237
      %2311 = vmatpush.msra.mxu0 %v2235
      %2312 = vmatpush.msra.mxu0 %v2233
      %2313 = vmatpush.msra.mxu0 %v2231
      %2314 = vmatpush.msra.mxu0 %v2229
      %2315 = vmatpush.msra.mxu0 %v2227
      %2316 = vmatpush.msra.mxu0 %v2225
      %2317 = vmatpush.msra.mxu0 %v2223
      %2318 = vmatpush.msra.mxu0 %v2221
      %2319 = vmatpush.msra.mxu0 %v2219
      %2320 = vmatpush.msra.mxu0 %v2217
      %2321 = vmatpush.msra.mxu0 %v2215
      %2322 = vmatmul.f32.gmra.mxu0 %v2210
      %v2323 = vpop.f32.mrf.mxu0
      %v2324 = vadd.f32 0.0, %v2323
      %2325 = vmatmul.f32.gmra.mxu0 %v2212
      %v2326 = vpop.f32.mrf.mxu0
      %v2327 = vadd.f32 0.0, %v2326
      %2328 = vdwg.mxu0
      %2329 = vmatpush.msra.mxu0 0.0
      %2330 = vmatpush.msra.mxu0 0.0
      %2331 = vmatpush.msra.mxu0 0.0
      %2332 = vmatpush.msra.mxu0 0.0
      %2333 = vmatpush.msra.mxu0 0.0
      %2334 = vmatpush.msra.mxu0 0.0
      %2335 = vmatpush.msra.mxu0 0.0
      %2336 = vmatpush.msra.mxu0 0.0
      %2337 = vmatpush.msra.mxu0 0.0
      %2338 = vmatpush.msra.mxu0 0.0
      %2339 = vmatpush.msra.mxu0 0.0
      %2340 = vmatpush.msra.mxu0 0.0
      %2341 = vmatpush.msra.mxu0 %v2253
      %2342 = vmatpush.msra.mxu0 %v2251
      %2343 = vmatpush.msra.mxu0 %v2249
      %2344 = vmatpush.msra.mxu0 %v2247
      %2345 = vmatmul.f32.gmra.mxu0 %v2255
      %v2346 = vpop.f32.mrf.mxu0
      %v2347 = vadd.f32 %v2324, %v2346
      %2348 = vmatmul.f32.gmra.mxu0 %v2258
      %v2349 = vpop.f32.mrf.mxu0
      %v2350 = vadd.f32 %v2327, %v2349
      %2351 = vdwg.mxu0
      %v2352 = vld [vmem:[%s732] sm:$0xff]
      %v2353 = vld [vmem:[%s732 + $0x8] sm:$0xff]
      %v2354 = vld [vmem:[%s771] sm:$0x3]
      %v2356 = vperm.slane %v2354, 0
      %v2357 = vperm.slane %v2354, 1
      %v2361 = vsel %vm801, %v2352, 0
      %v2364 = vsel %vm801, %v2353, 0
      %2366 = vmatpush.msra.mxu0 0.0
      %2367 = vmatpush.msra.mxu0 0.0
      %2368 = vmatpush.msra.mxu0 0.0
      %2369 = vmatpush.msra.mxu0 0.0
      %2370 = vmatpush.msra.mxu0 0.0
      %2371 = vmatpush.msra.mxu0 0.0
      %2372 = vmatpush.msra.mxu0 0.0
      %2373 = vmatpush.msra.mxu0 0.0
      %2374 = vmatpush.msra.mxu0 0.0
      %2375 = vmatpush.msra.mxu0 0.0
      %2376 = vmatpush.msra.mxu0 0.0
      %2377 = vmatpush.msra.mxu0 0.0
      %2378 = vmatpush.msra.mxu0 0.0
      %2379 = vmatpush.msra.mxu0 0.0
      %2380 = vmatpush.msra.mxu0 %v2304
      %2381 = vmatpush.msra.mxu0 %v2301
      %2382 = vmatmul.f32.gmra.mxu0 %v2361
      %v2383 = vpop.f32.mrf.mxu0
      %v2384 = vadd.f32 %v2356, %v2383
      %2385 = vmatmul.f32.gmra.mxu0 %v2364
      %v2386 = vpop.f32.mrf.mxu0
      %v2387 = vadd.f32 %v2356, %v2386
      %2388 = vdwg.mxu0
      %2389 = vmatpush.msra.mxu0 0.0
      %2390 = vmatpush.msra.mxu0 0.0
      %2391 = vmatpush.msra.mxu0 0.0
      %2392 = vmatpush.msra.mxu0 0.0
      %2393 = vmatpush.msra.mxu0 0.0
      %2394 = vmatpush.msra.mxu0 0.0
      %2395 = vmatpush.msra.mxu0 0.0
      %2396 = vmatpush.msra.mxu0 0.0
      %2397 = vmatpush.msra.mxu0 0.0
      %2398 = vmatpush.msra.mxu0 0.0
      %2399 = vmatpush.msra.mxu0 0.0
      %2400 = vmatpush.msra.mxu0 0.0
      %2401 = vmatpush.msra.mxu0 0.0
      %2402 = vmatpush.msra.mxu0 0.0
      %2403 = vmatpush.msra.mxu0 %v2350
      %2404 = vmatpush.msra.mxu0 %v2347
      %2405 = vmatmul.f32.gmra.mxu0 %v2361
      %v2406 = vpop.f32.mrf.mxu0
      %v2407 = vadd.f32 %v2357, %v2406
      %2408 = vmatmul.f32.gmra.mxu0 %v2364
      %v2409 = vpop.f32.mrf.mxu0
      %v2410 = vadd.f32 %v2357, %v2409
      %2411 = vdwg.mxu0
      %vm2412 = vcmp.gt.f32.partialorder %v2384, 0.0
      %vm2413 = vcmp.gt.f32.partialorder %v2407, 0.0
      %vm2414 = vcmp.gt.f32.partialorder %v2387, 0.0
      %vm2415 = vcmp.gt.f32.partialorder %v2410, 0.0
      %v2416 = vmul.f32 %v2384, 0.01
      %v2417 = vmul.f32 %v2407, 0.01
      %v2418 = vmul.f32 %v2387, 0.01
      %v2419 = vmul.f32 %v2410, 0.01
      %v2420 = vsel %vm2412, %v2384, %v2416
      %v2421 = vsel %vm2413, %v2407, %v2417
      %v2422 = vsel %vm2414, %v2387, %v2418
      %v2423 = vsel %vm2415, %v2410, %v2419
      %v2424 = vld [vmem:[%s736] sm:$0x3]
      %v2426 = vsel %vm801, %v2424, 0
      %2428 = vmatpush.msra.mxu0 0.0
      %2429 = vmatpush.msra.mxu0 0.0
      %2430 = vmatpush.msra.mxu0 0.0
      %2431 = vmatpush.msra.mxu0 0.0
      %2432 = vmatpush.msra.mxu0 0.0
      %2433 = vmatpush.msra.mxu0 0.0
      %2434 = vmatpush.msra.mxu0 0.0
      %2435 = vmatpush.msra.mxu0 0.0
      %2436 = vmatpush.msra.mxu0 0.0
      %2437 = vmatpush.msra.mxu0 0.0
      %2438 = vmatpush.msra.mxu0 0.0
      %2439 = vmatpush.msra.mxu0 0.0
      %2440 = vmatpush.msra.mxu0 0.0
      %2441 = vmatpush.msra.mxu0 0.0
      %2442 = vmatpush.msra.mxu0 %v2422
      %2443 = vmatpush.msra.mxu0 %v2420
      %2444 = vmatmul.f32.gmra.mxu0 %v2426
      %v2445 = vpop.f32.mrf.mxu0
      %v2446 = vadd.f32 0.0, %v2445
      %2447 = vdwg.mxu0
      %2448 = vmatpush.msra.mxu0 0.0
      %2449 = vmatpush.msra.mxu0 0.0
      %2450 = vmatpush.msra.mxu0 0.0
      %2451 = vmatpush.msra.mxu0 0.0
      %2452 = vmatpush.msra.mxu0 0.0
      %2453 = vmatpush.msra.mxu0 0.0
      %2454 = vmatpush.msra.mxu0 0.0
      %2455 = vmatpush.msra.mxu0 0.0
      %2456 = vmatpush.msra.mxu0 0.0
      %2457 = vmatpush.msra.mxu0 0.0
      %2458 = vmatpush.msra.mxu0 0.0
      %2459 = vmatpush.msra.mxu0 0.0
      %2460 = vmatpush.msra.mxu0 0.0
      %2461 = vmatpush.msra.mxu0 0.0
      %2462 = vmatpush.msra.mxu0 %v2423
      %2463 = vmatpush.msra.mxu0 %v2421
      %2464 = vmatmul.f32.gmra.mxu0 %v2426
      %v2465 = vpop.f32.mrf.mxu0
      %v2466 = vadd.f32 0.0, %v2465
      %2467 = vdwg.mxu0
      %v2468 = vld [vmem:[%s745] sm:$0x3]
      %2470 = vset.pattern.permute.xlu0 0
      %2471 = vperm.xlu0 %2470, %v2468
      %v2472 = vpop.permute.xlu0 %2471
      %v2474 = vmul.f32 %v2446, %v2472
      %v2475 = vmul.f32 %v2466, %v2472
      %v2478 = vrot.slane %v2475, 6
      %vm2479 = vcmask 1041408
      %v2480 = vsel %vm2479, %v2474, %v2478
      %2481 = vrot.lane.b32.xlu0 %v2480, 32
      %v2482 = vpop.permute.xlu0 %2481
      %v2483 = vrot.slane %v2482, 6
      %v2484 = vsel %vm855, %v2483, %v2482
      %vm2486 = vcmask 1041664
      %vm2487 = vcmask 519170
      %vm2488 = vmor %vm2487, %vm2486
      %2489 = vst.msk [vmem:[#allocation4 + $0x2] sm:$0xf] %vm2488, %v2484
      %v2490 = vld [vmem:[%s741] sm:$0xff]
      %v2491 = vld [vmem:[%s741 + $0x8] sm:$0xff]
      %vm2492 = vcmp.gt.f32.partialorder %v2490, 0.0
      %vm2493 = vcmp.gt.f32.partialorder %v2491, 0.0
      %v2494 = vsel %vm2492, 1, 0
      %v2495 = vsel %vm2493, 1, 0
      %2496 = vset.pattern.permute.xlu0 0
      %2497 = vperm.xlu0 %2496, %v2494
      %v2498 = vpop.permute.xlu0 %2497
      %2499 = vset.pattern.permute.xlu0 0
      %2500 = vperm.xlu0 %2499, %v2495
      %v2501 = vpop.permute.xlu0 %2500
      %vm2502 = vcmp.eq.s32.totalorder %v2498, 1
      %vm2503 = vcmp.eq.s32.totalorder %v2501, 1
      %v2504 = vsel %vm2502, %v2420, -1e+30
      %v2505 = vsel %vm2502, %v2421, -1e+30
      %v2506 = vsel %vm2503, %v2422, -1e+30
      %v2507 = vsel %vm2503, %v2423, -1e+30
      %v2508 = vmax.f32 %v2504, %v2506
      %v2509 = vrot.slane %v2508, 4
      %v2510 = vmax.f32 %v2508, %v2509
      %v2511 = vrot.slane %v2510, 2
      %v2512 = vmax.f32 %v2510, %v2511
      %v2513 = vrot.slane %v2512, 1
      %v2514 = vmax.f32 %v2512, %v2513
      %v2515 = vsel %vm855, %v2505, -inf
      %v2516 = vsel %vm855, %v2507, -inf
      %v2517 = vmax.f32 %v2515, %v2516
      %v2518 = vrot.slane %v2517, 4
      %v2519 = vmax.f32 %v2517, %v2518
      %v2520 = vrot.slane %v2519, 2
      %v2521 = vmax.f32 %v2519, %v2520
      %v2522 = vrot.slane %v2521, 1
      %v2523 = vmax.f32 %v2521, %v2522
      %v2526 = vrot.slane %v2523, 7
      %vm2527 = vcmask 1040384
      %v2528 = vsel %vm2527, %v2514, %v2526
      %v2530 = vlaneseq
      %vm2531 = vcmp.ge.s32.totalorder %v2530, 0
      %vm2532 = vcmp.lt.s32.totalorder %v2530, 160
      %vm2533 = vmand %vm2531, %vm2532
      %2534 = vst.msk [vmem:[#allocation4] ss:$2 sm:$0x3] %vm2533, %v2528
      %v2535 = vld [vmem:[%s741] sm:$0xff]
      %v2536 = vld [vmem:[%s741 + $0x8] sm:$0xff]
      %vm2537 = vcmp.gt.f32.partialorder %v2535, 0.0
      %vm2538 = vcmp.gt.f32.partialorder %v2536, 0.0
      %v2539 = vsel %vm2537, 1, 0
      %v2540 = vsel %vm2538, 1, 0
      %2541 = vset.pattern.permute.xlu0 1
      %2542 = vperm.xlu0 %2541, %v2539
      %v2543 = vpop.permute.xlu0 %2542
      %2544 = vset.pattern.permute.xlu0 1
      %2545 = vperm.xlu0 %2544, %v2540
      %v2546 = vpop.permute.xlu0 %2545
      %vm2547 = vcmp.eq.s32.totalorder %v2543, 1
      %vm2548 = vcmp.eq.s32.totalorder %v2546, 1
      %v2549 = vsel %vm2547, %v2420, -1e+30
      %v2550 = vsel %vm2547, %v2421, -1e+30
      %v2551 = vsel %vm2548, %v2422, -1e+30
      %v2552 = vsel %vm2548, %v2423, -1e+30
      %v2553 = vmax.f32 %v2549, %v2551
      %v2554 = vrot.slane %v2553, 4
      %v2555 = vmax.f32 %v2553, %v2554
      %v2556 = vrot.slane %v2555, 2
      %v2557 = vmax.f32 %v2555, %v2556
      %v2558 = vrot.slane %v2557, 1
      %v2559 = vmax.f32 %v2557, %v2558
      %v2560 = vsel %vm855, %v2550, -inf
      %v2561 = vsel %vm855, %v2552, -inf
      %v2562 = vmax.f32 %v2560, %v2561
      %v2563 = vrot.slane %v2562, 4
      %v2564 = vmax.f32 %v2562, %v2563
      %v2565 = vrot.slane %v2564, 2
      %v2566 = vmax.f32 %v2564, %v2565
      %v2567 = vrot.slane %v2566, 1
      %v2568 = vmax.f32 %v2566, %v2567
      %v2571 = vrot.slane %v2568, 7
      %v2572 = vsel %vm2527, %v2559, %v2571
      %s2574 = scalar_lea.vmem [#allocation4], 1
      %2575 = vst.msk [vmem:[%s2574] ss:$2 sm:$0x3] %vm2533, %v2572
      %v2576 = vld [vmem:[#allocation4] sm:$0x3f]
      %v2577 = vld [vmem:[%s776] sm:$0xff]
      %v2578 = vld [vmem:[%s776 + $0x8] sm:$0xff]
      %v2579 = vld [vmem:[%s776 + $0x10] sm:$0xff]
      %v2580 = vld [vmem:[%s776 + $0x18] sm:$0xff]
      %v2581 = vld [vmem:[%s776 + $0x20] sm:$0xff]
      %v2582 = vld [vmem:[%s776 + $0x28] sm:$0xff]
      %v2583 = vld [vmem:[%s776 + $0x30] sm:$0xff]
      %v2584 = vld [vmem:[%s776 + $0x38] sm:$0xff]
      %v2585 = vld [vmem:[%s776 + $0x40] sm:$0xff]
      %v2586 = vld [vmem:[%s776 + $0x48] sm:$0xff]
      %v2587 = vld [vmem:[%s776 + $0x50] sm:$0xff]
      %v2588 = vld [vmem:[%s776 + $0x58] sm:$0xff]
      %v2589 = vld [vmem:[%s776 + $0x60] sm:$0xff]
      %v2590 = vld [vmem:[%s776 + $0x68] sm:$0xff]
      %v2591 = vld [vmem:[%s776 + $0x70] sm:$0xff]
      %v2592 = vld [vmem:[%s776 + $0x78] sm:$0xff]
      %v2593 = vld [vmem:[%s776 + $0x80] sm:$0xff]
      %v2594 = vld [vmem:[%s776 + $0x88] sm:$0xff]
      %v2595 = vld [vmem:[%s776 + $0x90] sm:$0xff]
      %v2596 = vld [vmem:[%s776 + $0x98] sm:$0xff]
      %v2597 = vld [vmem:[%s776 + $0xa0] sm:$0xff]
      %v2598 = vld [vmem:[%s776 + $0xa8] sm:$0xff]
      %v2599 = vld [vmem:[%s776 + $0xb0] sm:$0xff]
      %v2600 = vld [vmem:[%s776 + $0xb8] sm:$0xff]
      %v2601 = vld [vmem:[%s776 + $0xc0] sm:$0xff]
      %v2602 = vld [vmem:[%s776 + $0xc8] sm:$0xff]
      %v2603 = vld [vmem:[%s776 + $0xd0] sm:$0xff]
      %v2604 = vld [vmem:[%s776 + $0xd8] sm:$0xff]
      %v2605 = vld [vmem:[%s776 + $0xe0] sm:$0xff]
      %v2606 = vld [vmem:[%s776 + $0xe8] sm:$0xff]
      %v2607 = vld [vmem:[%s776 + $0xf0] sm:$0xff]
      %v2608 = vld [vmem:[%s776 + $0xf8] sm:$0xff]
      %v2609 = vld [vmem:[%s776 + $0x100] sm:$0xff]
      %v2610 = vld [vmem:[%s776 + $0x108] sm:$0xff]
      %v2611 = vld [vmem:[%s776 + $0x110] sm:$0xff]
      %v2612 = vld [vmem:[%s776 + $0x118] sm:$0xff]
      %v2613 = vld [vmem:[%s776 + $0x120] sm:$0xff]
      %v2614 = vld [vmem:[%s776 + $0x128] sm:$0xff]
      %v2615 = vld [vmem:[%s776 + $0x130] sm:$0xff]
      %v2616 = vld [vmem:[%s776 + $0x138] sm:$0xff]
      %v2617 = vld [vmem:[%s776 + $0x140] sm:$0xff]
      %v2618 = vld [vmem:[%s776 + $0x148] sm:$0xff]
      %v2619 = vld [vmem:[%s776 + $0x150] sm:$0xff]
      %v2620 = vld [vmem:[%s776 + $0x158] sm:$0xff]
      %v2621 = vld [vmem:[%s776 + $0x160] sm:$0xff]
      %v2622 = vld [vmem:[%s776 + $0x168] sm:$0xff]
      %v2623 = vld [vmem:[%s776 + $0x170] sm:$0xff]
      %v2624 = vld [vmem:[%s776 + $0x178] sm:$0xff]
      %v2625 = vld [vmem:[%s776 + $0x180] sm:$0xff]
      %v2626 = vld [vmem:[%s776 + $0x188] sm:$0xff]
      %v2627 = vld [vmem:[%s776 + $0x190] sm:$0xff]
      %v2628 = vld [vmem:[%s776 + $0x198] sm:$0xff]
      %v2629 = vld [vmem:[%s776 + $0x1a0] sm:$0xff]
      %v2630 = vld [vmem:[%s776 + $0x1a8] sm:$0xff]
      %v2631 = vld [vmem:[%s776 + $0x1b0] sm:$0xff]
      %v2632 = vld [vmem:[%s776 + $0x1b8] sm:$0xff]
      %v2633 = vld [vmem:[%s776 + $0x1c0] sm:$0xff]
      %v2634 = vld [vmem:[%s776 + $0x1c8] sm:$0xff]
      %v2635 = vld [vmem:[%s776 + $0x1d0] sm:$0xff]
      %v2636 = vld [vmem:[%s776 + $0x1d8] sm:$0xff]
      %v2637 = vld [vmem:[%s776 + $0x1e0] sm:$0xff]
      %v2638 = vld [vmem:[%s776 + $0x1e8] sm:$0xff]
      %v2639 = vld [vmem:[%s776 + $0x1f0] sm:$0xff]
      %v2640 = vld [vmem:[%s776 + $0x1f8] sm:$0xff]
      %v2641 = vld [vmem:[%s776 + $0x200] sm:$0xff]
      %v2642 = vld [vmem:[%s776 + $0x208] sm:$0xff]
      %v2643 = vld [vmem:[%s776 + $0x210] sm:$0xff]
      %v2644 = vld [vmem:[%s776 + $0x218] sm:$0xff]
      %v2645 = vld [vmem:[%s776 + $0x220] sm:$0xff]
      %v2646 = vld [vmem:[%s776 + $0x228] sm:$0xff]
      %v2647 = vld [vmem:[%s776 + $0x230] sm:$0xff]
      %v2648 = vld [vmem:[%s776 + $0x238] sm:$0xff]
      %v2649 = vld [vmem:[%s776 + $0x240] sm:$0xff]
      %v2650 = vld [vmem:[%s776 + $0x248] sm:$0xff]
      %v2651 = vld [vmem:[%s776 + $0x250] sm:$0xff]
      %v2652 = vld [vmem:[%s776 + $0x258] sm:$0xff]
      %v2653 = vld [vmem:[%s776 + $0x260] sm:$0xff]
      %v2654 = vld [vmem:[%s776 + $0x268] sm:$0xff]
      %v2655 = vld [vmem:[%s776 + $0x270] sm:$0xff]
      %v2656 = vld [vmem:[%s776 + $0x278] sm:$0xff]
      %v2657 = vld [vmem:[%s776 + $0x280] sm:$0xff]
      %v2658 = vld [vmem:[%s776 + $0x288] sm:$0xff]
      %v2659 = vld [vmem:[%s776 + $0x290] sm:$0xff]
      %v2660 = vld [vmem:[%s776 + $0x298] sm:$0xff]
      %v2661 = vld [vmem:[%s776 + $0x2a0] sm:$0xff]
      %v2662 = vld [vmem:[%s776 + $0x2a8] sm:$0xff]
      %v2663 = vld [vmem:[%s776 + $0x2b0] sm:$0xff]
      %v2664 = vld [vmem:[%s776 + $0x2b8] sm:$0xff]
      %v2665 = vld [vmem:[%s776 + $0x2c0] sm:$0xff]
      %v2666 = vld [vmem:[%s776 + $0x2c8] sm:$0xff]
      %v2667 = vld [vmem:[%s776 + $0x2d0] sm:$0xff]
      %v2668 = vld [vmem:[%s776 + $0x2d8] sm:$0xff]
      %v2669 = vld [vmem:[%s776 + $0x2e0] sm:$0xff]
      %v2670 = vld [vmem:[%s776 + $0x2e8] sm:$0xff]
      %v2671 = vld [vmem:[%s776 + $0x2f0] sm:$0xff]
      %v2672 = vld [vmem:[%s776 + $0x2f8] sm:$0xff]
      %v2673 = vld [vmem:[%s776 + $0x300] sm:$0xff]
      %v2674 = vld [vmem:[%s776 + $0x308] sm:$0xff]
      %v2675 = vld [vmem:[%s776 + $0x310] sm:$0xff]
      %v2676 = vld [vmem:[%s776 + $0x318] sm:$0xff]
      %v2677 = vld [vmem:[%s776 + $0x320] sm:$0xff]
      %v2678 = vld [vmem:[%s776 + $0x328] sm:$0xff]
      %v2679 = vld [vmem:[%s776 + $0x330] sm:$0xff]
      %v2680 = vld [vmem:[%s776 + $0x338] sm:$0xff]
      %v2681 = vld [vmem:[%s776 + $0x340] sm:$0xff]
      %v2682 = vld [vmem:[%s776 + $0x348] sm:$0xff]
      %v2683 = vld [vmem:[%s776 + $0x350] sm:$0xff]
      %v2684 = vld [vmem:[%s776 + $0x358] sm:$0xff]
      %v2685 = vld [vmem:[%s776 + $0x360] sm:$0xff]
      %v2686 = vld [vmem:[%s776 + $0x368] sm:$0xff]
      %v2687 = vld [vmem:[%s776 + $0x370] sm:$0xff]
      %v2688 = vld [vmem:[%s776 + $0x378] sm:$0xff]
      %v2689 = vld [vmem:[%s776 + $0x380] sm:$0xff]
      %v2690 = vld [vmem:[%s776 + $0x388] sm:$0xff]
      %v2691 = vld [vmem:[%s776 + $0x390] sm:$0xff]
      %v2692 = vld [vmem:[%s776 + $0x398] sm:$0xff]
      %v2693 = vld [vmem:[%s776 + $0x3a0] sm:$0xff]
      %v2694 = vld [vmem:[%s776 + $0x3a8] sm:$0xff]
      %v2695 = vld [vmem:[%s776 + $0x3b0] sm:$0xff]
      %v2696 = vld [vmem:[%s776 + $0x3b8] sm:$0xff]
      %v2697 = vld [vmem:[%s776 + $0x3c0] sm:$0xff]
      %v2698 = vld [vmem:[%s776 + $0x3c8] sm:$0xff]
      %v2699 = vld [vmem:[%s776 + $0x3d0] sm:$0xff]
      %v2700 = vld [vmem:[%s776 + $0x3d8] sm:$0xff]
      %v2701 = vld [vmem:[%s776 + $0x3e0] sm:$0xff]
      %v2702 = vld [vmem:[%s776 + $0x3e8] sm:$0xff]
      %v2703 = vld [vmem:[%s776 + $0x3f0] sm:$0xff]
      %v2704 = vld [vmem:[%s776 + $0x3f8] sm:$0xff]
      %v2705 = vld [vmem:[%s776 + $0x400] sm:$0xff]
      %v2706 = vld [vmem:[%s776 + $0x408] sm:$0xff]
      %v2707 = vld [vmem:[%s776 + $0x410] sm:$0xff]
      %v2708 = vld [vmem:[%s776 + $0x418] sm:$0xff]
      %v2709 = vld [vmem:[%s776 + $0x420] sm:$0xff]
      %v2710 = vld [vmem:[%s776 + $0x428] sm:$0xff]
      %v2711 = vld [vmem:[%s776 + $0x430] sm:$0xff]
      %v2712 = vld [vmem:[%s776 + $0x438] sm:$0xff]
      %v2713 = vld [vmem:[%s776 + $0x440] sm:$0xff]
      %v2714 = vld [vmem:[%s776 + $0x448] sm:$0xff]
      %v2715 = vld [vmem:[%s776 + $0x450] sm:$0xff]
      %v2716 = vld [vmem:[%s776 + $0x458] sm:$0xff]
      %v2717 = vld [vmem:[%s776 + $0x460] sm:$0xff]
      %v2718 = vld [vmem:[%s776 + $0x468] sm:$0xff]
      %v2719 = vld [vmem:[%s776 + $0x470] sm:$0xff]
      %v2720 = vld [vmem:[%s776 + $0x478] sm:$0xff]
      %v2721 = vld [vmem:[%s776 + $0x480] sm:$0xff]
      %v2722 = vld [vmem:[%s776 + $0x488] sm:$0xff]
      %v2723 = vld [vmem:[%s776 + $0x490] sm:$0xff]
      %v2724 = vld [vmem:[%s776 + $0x498] sm:$0xff]
      %v2725 = vld [vmem:[%s776 + $0x4a0] sm:$0xff]
      %v2726 = vld [vmem:[%s776 + $0x4a8] sm:$0xff]
      %v2727 = vld [vmem:[%s776 + $0x4b0] sm:$0xff]
      %v2728 = vld [vmem:[%s776 + $0x4b8] sm:$0xff]
      %v2729 = vld [vmem:[%s776 + $0x4c0] sm:$0xff]
      %v2730 = vld [vmem:[%s776 + $0x4c8] sm:$0xff]
      %v2731 = vld [vmem:[%s776 + $0x4d0] sm:$0xff]
      %v2732 = vld [vmem:[%s776 + $0x4d8] sm:$0xff]
      %v2733 = vld [vmem:[%s776 + $0x4e0] sm:$0xff]
      %v2734 = vld [vmem:[%s776 + $0x4e8] sm:$0xff]
      %v2735 = vld [vmem:[%s776 + $0x4f0] sm:$0xff]
      %v2736 = vld [vmem:[%s776 + $0x4f8] sm:$0xff]
      %v2737 = vld [vmem:[%s776 + $0x500] sm:$0xff]
      %v2738 = vld [vmem:[%s776 + $0x508] sm:$0xff]
      %v2739 = vld [vmem:[%s776 + $0x510] sm:$0xff]
      %v2740 = vld [vmem:[%s776 + $0x518] sm:$0xff]
      %v2741 = vld [vmem:[%s776 + $0x520] sm:$0xff]
      %v2742 = vld [vmem:[%s776 + $0x528] sm:$0xff]
      %v2743 = vld [vmem:[%s776 + $0x530] sm:$0xff]
      %v2744 = vld [vmem:[%s776 + $0x538] sm:$0xff]
      %v2745 = vld [vmem:[%s776 + $0x540] sm:$0xff]
      %v2746 = vld [vmem:[%s776 + $0x548] sm:$0xff]
      %v2747 = vld [vmem:[%s776 + $0x550] sm:$0xff]
      %v2748 = vld [vmem:[%s776 + $0x558] sm:$0xff]
      %v2749 = vld [vmem:[%s776 + $0x560] sm:$0xff]
      %v2750 = vld [vmem:[%s776 + $0x568] sm:$0xff]
      %v2751 = vld [vmem:[%s776 + $0x570] sm:$0xff]
      %v2752 = vld [vmem:[%s776 + $0x578] sm:$0xff]
      %v2753 = vld [vmem:[%s776 + $0x580] sm:$0xff]
      %v2754 = vld [vmem:[%s776 + $0x588] sm:$0xff]
      %v2755 = vld [vmem:[%s776 + $0x590] sm:$0xff]
      %v2756 = vld [vmem:[%s776 + $0x598] sm:$0xff]
      %v2757 = vld [vmem:[%s776 + $0x5a0] sm:$0xff]
      %v2758 = vld [vmem:[%s776 + $0x5a8] sm:$0xff]
      %v2759 = vld [vmem:[%s776 + $0x5b0] sm:$0xff]
      %v2760 = vld [vmem:[%s776 + $0x5b8] sm:$0xff]
      %v2761 = vld [vmem:[%s776 + $0x5c0] sm:$0xff]
      %v2762 = vld [vmem:[%s776 + $0x5c8] sm:$0xff]
      %v2763 = vld [vmem:[%s776 + $0x5d0] sm:$0xff]
      %v2764 = vld [vmem:[%s776 + $0x5d8] sm:$0xff]
      %v2765 = vld [vmem:[%s776 + $0x5e0] sm:$0xff]
      %v2766 = vld [vmem:[%s776 + $0x5e8] sm:$0xff]
      %v2767 = vld [vmem:[%s776 + $0x5f0] sm:$0xff]
      %v2768 = vld [vmem:[%s776 + $0x5f8] sm:$0xff]
      %v2769 = vld [vmem:[%s776 + $0x600] sm:$0xff]
      %v2770 = vld [vmem:[%s776 + $0x608] sm:$0xff]
      %v2771 = vld [vmem:[%s776 + $0x610] sm:$0xff]
      %v2772 = vld [vmem:[%s776 + $0x618] sm:$0xff]
      %v2773 = vld [vmem:[%s776 + $0x620] sm:$0xff]
      %v2774 = vld [vmem:[%s776 + $0x628] sm:$0xff]
      %v2775 = vld [vmem:[%s776 + $0x630] sm:$0xff]
      %v2776 = vld [vmem:[%s776 + $0x638] sm:$0xff]
      %v2777 = vld [vmem:[%s776 + $0x640] sm:$0xff]
      %v2778 = vld [vmem:[%s776 + $0x648] sm:$0xff]
      %v2779 = vld [vmem:[%s776 + $0x650] sm:$0xff]
      %v2780 = vld [vmem:[%s776 + $0x658] sm:$0xff]
      %v2781 = vld [vmem:[%s776 + $0x660] sm:$0xff]
      %v2782 = vld [vmem:[%s776 + $0x668] sm:$0xff]
      %v2783 = vld [vmem:[%s776 + $0x670] sm:$0xff]
      %v2784 = vld [vmem:[%s776 + $0x678] sm:$0xff]
      %v2785 = vld [vmem:[%s776 + $0x680] sm:$0xff]
      %v2786 = vld [vmem:[%s776 + $0x688] sm:$0xff]
      %v2787 = vld [vmem:[%s776 + $0x690] sm:$0xff]
      %v2788 = vld [vmem:[%s776 + $0x698] sm:$0xff]
      %v2789 = vld [vmem:[%s776 + $0x6a0] sm:$0xff]
      %v2790 = vld [vmem:[%s776 + $0x6a8] sm:$0xff]
      %v2791 = vld [vmem:[%s776 + $0x6b0] sm:$0xff]
      %v2792 = vld [vmem:[%s776 + $0x6b8] sm:$0xff]
      %v2793 = vld [vmem:[%s776 + $0x6c0] sm:$0xff]
      %v2794 = vld [vmem:[%s776 + $0x6c8] sm:$0xff]
      %v2795 = vld [vmem:[%s776 + $0x6d0] sm:$0xff]
      %v2796 = vld [vmem:[%s776 + $0x6d8] sm:$0xff]
      %v2797 = vld [vmem:[%s776 + $0x6e0] sm:$0xff]
      %v2798 = vld [vmem:[%s776 + $0x6e8] sm:$0xff]
      %v2799 = vld [vmem:[%s776 + $0x6f0] sm:$0xff]
      %v2800 = vld [vmem:[%s776 + $0x6f8] sm:$0xff]
      %v2801 = vld [vmem:[%s776 + $0x700] sm:$0xff]
      %v2802 = vld [vmem:[%s776 + $0x708] sm:$0xff]
      %v2803 = vld [vmem:[%s776 + $0x710] sm:$0xff]
      %v2804 = vld [vmem:[%s776 + $0x718] sm:$0xff]
      %v2805 = vld [vmem:[%s776 + $0x720] sm:$0xff]
      %v2806 = vld [vmem:[%s776 + $0x728] sm:$0xff]
      %v2807 = vld [vmem:[%s776 + $0x730] sm:$0xff]
      %v2808 = vld [vmem:[%s776 + $0x738] sm:$0xff]
      %v2809 = vld [vmem:[%s776 + $0x740] sm:$0xff]
      %v2810 = vld [vmem:[%s776 + $0x748] sm:$0xff]
      %v2811 = vld [vmem:[%s776 + $0x750] sm:$0xff]
      %v2812 = vld [vmem:[%s776 + $0x758] sm:$0xff]
      %v2813 = vld [vmem:[%s776 + $0x760] sm:$0xff]
      %v2814 = vld [vmem:[%s776 + $0x768] sm:$0xff]
      %v2815 = vld [vmem:[%s776 + $0x770] sm:$0xff]
      %v2816 = vld [vmem:[%s776 + $0x778] sm:$0xff]
      %v2817 = vld [vmem:[%s776 + $0x780] sm:$0xff]
      %v2818 = vld [vmem:[%s776 + $0x788] sm:$0xff]
      %v2819 = vld [vmem:[%s776 + $0x790] sm:$0xff]
      %v2820 = vld [vmem:[%s776 + $0x798] sm:$0xff]
      %v2821 = vld [vmem:[%s776 + $0x7a0] sm:$0xff]
      %v2822 = vld [vmem:[%s776 + $0x7a8] sm:$0xff]
      %v2823 = vld [vmem:[%s776 + $0x7b0] sm:$0xff]
      %v2824 = vld [vmem:[%s776 + $0x7b8] sm:$0xff]
      %v2825 = vld [vmem:[%s776 + $0x7c0] sm:$0xff]
      %v2826 = vld [vmem:[%s776 + $0x7c8] sm:$0xff]
      %v2827 = vld [vmem:[%s776 + $0x7d0] sm:$0xff]
      %v2828 = vld [vmem:[%s776 + $0x7d8] sm:$0xff]
      %v2829 = vld [vmem:[%s776 + $0x7e0] sm:$0xff]
      %v2830 = vld [vmem:[%s776 + $0x7e8] sm:$0xff]
      %v2831 = vld [vmem:[%s776 + $0x7f0] sm:$0xff]
      %v2832 = vld [vmem:[%s776 + $0x7f8] sm:$0xff]
      %v2833 = vld [vmem:[%s776 + $0x800] sm:$0xff]
      %v2834 = vld [vmem:[%s776 + $0x808] sm:$0xff]
      %v2835 = vld [vmem:[%s776 + $0x810] sm:$0xff]
      %v2836 = vld [vmem:[%s776 + $0x818] sm:$0xff]
      %v2837 = vld [vmem:[%s776 + $0x820] sm:$0xff]
      %v2838 = vld [vmem:[%s776 + $0x828] sm:$0xff]
      %v2839 = vld [vmem:[%s776 + $0x830] sm:$0xff]
      %v2840 = vld [vmem:[%s776 + $0x838] sm:$0xff]
      %v2841 = vld [vmem:[%s776 + $0x840] sm:$0xff]
      %v2842 = vld [vmem:[%s776 + $0x848] sm:$0xff]
      %v2843 = vld [vmem:[%s776 + $0x850] sm:$0xff]
      %v2844 = vld [vmem:[%s776 + $0x858] sm:$0xff]
      %v2845 = vld [vmem:[%s776 + $0x860] sm:$0xff]
      %v2846 = vld [vmem:[%s776 + $0x868] sm:$0xff]
      %v2847 = vld [vmem:[%s776 + $0x870] sm:$0xff]
      %v2848 = vld [vmem:[%s776 + $0x878] sm:$0xff]
      %v2849 = vld [vmem:[%s776 + $0x880] sm:$0xff]
      %v2850 = vld [vmem:[%s776 + $0x888] sm:$0xff]
      %v2851 = vld [vmem:[%s776 + $0x890] sm:$0xff]
      %v2852 = vld [vmem:[%s776 + $0x898] sm:$0xff]
      %v2853 = vld [vmem:[%s776 + $0x8a0] sm:$0xff]
      %v2854 = vld [vmem:[%s776 + $0x8a8] sm:$0xff]
      %v2855 = vld [vmem:[%s776 + $0x8b0] sm:$0xff]
      %v2856 = vld [vmem:[%s776 + $0x8b8] sm:$0xff]
      %v2857 = vld [vmem:[%s776 + $0x8c0] sm:$0xff]
      %v2858 = vld [vmem:[%s776 + $0x8c8] sm:$0xff]
      %v2859 = vld [vmem:[%s776 + $0x8d0] sm:$0xff]
      %v2860 = vld [vmem:[%s776 + $0x8d8] sm:$0xff]
      %v2861 = vld [vmem:[%s776 + $0x8e0] sm:$0xff]
      %v2862 = vld [vmem:[%s776 + $0x8e8] sm:$0xff]
      %v2863 = vld [vmem:[%s776 + $0x8f0] sm:$0xff]
      %v2864 = vld [vmem:[%s776 + $0x8f8] sm:$0xff]
      %v2865 = vld [vmem:[%s776 + $0x900] sm:$0xff]
      %v2866 = vld [vmem:[%s776 + $0x908] sm:$0xff]
      %v2867 = vld [vmem:[%s776 + $0x910] sm:$0xff]
      %v2868 = vld [vmem:[%s776 + $0x918] sm:$0xff]
      %v2869 = vld [vmem:[%s776 + $0x920] sm:$0xff]
      %v2870 = vld [vmem:[%s776 + $0x928] sm:$0xff]
      %v2871 = vld [vmem:[%s776 + $0x930] sm:$0xff]
      %v2872 = vld [vmem:[%s776 + $0x938] sm:$0xff]
      %v2873 = vld [vmem:[%s776 + $0x940] sm:$0xff]
      %v2874 = vld [vmem:[%s776 + $0x948] sm:$0xff]
      %v2875 = vld [vmem:[%s776 + $0x950] sm:$0xff]
      %v2876 = vld [vmem:[%s776 + $0x958] sm:$0xff]
      %v2877 = vld [vmem:[%s776 + $0x960] sm:$0xff]
      %v2878 = vld [vmem:[%s776 + $0x968] sm:$0xff]
      %v2879 = vld [vmem:[%s776 + $0x970] sm:$0xff]
      %v2880 = vld [vmem:[%s776 + $0x978] sm:$0xff]
      %v2881 = vld [vmem:[%s776 + $0x980] sm:$0xff]
      %v2882 = vld [vmem:[%s776 + $0x988] sm:$0xff]
      %v2883 = vld [vmem:[%s776 + $0x990] sm:$0xff]
      %v2884 = vld [vmem:[%s776 + $0x998] sm:$0xff]
      %v2885 = vld [vmem:[%s776 + $0x9a0] sm:$0xff]
      %v2886 = vld [vmem:[%s776 + $0x9a8] sm:$0xff]
      %v2887 = vld [vmem:[%s776 + $0x9b0] sm:$0xff]
      %v2888 = vld [vmem:[%s776 + $0x9b8] sm:$0xff]
      %v2889 = vld [vmem:[%s776 + $0x9c0] sm:$0xff]
      %v2890 = vld [vmem:[%s776 + $0x9c8] sm:$0xff]
      %v2891 = vld [vmem:[%s776 + $0x9d0] sm:$0xff]
      %v2892 = vld [vmem:[%s776 + $0x9d8] sm:$0xff]
      %v2893 = vld [vmem:[%s776 + $0x9e0] sm:$0xff]
      %v2894 = vld [vmem:[%s776 + $0x9e8] sm:$0xff]
      %v2895 = vld [vmem:[%s776 + $0x9f0] sm:$0xff]
      %v2896 = vld [vmem:[%s776 + $0x9f8] sm:$0xff]
      %v2897 = vld [vmem:[%s780] sm:$0xff]
      %v2899 = vperm.slane %v2897, 0
      %v2900 = vperm.slane %v2897, 1
      %v2901 = vperm.slane %v2897, 2
      %v2902 = vperm.slane %v2897, 3
      %v2903 = vperm.slane %v2897, 4
      %v2904 = vperm.slane %v2897, 5
      %v2905 = vperm.slane %v2897, 6
      %v2906 = vperm.slane %v2897, 7
      %2916 = vst [vmem:[#allocation1] ss:$4 sm:$0xff] %v2576
      %v2917 = vld.sshfl [vmem:[#allocation1] sm:$0xff pattern:$0x73625140]
      %v2918 = vld.sshfl [vmem:[#allocation1 + $0x8] sm:$0xff pattern:$0x73625140]
      %v2919 = vld.sshfl [vmem:[#allocation1 + $0x10] sm:$0xff pattern:$0x73625140]
      %vm2922 = vcmask 523264
      %v2923 = vsel %vm2922, %v2919, 0
      %2925 = vmatpush.msra.mxu0 %v2697
      %2926 = vmatpush.msra.mxu0 %v2689
      %2927 = vmatpush.msra.mxu0 %v2681
      %2928 = vmatpush.msra.mxu0 %v2673
      %2929 = vmatpush.msra.mxu0 %v2665
      %2930 = vmatpush.msra.mxu0 %v2657
      %2931 = vmatpush.msra.mxu0 %v2649
      %2932 = vmatpush.msra.mxu0 %v2641
      %2933 = vmatpush.msra.mxu0 %v2633
      %2934 = vmatpush.msra.mxu0 %v2625
      %2935 = vmatpush.msra.mxu0 %v2617
      %2936 = vmatpush.msra.mxu0 %v2609
      %2937 = vmatpush.msra.mxu0 %v2601
      %2938 = vmatpush.msra.mxu0 %v2593
      %2939 = vmatpush.msra.mxu0 %v2585
      %2940 = vmatpush.msra.mxu0 %v2577
      %2941 = vmatmul.f32.gmra.mxu0 %v2917
      %v2942 = vpop.f32.mrf.mxu0
      %v2943 = vadd.f32 %v2899, %v2942
      %2944 = vdwg.mxu0
      %2945 = vmatpush.msra.mxu0 %v2825
      %2946 = vmatpush.msra.mxu0 %v2817
      %2947 = vmatpush.msra.mxu0 %v2809
      %2948 = vmatpush.msra.mxu0 %v2801
      %2949 = vmatpush.msra.mxu0 %v2793
      %2950 = vmatpush.msra.mxu0 %v2785
      %2951 = vmatpush.msra.mxu0 %v2777
      %2952 = vmatpush.msra.mxu0 %v2769
      %2953 = vmatpush.msra.mxu0 %v2761
      %2954 = vmatpush.msra.mxu0 %v2753
      %2955 = vmatpush.msra.mxu0 %v2745
      %2956 = vmatpush.msra.mxu0 %v2737
      %2957 = vmatpush.msra.mxu0 %v2729
      %2958 = vmatpush.msra.mxu0 %v2721
      %2959 = vmatpush.msra.mxu0 %v2713
      %2960 = vmatpush.msra.mxu0 %v2705
      %2961 = vmatmul.f32.gmra.mxu0 %v2918
      %v2962 = vpop.f32.mrf.mxu0
      %v2963 = vadd.f32 %v2943, %v2962
      %2964 = vdwg.mxu0
      %2965 = vmatpush.msra.mxu0 0.0
      %2966 = vmatpush.msra.mxu0 0.0
      %2967 = vmatpush.msra.mxu0 0.0
      %2968 = vmatpush.msra.mxu0 0.0
      %2969 = vmatpush.msra.mxu0 0.0
      %2970 = vmatpush.msra.mxu0 0.0
      %2971 = vmatpush.msra.mxu0 0.0
      %2972 = vmatpush.msra.mxu0 0.0
      %2973 = vmatpush.msra.mxu0 %v2889
      %2974 = vmatpush.msra.mxu0 %v2881
      %2975 = vmatpush.msra.mxu0 %v2873
      %2976 = vmatpush.msra.mxu0 %v2865
      %2977 = vmatpush.msra.mxu0 %v2857
      %2978 = vmatpush.msra.mxu0 %v2849
      %2979 = vmatpush.msra.mxu0 %v2841
      %2980 = vmatpush.msra.mxu0 %v2833
      %2981 = vmatmul.f32.gmra.mxu0 %v2923
      %v2982 = vpop.f32.mrf.mxu0
      %v2983 = vadd.f32 %v2963, %v2982
      %2984 = vdwg.mxu0
      %2985 = vmatpush.msra.mxu0 %v2698
      %2986 = vmatpush.msra.mxu0 %v2690
      %2987 = vmatpush.msra.mxu0 %v2682
      %2988 = vmatpush.msra.mxu0 %v2674
      %2989 = vmatpush.msra.mxu0 %v2666
      %2990 = vmatpush.msra.mxu0 %v2658
      %2991 = vmatpush.msra.mxu0 %v2650
      %2992 = vmatpush.msra.mxu0 %v2642
      %2993 = vmatpush.msra.mxu0 %v2634
      %2994 = vmatpush.msra.mxu0 %v2626
      %2995 = vmatpush.msra.mxu0 %v2618
      %2996 = vmatpush.msra.mxu0 %v2610
      %2997 = vmatpush.msra.mxu0 %v2602
      %2998 = vmatpush.msra.mxu0 %v2594
      %2999 = vmatpush.msra.mxu0 %v2586
      %3000 = vmatpush.msra.mxu0 %v2578
      %3001 = vmatmul.f32.gmra.mxu0 %v2917
      %v3002 = vpop.f32.mrf.mxu0
      %v3003 = vadd.f32 %v2900, %v3002
      %3004 = vdwg.mxu0
      %3005 = vmatpush.msra.mxu0 %v2826
      %3006 = vmatpush.msra.mxu0 %v2818
      %3007 = vmatpush.msra.mxu0 %v2810
      %3008 = vmatpush.msra.mxu0 %v2802
      %3009 = vmatpush.msra.mxu0 %v2794
      %3010 = vmatpush.msra.mxu0 %v2786
      %3011 = vmatpush.msra.mxu0 %v2778
      %3012 = vmatpush.msra.mxu0 %v2770
      %3013 = vmatpush.msra.mxu0 %v2762
      %3014 = vmatpush.msra.mxu0 %v2754
      %3015 = vmatpush.msra.mxu0 %v2746
      %3016 = vmatpush.msra.mxu0 %v2738
      %3017 = vmatpush.msra.mxu0 %v2730
      %3018 = vmatpush.msra.mxu0 %v2722
      %3019 = vmatpush.msra.mxu0 %v2714
      %3020 = vmatpush.msra.mxu0 %v2706
      %3021 = vmatmul.f32.gmra.mxu0 %v2918
      %v3022 = vpop.f32.mrf.mxu0
      %v3023 = vadd.f32 %v3003, %v3022
      %3024 = vdwg.mxu0
      %3025 = vmatpush.msra.mxu0 0.0
      %3026 = vmatpush.msra.mxu0 0.0
      %3027 = vmatpush.msra.mxu0 0.0
      %3028 = vmatpush.msra.mxu0 0.0
      %3029 = vmatpush.msra.mxu0 0.0
      %3030 = vmatpush.msra.mxu0 0.0
      %3031 = vmatpush.msra.mxu0 0.0
      %3032 = vmatpush.msra.mxu0 0.0
      %3033 = vmatpush.msra.mxu0 %v2890
      %3034 = vmatpush.msra.mxu0 %v2882
      %3035 = vmatpush.msra.mxu0 %v2874
      %3036 = vmatpush.msra.mxu0 %v2866
      %3037 = vmatpush.msra.mxu0 %v2858
      %3038 = vmatpush.msra.mxu0 %v2850
      %3039 = vmatpush.msra.mxu0 %v2842
      %3040 = vmatpush.msra.mxu0 %v2834
      %3041 = vmatmul.f32.gmra.mxu0 %v2923
      %v3042 = vpop.f32.mrf.mxu0
      %v3043 = vadd.f32 %v3023, %v3042
      %3044 = vdwg.mxu0
      %3045 = vmatpush.msra.mxu0 %v2699
      %3046 = vmatpush.msra.mxu0 %v2691
      %3047 = vmatpush.msra.mxu0 %v2683
      %3048 = vmatpush.msra.mxu0 %v2675
      %3049 = vmatpush.msra.mxu0 %v2667
      %3050 = vmatpush.msra.mxu0 %v2659
      %3051 = vmatpush.msra.mxu0 %v2651
      %3052 = vmatpush.msra.mxu0 %v2643
      %3053 = vmatpush.msra.mxu0 %v2635
      %3054 = vmatpush.msra.mxu0 %v2627
      %3055 = vmatpush.msra.mxu0 %v2619
      %3056 = vmatpush.msra.mxu0 %v2611
      %3057 = vmatpush.msra.mxu0 %v2603
      %3058 = vmatpush.msra.mxu0 %v2595
      %3059 = vmatpush.msra.mxu0 %v2587
      %3060 = vmatpush.msra.mxu0 %v2579
      %3061 = vmatmul.f32.gmra.mxu0 %v2917
      %v3062 = vpop.f32.mrf.mxu0
      %v3063 = vadd.f32 %v2901, %v3062
      %3064 = vdwg.mxu0
      %3065 = vmatpush.msra.mxu0 %v2827
      %3066 = vmatpush.msra.mxu0 %v2819
      %3067 = vmatpush.msra.mxu0 %v2811
      %3068 = vmatpush.msra.mxu0 %v2803
      %3069 = vmatpush.msra.mxu0 %v2795
      %3070 = vmatpush.msra.mxu0 %v2787
      %3071 = vmatpush.msra.mxu0 %v2779
      %3072 = vmatpush.msra.mxu0 %v2771
      %3073 = vmatpush.msra.mxu0 %v2763
      %3074 = vmatpush.msra.mxu0 %v2755
      %3075 = vmatpush.msra.mxu0 %v2747
      %3076 = vmatpush.msra.mxu0 %v2739
      %3077 = vmatpush.msra.mxu0 %v2731
      %3078 = vmatpush.msra.mxu0 %v2723
      %3079 = vmatpush.msra.mxu0 %v2715
      %3080 = vmatpush.msra.mxu0 %v2707
      %3081 = vmatmul.f32.gmra.mxu0 %v2918
      %v3082 = vpop.f32.mrf.mxu0
      %v3083 = vadd.f32 %v3063, %v3082
      %3084 = vdwg.mxu0
      %3085 = vmatpush.msra.mxu0 0.0
      %3086 = vmatpush.msra.mxu0 0.0
      %3087 = vmatpush.msra.mxu0 0.0
      %3088 = vmatpush.msra.mxu0 0.0
      %3089 = vmatpush.msra.mxu0 0.0
      %3090 = vmatpush.msra.mxu0 0.0
      %3091 = vmatpush.msra.mxu0 0.0
      %3092 = vmatpush.msra.mxu0 0.0
      %3093 = vmatpush.msra.mxu0 %v2891
      %3094 = vmatpush.msra.mxu0 %v2883
      %3095 = vmatpush.msra.mxu0 %v2875
      %3096 = vmatpush.msra.mxu0 %v2867
      %3097 = vmatpush.msra.mxu0 %v2859
      %3098 = vmatpush.msra.mxu0 %v2851
      %3099 = vmatpush.msra.mxu0 %v2843
      %3100 = vmatpush.msra.mxu0 %v2835
      %3101 = vmatmul.f32.gmra.mxu0 %v2923
      %v3102 = vpop.f32.mrf.mxu0
      %v3103 = vadd.f32 %v3083, %v3102
      %3104 = vdwg.mxu0
      %3105 = vmatpush.msra.mxu0 %v2700
      %3106 = vmatpush.msra.mxu0 %v2692
      %3107 = vmatpush.msra.mxu0 %v2684
      %3108 = vmatpush.msra.mxu0 %v2676
      %3109 = vmatpush.msra.mxu0 %v2668
      %3110 = vmatpush.msra.mxu0 %v2660
      %3111 = vmatpush.msra.mxu0 %v2652
      %3112 = vmatpush.msra.mxu0 %v2644
      %3113 = vmatpush.msra.mxu0 %v2636
      %3114 = vmatpush.msra.mxu0 %v2628
      %3115 = vmatpush.msra.mxu0 %v2620
      %3116 = vmatpush.msra.mxu0 %v2612
      %3117 = vmatpush.msra.mxu0 %v2604
      %3118 = vmatpush.msra.mxu0 %v2596
      %3119 = vmatpush.msra.mxu0 %v2588
      %3120 = vmatpush.msra.mxu0 %v2580
      %3121 = vmatmul.f32.gmra.mxu0 %v2917
      %v3122 = vpop.f32.mrf.mxu0
      %v3123 = vadd.f32 %v2902, %v3122
      %3124 = vdwg.mxu0
      %3125 = vmatpush.msra.mxu0 %v2828
      %3126 = vmatpush.msra.mxu0 %v2820
      %3127 = vmatpush.msra.mxu0 %v2812
      %3128 = vmatpush.msra.mxu0 %v2804
      %3129 = vmatpush.msra.mxu0 %v2796
      %3130 = vmatpush.msra.mxu0 %v2788
      %3131 = vmatpush.msra.mxu0 %v2780
      %3132 = vmatpush.msra.mxu0 %v2772
      %3133 = vmatpush.msra.mxu0 %v2764
      %3134 = vmatpush.msra.mxu0 %v2756
      %3135 = vmatpush.msra.mxu0 %v2748
      %3136 = vmatpush.msra.mxu0 %v2740
      %3137 = vmatpush.msra.mxu0 %v2732
      %3138 = vmatpush.msra.mxu0 %v2724
      %3139 = vmatpush.msra.mxu0 %v2716
      %3140 = vmatpush.msra.mxu0 %v2708
      %3141 = vmatmul.f32.gmra.mxu0 %v2918
      %v3142 = vpop.f32.mrf.mxu0
      %v3143 = vadd.f32 %v3123, %v3142
      %3144 = vdwg.mxu0
      %3145 = vmatpush.msra.mxu0 0.0
      %3146 = vmatpush.msra.mxu0 0.0
      %3147 = vmatpush.msra.mxu0 0.0
      %3148 = vmatpush.msra.mxu0 0.0
      %3149 = vmatpush.msra.mxu0 0.0
      %3150 = vmatpush.msra.mxu0 0.0
      %3151 = vmatpush.msra.mxu0 0.0
      %3152 = vmatpush.msra.mxu0 0.0
      %3153 = vmatpush.msra.mxu0 %v2892
      %3154 = vmatpush.msra.mxu0 %v2884
      %3155 = vmatpush.msra.mxu0 %v2876
      %3156 = vmatpush.msra.mxu0 %v2868
      %3157 = vmatpush.msra.mxu0 %v2860
      %3158 = vmatpush.msra.mxu0 %v2852
      %3159 = vmatpush.msra.mxu0 %v2844
      %3160 = vmatpush.msra.mxu0 %v2836
      %3161 = vmatmul.f32.gmra.mxu0 %v2923
      %v3162 = vpop.f32.mrf.mxu0
      %v3163 = vadd.f32 %v3143, %v3162
      %3164 = vdwg.mxu0
      %3165 = vmatpush.msra.mxu0 %v2701
      %3166 = vmatpush.msra.mxu0 %v2693
      %3167 = vmatpush.msra.mxu0 %v2685
      %3168 = vmatpush.msra.mxu0 %v2677
      %3169 = vmatpush.msra.mxu0 %v2669
      %3170 = vmatpush.msra.mxu0 %v2661
      %3171 = vmatpush.msra.mxu0 %v2653
      %3172 = vmatpush.msra.mxu0 %v2645
      %3173 = vmatpush.msra.mxu0 %v2637
      %3174 = vmatpush.msra.mxu0 %v2629
      %3175 = vmatpush.msra.mxu0 %v2621
      %3176 = vmatpush.msra.mxu0 %v2613
      %3177 = vmatpush.msra.mxu0 %v2605
      %3178 = vmatpush.msra.mxu0 %v2597
      %3179 = vmatpush.msra.mxu0 %v2589
      %3180 = vmatpush.msra.mxu0 %v2581
      %3181 = vmatmul.f32.gmra.mxu0 %v2917
      %v3182 = vpop.f32.mrf.mxu0
      %v3183 = vadd.f32 %v2903, %v3182
      %3184 = vdwg.mxu0
      %3185 = vmatpush.msra.mxu0 %v2829
      %3186 = vmatpush.msra.mxu0 %v2821
      %3187 = vmatpush.msra.mxu0 %v2813
      %3188 = vmatpush.msra.mxu0 %v2805
      %3189 = vmatpush.msra.mxu0 %v2797
      %3190 = vmatpush.msra.mxu0 %v2789
      %3191 = vmatpush.msra.mxu0 %v2781
      %3192 = vmatpush.msra.mxu0 %v2773
      %3193 = vmatpush.msra.mxu0 %v2765
      %3194 = vmatpush.msra.mxu0 %v2757
      %3195 = vmatpush.msra.mxu0 %v2749
      %3196 = vmatpush.msra.mxu0 %v2741
      %3197 = vmatpush.msra.mxu0 %v2733
      %3198 = vmatpush.msra.mxu0 %v2725
      %3199 = vmatpush.msra.mxu0 %v2717
      %3200 = vmatpush.msra.mxu0 %v2709
      %3201 = vmatmul.f32.gmra.mxu0 %v2918
      %v3202 = vpop.f32.mrf.mxu0
      %v3203 = vadd.f32 %v3183, %v3202
      %3204 = vdwg.mxu0
      %3205 = vmatpush.msra.mxu0 0.0
      %3206 = vmatpush.msra.mxu0 0.0
      %3207 = vmatpush.msra.mxu0 0.0
      %3208 = vmatpush.msra.mxu0 0.0
      %3209 = vmatpush.msra.mxu0 0.0
      %3210 = vmatpush.msra.mxu0 0.0
      %3211 = vmatpush.msra.mxu0 0.0
      %3212 = vmatpush.msra.mxu0 0.0
      %3213 = vmatpush.msra.mxu0 %v2893
      %3214 = vmatpush.msra.mxu0 %v2885
      %3215 = vmatpush.msra.mxu0 %v2877
      %3216 = vmatpush.msra.mxu0 %v2869
      %3217 = vmatpush.msra.mxu0 %v2861
      %3218 = vmatpush.msra.mxu0 %v2853
      %3219 = vmatpush.msra.mxu0 %v2845
      %3220 = vmatpush.msra.mxu0 %v2837
      %3221 = vmatmul.f32.gmra.mxu0 %v2923
      %v3222 = vpop.f32.mrf.mxu0
      %v3223 = vadd.f32 %v3203, %v3222
      %3224 = vdwg.mxu0
      %3225 = vmatpush.msra.mxu0 %v2702
      %3226 = vmatpush.msra.mxu0 %v2694
      %3227 = vmatpush.msra.mxu0 %v2686
      %3228 = vmatpush.msra.mxu0 %v2678
      %3229 = vmatpush.msra.mxu0 %v2670
      %3230 = vmatpush.msra.mxu0 %v2662
      %3231 = vmatpush.msra.mxu0 %v2654
      %3232 = vmatpush.msra.mxu0 %v2646
      %3233 = vmatpush.msra.mxu0 %v2638
      %3234 = vmatpush.msra.mxu0 %v2630
      %3235 = vmatpush.msra.mxu0 %v2622
      %3236 = vmatpush.msra.mxu0 %v2614
      %3237 = vmatpush.msra.mxu0 %v2606
      %3238 = vmatpush.msra.mxu0 %v2598
      %3239 = vmatpush.msra.mxu0 %v2590
      %3240 = vmatpush.msra.mxu0 %v2582
      %3241 = vmatmul.f32.gmra.mxu0 %v2917
      %v3242 = vpop.f32.mrf.mxu0
      %v3243 = vadd.f32 %v2904, %v3242
      %3244 = vdwg.mxu0
      %3245 = vmatpush.msra.mxu0 %v2830
      %3246 = vmatpush.msra.mxu0 %v2822
      %3247 = vmatpush.msra.mxu0 %v2814
      %3248 = vmatpush.msra.mxu0 %v2806
      %3249 = vmatpush.msra.mxu0 %v2798
      %3250 = vmatpush.msra.mxu0 %v2790
      %3251 = vmatpush.msra.mxu0 %v2782
      %3252 = vmatpush.msra.mxu0 %v2774
      %3253 = vmatpush.msra.mxu0 %v2766
      %3254 = vmatpush.msra.mxu0 %v2758
      %3255 = vmatpush.msra.mxu0 %v2750
      %3256 = vmatpush.msra.mxu0 %v2742
      %3257 = vmatpush.msra.mxu0 %v2734
      %3258 = vmatpush.msra.mxu0 %v2726
      %3259 = vmatpush.msra.mxu0 %v2718
      %3260 = vmatpush.msra.mxu0 %v2710
      %3261 = vmatmul.f32.gmra.mxu0 %v2918
      %v3262 = vpop.f32.mrf.mxu0
      %v3263 = vadd.f32 %v3243, %v3262
      %3264 = vdwg.mxu0
      %3265 = vmatpush.msra.mxu0 0.0
      %3266 = vmatpush.msra.mxu0 0.0
      %3267 = vmatpush.msra.mxu0 0.0
      %3268 = vmatpush.msra.mxu0 0.0
      %3269 = vmatpush.msra.mxu0 0.0
      %3270 = vmatpush.msra.mxu0 0.0
      %3271 = vmatpush.msra.mxu0 0.0
      %3272 = vmatpush.msra.mxu0 0.0
      %3273 = vmatpush.msra.mxu0 %v2894
      %3274 = vmatpush.msra.mxu0 %v2886
      %3275 = vmatpush.msra.mxu0 %v2878
      %3276 = vmatpush.msra.mxu0 %v2870
      %3277 = vmatpush.msra.mxu0 %v2862
      %3278 = vmatpush.msra.mxu0 %v2854
      %3279 = vmatpush.msra.mxu0 %v2846
      %3280 = vmatpush.msra.mxu0 %v2838
      %3281 = vmatmul.f32.gmra.mxu0 %v2923
      %v3282 = vpop.f32.mrf.mxu0
      %v3283 = vadd.f32 %v3263, %v3282
      %3284 = vdwg.mxu0
      %3285 = vmatpush.msra.mxu0 %v2703
      %3286 = vmatpush.msra.mxu0 %v2695
      %3287 = vmatpush.msra.mxu0 %v2687
      %3288 = vmatpush.msra.mxu0 %v2679
      %3289 = vmatpush.msra.mxu0 %v2671
      %3290 = vmatpush.msra.mxu0 %v2663
      %3291 = vmatpush.msra.mxu0 %v2655
      %3292 = vmatpush.msra.mxu0 %v2647
      %3293 = vmatpush.msra.mxu0 %v2639
      %3294 = vmatpush.msra.mxu0 %v2631
      %3295 = vmatpush.msra.mxu0 %v2623
      %3296 = vmatpush.msra.mxu0 %v2615
      %3297 = vmatpush.msra.mxu0 %v2607
      %3298 = vmatpush.msra.mxu0 %v2599
      %3299 = vmatpush.msra.mxu0 %v2591
      %3300 = vmatpush.msra.mxu0 %v2583
      %3301 = vmatmul.f32.gmra.mxu0 %v2917
      %v3302 = vpop.f32.mrf.mxu0
      %v3303 = vadd.f32 %v2905, %v3302
      %3304 = vdwg.mxu0
      %3305 = vmatpush.msra.mxu0 %v2831
      %3306 = vmatpush.msra.mxu0 %v2823
      %3307 = vmatpush.msra.mxu0 %v2815
      %3308 = vmatpush.msra.mxu0 %v2807
      %3309 = vmatpush.msra.mxu0 %v2799
      %3310 = vmatpush.msra.mxu0 %v2791
      %3311 = vmatpush.msra.mxu0 %v2783
      %3312 = vmatpush.msra.mxu0 %v2775
      %3313 = vmatpush.msra.mxu0 %v2767
      %3314 = vmatpush.msra.mxu0 %v2759
      %3315 = vmatpush.msra.mxu0 %v2751
      %3316 = vmatpush.msra.mxu0 %v2743
      %3317 = vmatpush.msra.mxu0 %v2735
      %3318 = vmatpush.msra.mxu0 %v2727
      %3319 = vmatpush.msra.mxu0 %v2719
      %3320 = vmatpush.msra.mxu0 %v2711
      %3321 = vmatmul.f32.gmra.mxu0 %v2918
      %v3322 = vpop.f32.mrf.mxu0
      %v3323 = vadd.f32 %v3303, %v3322
      %3324 = vdwg.mxu0
      %3325 = vmatpush.msra.mxu0 0.0
      %3326 = vmatpush.msra.mxu0 0.0
      %3327 = vmatpush.msra.mxu0 0.0
      %3328 = vmatpush.msra.mxu0 0.0
      %3329 = vmatpush.msra.mxu0 0.0
      %3330 = vmatpush.msra.mxu0 0.0
      %3331 = vmatpush.msra.mxu0 0.0
      %3332 = vmatpush.msra.mxu0 0.0
      %3333 = vmatpush.msra.mxu0 %v2895
      %3334 = vmatpush.msra.mxu0 %v2887
      %3335 = vmatpush.msra.mxu0 %v2879
      %3336 = vmatpush.msra.mxu0 %v2871
      %3337 = vmatpush.msra.mxu0 %v2863
      %3338 = vmatpush.msra.mxu0 %v2855
      %3339 = vmatpush.msra.mxu0 %v2847
      %3340 = vmatpush.msra.mxu0 %v2839
      %3341 = vmatmul.f32.gmra.mxu0 %v2923
      %v3342 = vpop.f32.mrf.mxu0
      %v3343 = vadd.f32 %v3323, %v3342
      %3344 = vdwg.mxu0
      %3345 = vmatpush.msra.mxu0 %v2704
      %3346 = vmatpush.msra.mxu0 %v2696
      %3347 = vmatpush.msra.mxu0 %v2688
      %3348 = vmatpush.msra.mxu0 %v2680
      %3349 = vmatpush.msra.mxu0 %v2672
      %3350 = vmatpush.msra.mxu0 %v2664
      %3351 = vmatpush.msra.mxu0 %v2656
      %3352 = vmatpush.msra.mxu0 %v2648
      %3353 = vmatpush.msra.mxu0 %v2640
      %3354 = vmatpush.msra.mxu0 %v2632
      %3355 = vmatpush.msra.mxu0 %v2624
      %3356 = vmatpush.msra.mxu0 %v2616
      %3357 = vmatpush.msra.mxu0 %v2608
      %3358 = vmatpush.msra.mxu0 %v2600
      %3359 = vmatpush.msra.mxu0 %v2592
      %3360 = vmatpush.msra.mxu0 %v2584
      %3361 = vmatmul.f32.gmra.mxu0 %v2917
      %v3362 = vpop.f32.mrf.mxu0
      %v3363 = vadd.f32 %v2906, %v3362
      %3364 = vdwg.mxu0
      %3365 = vmatpush.msra.mxu0 %v2832
      %3366 = vmatpush.msra.mxu0 %v2824
      %3367 = vmatpush.msra.mxu0 %v2816
      %3368 = vmatpush.msra.mxu0 %v2808
      %3369 = vmatpush.msra.mxu0 %v2800
      %3370 = vmatpush.msra.mxu0 %v2792
      %3371 = vmatpush.msra.mxu0 %v2784
      %3372 = vmatpush.msra.mxu0 %v2776
      %3373 = vmatpush.msra.mxu0 %v2768
      %3374 = vmatpush.msra.mxu0 %v2760
      %3375 = vmatpush.msra.mxu0 %v2752
      %3376 = vmatpush.msra.mxu0 %v2744
      %3377 = vmatpush.msra.mxu0 %v2736
      %3378 = vmatpush.msra.mxu0 %v2728
      %3379 = vmatpush.msra.mxu0 %v2720
      %3380 = vmatpush.msra.mxu0 %v2712
      %3381 = vmatmul.f32.gmra.mxu0 %v2918
      %v3382 = vpop.f32.mrf.mxu0
      %v3383 = vadd.f32 %v3363, %v3382
      %3384 = vdwg.mxu0
      %3385 = vmatpush.msra.mxu0 0.0
      %3386 = vmatpush.msra.mxu0 0.0
      %3387 = vmatpush.msra.mxu0 0.0
      %3388 = vmatpush.msra.mxu0 0.0
      %3389 = vmatpush.msra.mxu0 0.0
      %3390 = vmatpush.msra.mxu0 0.0
      %3391 = vmatpush.msra.mxu0 0.0
      %3392 = vmatpush.msra.mxu0 0.0
      %3393 = vmatpush.msra.mxu0 %v2896
      %3394 = vmatpush.msra.mxu0 %v2888
      %3395 = vmatpush.msra.mxu0 %v2880
      %3396 = vmatpush.msra.mxu0 %v2872
      %3397 = vmatpush.msra.mxu0 %v2864
      %3398 = vmatpush.msra.mxu0 %v2856
      %3399 = vmatpush.msra.mxu0 %v2848
      %3400 = vmatpush.msra.mxu0 %v2840
      %3401 = vmatmul.f32.gmra.mxu0 %v2923
      %v3402 = vpop.f32.mrf.mxu0
      %v3403 = vadd.f32 %v3383, %v3402
      %3404 = vdwg.mxu0
      %vm3405 = vcmp.gt.f32.partialorder %v2983, 0.0
      %vm3406 = vcmp.gt.f32.partialorder %v3043, 0.0
      %vm3407 = vcmp.gt.f32.partialorder %v3103, 0.0
      %vm3408 = vcmp.gt.f32.partialorder %v3163, 0.0
      %vm3409 = vcmp.gt.f32.partialorder %v3223, 0.0
      %vm3410 = vcmp.gt.f32.partialorder %v3283, 0.0
      %vm3411 = vcmp.gt.f32.partialorder %v3343, 0.0
      %vm3412 = vcmp.gt.f32.partialorder %v3403, 0.0
      %v3413 = vmul.f32 %v2983, 0.01
      %v3414 = vmul.f32 %v3043, 0.01
      %v3415 = vmul.f32 %v3103, 0.01
      %v3416 = vmul.f32 %v3163, 0.01
      %v3417 = vmul.f32 %v3223, 0.01
      %v3418 = vmul.f32 %v3283, 0.01
      %v3419 = vmul.f32 %v3343, 0.01
      %v3420 = vmul.f32 %v3403, 0.01
      %v3421 = vsel %vm3405, %v2983, %v3413
      %v3422 = vsel %vm3406, %v3043, %v3414
      %v3423 = vsel %vm3407, %v3103, %v3415
      %v3424 = vsel %vm3408, %v3163, %v3416
      %v3425 = vsel %vm3409, %v3223, %v3417
      %v3426 = vsel %vm3410, %v3283, %v3418
      %v3427 = vsel %vm3411, %v3343, %v3419
      %v3428 = vsel %vm3412, %v3403, %v3420
      %v3429 = vld [vmem:[%s785] sm:$0xff]
      %v3430 = vld [vmem:[%s785 + $0x8] sm:$0xff]
      %v3431 = vld [vmem:[%s785 + $0x10] sm:$0xff]
      %v3432 = vld [vmem:[%s785 + $0x18] sm:$0xff]
      %v3433 = vld [vmem:[%s785 + $0x20] sm:$0xff]
      %v3434 = vld [vmem:[%s785 + $0x28] sm:$0xff]
      %v3435 = vld [vmem:[%s785 + $0x30] sm:$0xff]
      %v3436 = vld [vmem:[%s785 + $0x38] sm:$0xff]
      %v3437 = vld [vmem:[%s785 + $0x40] sm:$0xff]
      %v3438 = vld [vmem:[%s785 + $0x48] sm:$0xff]
      %v3439 = vld [vmem:[%s785 + $0x50] sm:$0xff]
      %v3440 = vld [vmem:[%s785 + $0x58] sm:$0xff]
      %v3441 = vld [vmem:[%s785 + $0x60] sm:$0xff]
      %v3442 = vld [vmem:[%s785 + $0x68] sm:$0xff]
      %v3443 = vld [vmem:[%s785 + $0x70] sm:$0xff]
      %v3444 = vld [vmem:[%s785 + $0x78] sm:$0xff]
      %v3445 = vld [vmem:[%s785 + $0x80] sm:$0xff]
      %v3446 = vld [vmem:[%s785 + $0x88] sm:$0xff]
      %v3447 = vld [vmem:[%s785 + $0x90] sm:$0xff]
      %v3448 = vld [vmem:[%s785 + $0x98] sm:$0xff]
      %v3449 = vld [vmem:[%s785 + $0xa0] sm:$0xff]
      %v3450 = vld [vmem:[%s785 + $0xa8] sm:$0xff]
      %v3451 = vld [vmem:[%s785 + $0xb0] sm:$0xff]
      %v3452 = vld [vmem:[%s785 + $0xb8] sm:$0xff]
      %v3453 = vld [vmem:[%s785 + $0xc0] sm:$0xff]
      %v3454 = vld [vmem:[%s785 + $0xc8] sm:$0xff]
      %v3455 = vld [vmem:[%s785 + $0xd0] sm:$0xff]
      %v3456 = vld [vmem:[%s785 + $0xd8] sm:$0xff]
      %v3457 = vld [vmem:[%s785 + $0xe0] sm:$0xff]
      %v3458 = vld [vmem:[%s785 + $0xe8] sm:$0xff]
      %v3459 = vld [vmem:[%s785 + $0xf0] sm:$0xff]
      %v3460 = vld [vmem:[%s785 + $0xf8] sm:$0xff]
      %v3461 = vld [vmem:[%s785 + $0x100] sm:$0xff]
      %v3462 = vld [vmem:[%s785 + $0x108] sm:$0xff]
      %v3463 = vld [vmem:[%s785 + $0x110] sm:$0xff]
      %v3464 = vld [vmem:[%s785 + $0x118] sm:$0xff]
      %v3465 = vld [vmem:[%s785 + $0x120] sm:$0xff]
      %v3466 = vld [vmem:[%s785 + $0x128] sm:$0xff]
      %v3467 = vld [vmem:[%s785 + $0x130] sm:$0xff]
      %v3468 = vld [vmem:[%s785 + $0x138] sm:$0xff]
      %v3469 = vld [vmem:[%s785 + $0x140] sm:$0xff]
      %v3470 = vld [vmem:[%s785 + $0x148] sm:$0xff]
      %v3471 = vld [vmem:[%s785 + $0x150] sm:$0xff]
      %v3472 = vld [vmem:[%s785 + $0x158] sm:$0xff]
      %v3473 = vld [vmem:[%s785 + $0x160] sm:$0xff]
      %v3474 = vld [vmem:[%s785 + $0x168] sm:$0xff]
      %v3475 = vld [vmem:[%s785 + $0x170] sm:$0xff]
      %v3476 = vld [vmem:[%s785 + $0x178] sm:$0xff]
      %v3477 = vld [vmem:[%s785 + $0x180] sm:$0xff]
      %v3478 = vld [vmem:[%s785 + $0x188] sm:$0xff]
      %v3479 = vld [vmem:[%s785 + $0x190] sm:$0xff]
      %v3480 = vld [vmem:[%s785 + $0x198] sm:$0xff]
      %v3481 = vld [vmem:[%s785 + $0x1a0] sm:$0xff]
      %v3482 = vld [vmem:[%s785 + $0x1a8] sm:$0xff]
      %v3483 = vld [vmem:[%s785 + $0x1b0] sm:$0xff]
      %v3484 = vld [vmem:[%s785 + $0x1b8] sm:$0xff]
      %v3485 = vld [vmem:[%s785 + $0x1c0] sm:$0xff]
      %v3486 = vld [vmem:[%s785 + $0x1c8] sm:$0xff]
      %v3487 = vld [vmem:[%s785 + $0x1d0] sm:$0xff]
      %v3488 = vld [vmem:[%s785 + $0x1d8] sm:$0xff]
      %v3489 = vld [vmem:[%s785 + $0x1e0] sm:$0xff]
      %v3490 = vld [vmem:[%s785 + $0x1e8] sm:$0xff]
      %v3491 = vld [vmem:[%s785 + $0x1f0] sm:$0xff]
      %v3492 = vld [vmem:[%s785 + $0x1f8] sm:$0xff]
      %v3493 = vld [vmem:[%s785 + $0x200] sm:$0xff]
      %v3494 = vld [vmem:[%s785 + $0x208] sm:$0xff]
      %v3495 = vld [vmem:[%s785 + $0x210] sm:$0xff]
      %v3496 = vld [vmem:[%s785 + $0x218] sm:$0xff]
      %v3497 = vld [vmem:[%s785 + $0x220] sm:$0xff]
      %v3498 = vld [vmem:[%s785 + $0x228] sm:$0xff]
      %v3499 = vld [vmem:[%s785 + $0x230] sm:$0xff]
      %v3500 = vld [vmem:[%s785 + $0x238] sm:$0xff]
      %v3501 = vld [vmem:[%s785 + $0x240] sm:$0xff]
      %v3502 = vld [vmem:[%s785 + $0x248] sm:$0xff]
      %v3503 = vld [vmem:[%s785 + $0x250] sm:$0xff]
      %v3504 = vld [vmem:[%s785 + $0x258] sm:$0xff]
      %v3505 = vld [vmem:[%s785 + $0x260] sm:$0xff]
      %v3506 = vld [vmem:[%s785 + $0x268] sm:$0xff]
      %v3507 = vld [vmem:[%s785 + $0x270] sm:$0xff]
      %v3508 = vld [vmem:[%s785 + $0x278] sm:$0xff]
      %v3509 = vld [vmem:[%s785 + $0x280] sm:$0xff]
      %v3510 = vld [vmem:[%s785 + $0x288] sm:$0xff]
      %v3511 = vld [vmem:[%s785 + $0x290] sm:$0xff]
      %v3512 = vld [vmem:[%s785 + $0x298] sm:$0xff]
      %v3513 = vld [vmem:[%s785 + $0x2a0] sm:$0xff]
      %v3514 = vld [vmem:[%s785 + $0x2a8] sm:$0xff]
      %v3515 = vld [vmem:[%s785 + $0x2b0] sm:$0xff]
      %v3516 = vld [vmem:[%s785 + $0x2b8] sm:$0xff]
      %v3517 = vld [vmem:[%s785 + $0x2c0] sm:$0xff]
      %v3518 = vld [vmem:[%s785 + $0x2c8] sm:$0xff]
      %v3519 = vld [vmem:[%s785 + $0x2d0] sm:$0xff]
      %v3520 = vld [vmem:[%s785 + $0x2d8] sm:$0xff]
      %v3521 = vld [vmem:[%s785 + $0x2e0] sm:$0xff]
      %v3522 = vld [vmem:[%s785 + $0x2e8] sm:$0xff]
      %v3523 = vld [vmem:[%s785 + $0x2f0] sm:$0xff]
      %v3524 = vld [vmem:[%s785 + $0x2f8] sm:$0xff]
      %v3525 = vld [vmem:[%s785 + $0x300] sm:$0xff]
      %v3526 = vld [vmem:[%s785 + $0x308] sm:$0xff]
      %v3527 = vld [vmem:[%s785 + $0x310] sm:$0xff]
      %v3528 = vld [vmem:[%s785 + $0x318] sm:$0xff]
      %v3529 = vld [vmem:[%s785 + $0x320] sm:$0xff]
      %v3530 = vld [vmem:[%s785 + $0x328] sm:$0xff]
      %v3531 = vld [vmem:[%s785 + $0x330] sm:$0xff]
      %v3532 = vld [vmem:[%s785 + $0x338] sm:$0xff]
      %v3533 = vld [vmem:[%s785 + $0x340] sm:$0xff]
      %v3534 = vld [vmem:[%s785 + $0x348] sm:$0xff]
      %v3535 = vld [vmem:[%s785 + $0x350] sm:$0xff]
      %v3536 = vld [vmem:[%s785 + $0x358] sm:$0xff]
      %v3537 = vld [vmem:[%s785 + $0x360] sm:$0xff]
      %v3538 = vld [vmem:[%s785 + $0x368] sm:$0xff]
      %v3539 = vld [vmem:[%s785 + $0x370] sm:$0xff]
      %v3540 = vld [vmem:[%s785 + $0x378] sm:$0xff]
      %v3541 = vld [vmem:[%s785 + $0x380] sm:$0xff]
      %v3542 = vld [vmem:[%s785 + $0x388] sm:$0xff]
      %v3543 = vld [vmem:[%s785 + $0x390] sm:$0xff]
      %v3544 = vld [vmem:[%s785 + $0x398] sm:$0xff]
      %v3545 = vld [vmem:[%s785 + $0x3a0] sm:$0xff]
      %v3546 = vld [vmem:[%s785 + $0x3a8] sm:$0xff]
      %v3547 = vld [vmem:[%s785 + $0x3b0] sm:$0xff]
      %v3548 = vld [vmem:[%s785 + $0x3b8] sm:$0xff]
      %v3549 = vld [vmem:[%s785 + $0x3c0] sm:$0xff]
      %v3550 = vld [vmem:[%s785 + $0x3c8] sm:$0xff]
      %v3551 = vld [vmem:[%s785 + $0x3d0] sm:$0xff]
      %v3552 = vld [vmem:[%s785 + $0x3d8] sm:$0xff]
      %v3553 = vld [vmem:[%s785 + $0x3e0] sm:$0xff]
      %v3554 = vld [vmem:[%s788] sm:$0x1]
      %v3556 = vperm.slane %v3554, 0
      %vm3558 = vcmask 850944
      %v3560 = vsel %vm3558, %v3428, 0
      %3562 = vmatpush.msra.mxu0 %v3444
      %3563 = vmatpush.msra.mxu0 %v3443
      %3564 = vmatpush.msra.mxu0 %v3442
      %3565 = vmatpush.msra.mxu0 %v3441
      %3566 = vmatpush.msra.mxu0 %v3440
      %3567 = vmatpush.msra.mxu0 %v3439
      %3568 = vmatpush.msra.mxu0 %v3438
      %3569 = vmatpush.msra.mxu0 %v3437
      %3570 = vmatpush.msra.mxu0 %v3436
      %3571 = vmatpush.msra.mxu0 %v3435
      %3572 = vmatpush.msra.mxu0 %v3434
      %3573 = vmatpush.msra.mxu0 %v3433
      %3574 = vmatpush.msra.mxu0 %v3432
      %3575 = vmatpush.msra.mxu0 %v3431
      %3576 = vmatpush.msra.mxu0 %v3430
      %3577 = vmatpush.msra.mxu0 %v3429
      %3578 = vmatmul.f32.gmra.mxu0 %v3421
      %v3579 = vpop.f32.mrf.mxu0
      %v3580 = vadd.f32 %v3556, %v3579
      %3581 = vdwg.mxu0
      %3582 = vmatpush.msra.mxu0 %v3460
      %3583 = vmatpush.msra.mxu0 %v3459
      %3584 = vmatpush.msra.mxu0 %v3458
      %3585 = vmatpush.msra.mxu0 %v3457
      %3586 = vmatpush.msra.mxu0 %v3456
      %3587 = vmatpush.msra.mxu0 %v3455
      %3588 = vmatpush.msra.mxu0 %v3454
      %3589 = vmatpush.msra.mxu0 %v3453
      %3590 = vmatpush.msra.mxu0 %v3452
      %3591 = vmatpush.msra.mxu0 %v3451
      %3592 = vmatpush.msra.mxu0 %v3450
      %3593 = vmatpush.msra.mxu0 %v3449
      %3594 = vmatpush.msra.mxu0 %v3448
      %3595 = vmatpush.msra.mxu0 %v3447
      %3596 = vmatpush.msra.mxu0 %v3446
      %3597 = vmatpush.msra.mxu0 %v3445
      %3598 = vmatmul.f32.gmra.mxu0 %v3422
      %v3599 = vpop.f32.mrf.mxu0
      %v3600 = vadd.f32 %v3580, %v3599
      %3601 = vdwg.mxu0
      %3602 = vmatpush.msra.mxu0 %v3476
      %3603 = vmatpush.msra.mxu0 %v3475
      %3604 = vmatpush.msra.mxu0 %v3474
      %3605 = vmatpush.msra.mxu0 %v3473
      %3606 = vmatpush.msra.mxu0 %v3472
      %3607 = vmatpush.msra.mxu0 %v3471
      %3608 = vmatpush.msra.mxu0 %v3470
      %3609 = vmatpush.msra.mxu0 %v3469
      %3610 = vmatpush.msra.mxu0 %v3468
      %3611 = vmatpush.msra.mxu0 %v3467
      %3612 = vmatpush.msra.mxu0 %v3466
      %3613 = vmatpush.msra.mxu0 %v3465
      %3614 = vmatpush.msra.mxu0 %v3464
      %3615 = vmatpush.msra.mxu0 %v3463
      %3616 = vmatpush.msra.mxu0 %v3462
      %3617 = vmatpush.msra.mxu0 %v3461
      %3618 = vmatmul.f32.gmra.mxu0 %v3423
      %v3619 = vpop.f32.mrf.mxu0
      %v3620 = vadd.f32 %v3600, %v3619
      %3621 = vdwg.mxu0
      %3622 = vmatpush.msra.mxu0 %v3492
      %3623 = vmatpush.msra.mxu0 %v3491
      %3624 = vmatpush.msra.mxu0 %v3490
      %3625 = vmatpush.msra.mxu0 %v3489
      %3626 = vmatpush.msra.mxu0 %v3488
      %3627 = vmatpush.msra.mxu0 %v3487
      %3628 = vmatpush.msra.mxu0 %v3486
      %3629 = vmatpush.msra.mxu0 %v3485
      %3630 = vmatpush.msra.mxu0 %v3484
      %3631 = vmatpush.msra.mxu0 %v3483
      %3632 = vmatpush.msra.mxu0 %v3482
      %3633 = vmatpush.msra.mxu0 %v3481
      %3634 = vmatpush.msra.mxu0 %v3480
      %3635 = vmatpush.msra.mxu0 %v3479
      %3636 = vmatpush.msra.mxu0 %v3478
      %3637 = vmatpush.msra.mxu0 %v3477
      %3638 = vmatmul.f32.gmra.mxu0 %v3424
      %v3639 = vpop.f32.mrf.mxu0
      %v3640 = vadd.f32 %v3620, %v3639
      %3641 = vdwg.mxu0
      %3642 = vmatpush.msra.mxu0 %v3508
      %3643 = vmatpush.msra.mxu0 %v3507
      %3644 = vmatpush.msra.mxu0 %v3506
      %3645 = vmatpush.msra.mxu0 %v3505
      %3646 = vmatpush.msra.mxu0 %v3504
      %3647 = vmatpush.msra.mxu0 %v3503
      %3648 = vmatpush.msra.mxu0 %v3502
      %3649 = vmatpush.msra.mxu0 %v3501
      %3650 = vmatpush.msra.mxu0 %v3500
      %3651 = vmatpush.msra.mxu0 %v3499
      %3652 = vmatpush.msra.mxu0 %v3498
      %3653 = vmatpush.msra.mxu0 %v3497
      %3654 = vmatpush.msra.mxu0 %v3496
      %3655 = vmatpush.msra.mxu0 %v3495
      %3656 = vmatpush.msra.mxu0 %v3494
      %3657 = vmatpush.msra.mxu0 %v3493
      %3658 = vmatmul.f32.gmra.mxu0 %v3425
      %v3659 = vpop.f32.mrf.mxu0
      %v3660 = vadd.f32 %v3640, %v3659
      %3661 = vdwg.mxu0
      %3662 = vmatpush.msra.mxu0 %v3524
      %3663 = vmatpush.msra.mxu0 %v3523
      %3664 = vmatpush.msra.mxu0 %v3522
      %3665 = vmatpush.msra.mxu0 %v3521
      %3666 = vmatpush.msra.mxu0 %v3520
      %3667 = vmatpush.msra.mxu0 %v3519
      %3668 = vmatpush.msra.mxu0 %v3518
      %3669 = vmatpush.msra.mxu0 %v3517
      %3670 = vmatpush.msra.mxu0 %v3516
      %3671 = vmatpush.msra.mxu0 %v3515
      %3672 = vmatpush.msra.mxu0 %v3514
      %3673 = vmatpush.msra.mxu0 %v3513
      %3674 = vmatpush.msra.mxu0 %v3512
      %3675 = vmatpush.msra.mxu0 %v3511
      %3676 = vmatpush.msra.mxu0 %v3510
      %3677 = vmatpush.msra.mxu0 %v3509
      %3678 = vmatmul.f32.gmra.mxu0 %v3426
      %v3679 = vpop.f32.mrf.mxu0
      %v3680 = vadd.f32 %v3660, %v3679
      %3681 = vdwg.mxu0
      %3682 = vmatpush.msra.mxu0 %v3540
      %3683 = vmatpush.msra.mxu0 %v3539
      %3684 = vmatpush.msra.mxu0 %v3538
      %3685 = vmatpush.msra.mxu0 %v3537
      %3686 = vmatpush.msra.mxu0 %v3536
      %3687 = vmatpush.msra.mxu0 %v3535
      %3688 = vmatpush.msra.mxu0 %v3534
      %3689 = vmatpush.msra.mxu0 %v3533
      %3690 = vmatpush.msra.mxu0 %v3532
      %3691 = vmatpush.msra.mxu0 %v3531
      %3692 = vmatpush.msra.mxu0 %v3530
      %3693 = vmatpush.msra.mxu0 %v3529
      %3694 = vmatpush.msra.mxu0 %v3528
      %3695 = vmatpush.msra.mxu0 %v3527
      %3696 = vmatpush.msra.mxu0 %v3526
      %3697 = vmatpush.msra.mxu0 %v3525
      %3698 = vmatmul.f32.gmra.mxu0 %v3427
      %v3699 = vpop.f32.mrf.mxu0
      %v3700 = vadd.f32 %v3680, %v3699
      %3701 = vdwg.mxu0
      %3702 = vmatpush.msra.mxu0 0.0
      %3703 = vmatpush.msra.mxu0 0.0
      %3704 = vmatpush.msra.mxu0 0.0
      %3705 = vmatpush.msra.mxu0 %v3553
      %3706 = vmatpush.msra.mxu0 %v3552
      %3707 = vmatpush.msra.mxu0 %v3551
      %3708 = vmatpush.msra.mxu0 %v3550
      %3709 = vmatpush.msra.mxu0 %v3549
      %3710 = vmatpush.msra.mxu0 %v3548
      %3711 = vmatpush.msra.mxu0 %v3547
      %3712 = vmatpush.msra.mxu0 %v3546
      %3713 = vmatpush.msra.mxu0 %v3545
      %3714 = vmatpush.msra.mxu0 %v3544
      %3715 = vmatpush.msra.mxu0 %v3543
      %3716 = vmatpush.msra.mxu0 %v3542
      %3717 = vmatpush.msra.mxu0 %v3541
      %3718 = vmatmul.f32.gmra.mxu0 %v3560
      %v3719 = vpop.f32.mrf.mxu0
      %v3720 = vadd.f32 %v3700, %v3719
      %3721 = vdwg.mxu0
      %vm3722 = vcmask 517120
      %3723 = vst.msk [vmem:[%s792] sm:$0x3] %vm3722, %v3720
      %p3724 = scmp.lt.s32.totalorder %s27, 1
      %s3725 = scalar_select %p3724, %s27, 1
      %s3726 = smul.addr %s3725, 2
      %s3727 = scalar_lea.vmem %s16, %s3726
      // Predicated region
      $region85: #{gat_gcn_forward.2} parent=83 // pred_check
        %p3728 = pneg %p461
      $region86: #{gat_gcn_forward.2} parent=83 // pred_check_branch
        %3730 = sbr.rel (%p3728) target = $region88
      $region87: #{gat_gcn_forward.2} parent=83 // pred_region
        _
      $region88: #{gat_gcn_forward.2} parent=83 // pred_fallthru
        _
    $region84: #{gat_gcn_forward.2} parent=5 // pred_fallthru
      _
    %p3731 = scmp.le.s32.totalorder 2, %s22
    // Predicated region
    $region89: #{gat_gcn_forward.2} parent=5 // pred_check
      %p3732 = pneg %p3731
    $region90: #{gat_gcn_forward.2} parent=5 // pred_check_branch
      %3734 = sbr.rel (%p3732) target = $region92
    $region91: #{gat_gcn_forward.2} parent=5 // pred_region
      %s3735 = ssub.s32 %s22, 2
      // Predicated region
      $region93: #{gat_gcn_forward.2} parent=91 // pred_check
        %p3736 = pneg %p467
      $region94: #{gat_gcn_forward.2} parent=91 // pred_check_branch
        %3738 = sbr.rel (%p3736) target = $region96
      $region95: #{gat_gcn_forward.2} parent=91 // pred_region
        %p3739 = scmp.lt.s32.totalorder %s28, 1
        %s3740 = scalar_select %p3739, %s28, 1
        %s3741 = smul.addr %s3740, 2
        %s3742 = scalar_lea.vmem %s16, %s3741
      $region96: #{gat_gcn_forward.2} parent=91 // pred_fallthru
        _
    $region92: #{gat_gcn_forward.2} parent=5 // pred_fallthru
      _
  $region6: #{gat_gcn_forward.2} parent=0 // loop_footer
    %s26 = sadd.s32 1, %s22
  $region7: #{gat_gcn_forward.2} parent=0 // loop_footer_branch
    %21 = sbr.rel target = $region3
  $region8: #{gat_gcn_forward.2} parent=0 // loop_exit
    _

</llo_original>
